<compile_context>
chip_gen: v6e
topology: v6e:2x2x1
jax: 0.10.0
libtpu: 0.0.40
codegen_flags: <defaults>
</compile_context>

<pallas_src>
import numpy as np
import jax
import jax.numpy as jnp
from jax import lax
from jax.experimental import pallas as pl
from jax.experimental.pallas import tpu as pltpu

# ---------------- model dims (from Model.__init__) ----------------
EMB_DIM = 300           # WordEmbedding emb_dim
NUM_HID = 128           # num_hid
HID_DIM = NUM_HID // 2  # SimpleClassifier hidden (64)
OUT_DIM = 2             # SimpleClassifier out_dim
MAX_LEN = 14            # tokenize max_length
H_PAD = 128             # lane-dense classifier hidden (zero-padded from 64)
PAD_OUT = 128           # lane-dense padded output width (sliced to OUT_DIM)

DEFAULT_BLOCK_B = 128   # batch tile; fits default scoped VMEM on v5e/v6e/v7x


def _round_up(x, m):
    return ((x + m - 1) // m) * m


def qtd_kernel(gi_ref,            # [T, Bt, 3H]  precomputed x@Wih + bih + [bhr|bhz|0]
               whh_ref,           # [H, 3H]      GRU hidden weights (r|z|n)
               bhn_ref,           # [1, H]       b_hn only (added inside r* term)
               qw_ref,            # [H, H]       q_net linear
               qb_ref,            # [1, H]
               c1w_ref,           # [H, H_PAD]   classifier layer 1 (zero-padded cols)
               c1b_ref,           # [1, H_PAD]
               c2w_ref,           # [H_PAD, PAD_OUT]  classifier layer 2 (zero-padded)
               c2b_ref,           # [1, PAD_OUT]
               out_ref):          # [Bt, PAD_OUT]
    T = gi_ref.shape[0]
    Bt = gi_ref.shape[1]
    H = NUM_HID

    def gru_step(t, h):
        gi = gi_ref[t]                                         # [Bt, 3H]
        # Single dependent matmul per step; stream whh from VMEM each iter.
        gh = jnp.dot(h, whh_ref[...], preferred_element_type=jnp.float32)
        # PyTorch GRU gate ordering: reset | update | new
        r = jax.nn.sigmoid(gi[:, 0 * H:1 * H] + gh[:, 0 * H:1 * H])
        z = jax.nn.sigmoid(gi[:, 1 * H:2 * H] + gh[:, 1 * H:2 * H])
        n = jnp.tanh(gi[:, 2 * H:3 * H] + r * (gh[:, 2 * H:3 * H] + bhn_ref[...]))
        return (1.0 - z) * n + z * h

    h0 = jnp.zeros((Bt, H), dtype=jnp.float32)
    # Short static trip count -> fully unroll for LLO scheduling visibility.
    h_last = lax.fori_loop(0, T, gru_step, h0, unroll=True)    # [Bt, H]

    # q_net: weight-norm Linear (== plain Linear in eval) + ReLU
    q_repr = jnp.maximum(
        jnp.dot(h_last, qw_ref[...], preferred_element_type=jnp.float32)
        + qb_ref[...], 0.0)

    # SimpleClassifier: Linear -> ReLU -> Linear  (dropout identity in eval)
    hid = jnp.maximum(
        jnp.dot(q_repr, c1w_ref[...], preferred_element_type=jnp.float32)
        + c1b_ref[...], 0.0)                                   # [Bt, H_PAD]
    logits = jnp.dot(hid, c2w_ref[...], preferred_element_type=jnp.float32) \
        + c2b_ref[...]                                         # [Bt, PAD_OUT]

    out_ref[...] = logits.astype(out_ref.dtype)


def prepare_params(params):
    """One-time host precompute for the frozen / eval model.

    * Folds the GRU input projection (W_ih, b_ih) AND the r/z parts of b_hh
      into the embedding table -> gi_table [V, 3H]; the 300-dim axis never
      enters the per-call forward and only b_hn remains in-kernel.
    * Pads the classifier to lane-dense widths (64 -> 128 hidden, 2 -> 128 out).
    """
    hi = lax.Precision.HIGHEST
    H = NUM_HID
    gi_table = jnp.dot(params["emb_table"], params["gru_wih"],
                       precision=hi) + params["gru_bih"]           # [V, 3H]
    bhh = params["gru_bhh"]                                        # [1, 3H]
    bhh_rz = jnp.concatenate([bhh[:, :2 * H],
                              jnp.zeros((1, H), jnp.float32)], axis=1)
    gi_table = gi_table + bhh_rz
    bhn = bhh[:, 2 * H:3 * H]                                      # [1, H]

    c1_w_pad = jnp.zeros((H, H_PAD), jnp.float32).at[:, :HID_DIM].set(params["c1_w"])
    c1_b_pad = jnp.zeros((1, H_PAD), jnp.float32).at[:, :HID_DIM].set(params["c1_b"])
    c2_w_pad = jnp.zeros((H_PAD, PAD_OUT), jnp.float32) \
        .at[:HID_DIM, :OUT_DIM].set(params["c2_w"])
    c2_b_pad = jnp.zeros((1, PAD_OUT), jnp.float32).at[:, :OUT_DIM].set(params["c2_b"])
    return {
        "gi_table": gi_table,
        "gru_whh": params["gru_whh"],
        "gru_bhn": bhn,
        "q_w": params["q_w"], "q_b": params["q_b"],
        "c1_w_pad": c1_w_pad, "c1_b_pad": c1_b_pad,
        "c2_w_pad": c2_w_pad, "c2_b_pad": c2_b_pad,
    }


def qtd_forward(tokens, prep, *, block_b=DEFAULT_BLOCK_B):
    """tokens: int32 [B, T].  Returns logits [B, 2]."""
    B, T = tokens.shape
    H = NUM_HID

    # Batch tiling: tile must be a multiple of 8 (sublane) and divide B_pad.
    bt = min(block_b, _round_up(B, 8))
    B_pad = _round_up(B, bt)
    if B_pad != B:
        pad_rows = jnp.zeros((B_pad - B, T), dtype=tokens.dtype)
        tokens = jnp.concatenate([tokens, pad_rows], axis=0)

    # Gather the pre-folded input projections time-major directly (no extra
    # transpose op); fuses with the gather under jit.
    # TODO(synk): for very large batches, move this gather inside the kernel
    # (scalar-prefetched tokens + manual DMA from an HBM-resident gi_table)
    # to avoid the [T, B, 3H] HBM round trip entirely.
    gi_tm = jnp.take(prep["gi_table"], tokens.T, axis=0).astype(jnp.float32)  # [T, B_pad, 3H]

    n_tiles = B_pad // bt
    const2d = lambda i: (0, 0)

    grid_spec = pltpu.PrefetchScalarGridSpec(
        num_scalar_prefetch=0,
        grid=(n_tiles,),
        in_specs=[
            pl.BlockSpec((T, bt, 3 * H), lambda i: (0, i, 0)),   # gi tile (pipelined)
            pl.BlockSpec((H, 3 * H), const2d),                   # whh   (resident)
            pl.BlockSpec((1, H), const2d),                       # b_hn
            pl.BlockSpec((H, H), const2d),                       # q_w
            pl.BlockSpec((1, H), const2d),                       # q_b
            pl.BlockSpec((H, H_PAD), const2d),                   # c1_w
            pl.BlockSpec((1, H_PAD), const2d),                   # c1_b
            pl.BlockSpec((H_PAD, PAD_OUT), const2d),             # c2_w
            pl.BlockSpec((1, PAD_OUT), const2d),                 # c2_b
        ],
        out_specs=pl.BlockSpec((bt, PAD_OUT), lambda i: (i, 0)),
    )

    out = pl.pallas_call(
        qtd_kernel,
        out_shape=jax.ShapeDtypeStruct((B_pad, PAD_OUT), jnp.float32),
        grid_spec=grid_spec,
        compiler_params=pltpu.CompilerParams(
            dimension_semantics=("parallel",)),
    )(
        gi_tm,
        prep["gru_whh"], prep["gru_bhn"],
        prep["q_w"], prep["q_b"],
        prep["c1_w_pad"], prep["c1_b_pad"],
        prep["c2_w_pad"], prep["c2_b_pad"],
    )
    return out[:B, :OUT_DIM]                                     # [B, 2]


def reference_forward(tokens, params):
    """Pure-JAX reference of the same computation (un-folded weights)."""
    hi = lax.Precision.HIGHEST
    w_emb = jnp.take(params["emb_table"], tokens, axis=0)        # [B, T, 300]
    B = tokens.shape[0]
    H = NUM_HID
    h = jnp.zeros((B, H), jnp.float32)
    for t in range(tokens.shape[1]):
        x_t = w_emb[:, t, :]
        gi = jnp.dot(x_t, params["gru_wih"], precision=hi) + params["gru_bih"]
        gh = jnp.dot(h, params["gru_whh"], precision=hi) + params["gru_bhh"]
        r = jax.nn.sigmoid(gi[:, :H] + gh[:, :H])
        z = jax.nn.sigmoid(gi[:, H:2 * H] + gh[:, H:2 * H])
        n = jnp.tanh(gi[:, 2 * H:] + r * gh[:, 2 * H:])
        h = (1 - z) * n + z * h
    q_repr = jax.nn.relu(jnp.dot(h, params["q_w"], precision=hi) + params["q_b"])
    hid = jax.nn.relu(jnp.dot(q_repr, params["c1_w"], precision=hi) + params["c1_b"])
    return jnp.dot(hid, params["c2_w"], precision=hi) + params["c2_b"]


def init_params(key, ntokens):
    ks = jax.random.split(key, 10)
    H = NUM_HID

    def u(k, shape, scale):
        return jax.random.uniform(k, shape, jnp.float32, -scale, scale)

    emb = u(ks[0], (ntokens + 1, EMB_DIM), 0.5)
    emb = emb.at[ntokens].set(0.0)                 # padding_idx row zeroed

    s_g = 1.0 / np.sqrt(H)
    s_q = 1.0 / np.sqrt(H)
    s_c1 = 1.0 / np.sqrt(H)
    s_c2 = 1.0 / np.sqrt(HID_DIM)
    return {
        "emb_table": emb,
        # GRU weights stored transposed: [in, 3*H] with gate order r|z|n
        "gru_wih": u(ks[1], (EMB_DIM, 3 * H), s_g),
        "gru_whh": u(ks[2], (H, 3 * H), s_g),
        "gru_bih": u(ks[3], (1, 3 * H), s_g),
        "gru_bhh": u(ks[4], (1, 3 * H), s_g),
        # q_net (weight-norm Linear == plain Linear at deterministic init)
        "q_w": u(ks[5], (H, H), s_q),
        "q_b": u(ks[6], (1, H), s_q),
        # classifier
        "c1_w": u(ks[7], (H, HID_DIM), s_c1),
        "c1_b": u(ks[8], (1, HID_DIM), s_c1),
        "c2_w": u(ks[9], (HID_DIM, OUT_DIM), s_c2),
        "c2_b": jnp.zeros((1, OUT_DIM), jnp.float32),
    }


if __name__ == "__main__":
    # TODO(synk): string tokenization (Dictionary.tokenize) is a host-side
    # text op with no Pallas equivalent; we start from integer token ids.
    key = jax.random.PRNGKey(0)
    ntokens = 50
    B = 8

    k_tok, k_param = jax.random.split(key)
    params = init_params(k_param, ntokens)
    prep = prepare_params(params)        # one-time fold of Wih/bih/bhh_rz into table

    # Deterministic "tokenized questions": [B, 14] ids in [0, ntokens);
    # pad the tail of each row with padding_idx (= ntokens), like tokenize().
    tokens = jax.random.randint(k_tok, (B, MAX_LEN), 0, ntokens, dtype=jnp.int32)
    lens = jnp.arange(B, dtype=jnp.int32) % MAX_LEN + 1
    pad_mask = jnp.arange(MAX_LEN)[None, :] >= lens[:, None]
    tokens = jnp.where(pad_mask, jnp.int32(ntokens), tokens)

    fwd = jax.jit(qtd_forward)
    logits = jax.block_until_ready(fwd(tokens, prep))

    ref = reference_forward(tokens, params)
    np.testing.assert_allclose(np.asarray(logits), np.asarray(ref),
                               rtol=2e-4, atol=2e-4)
    assert logits.shape == (B, OUT_DIM)
    print("KERNEL_OK")
</pallas_src>

<mosaic_0001>
module attributes {stable_mosaic.version = 11 : i64} {
  func.func @qtd_kernel(%arg0: i32, %arg1: memref<14x8x384xf32, #tpu.memory_space<vmem>>, %arg2: memref<128x384xf32, #tpu.memory_space<vmem>>, %arg3: memref<1x128xf32, #tpu.memory_space<vmem>>, %arg4: memref<128x128xf32, #tpu.memory_space<vmem>>, %arg5: memref<1x128xf32, #tpu.memory_space<vmem>>, %arg6: memref<128x128xf32, #tpu.memory_space<vmem>>, %arg7: memref<1x128xf32, #tpu.memory_space<vmem>>, %arg8: memref<128x128xf32, #tpu.memory_space<vmem>>, %arg9: memref<1x128xf32, #tpu.memory_space<vmem>>, %arg10: memref<8x128xf32, #tpu.memory_space<vmem>>) attributes {dimension_semantics = [#tpu.dimension_semantics<parallel>], iteration_bounds = array<i64: 1>, scalar_prefetch = 0 : i64, scratch_operands = 0 : i64, tpu.core_type = #tpu.core_type<tc>, window_params = [{transform_indices = @transform_0, window_bounds = array<i64: 14, 8, 384>}, {pipeline_mode = #tpu.pipeline_mode<synchronous>, transform_indices = @transform_1, window_bounds = array<i64: 128, 384>}, {pipeline_mode = #tpu.pipeline_mode<synchronous>, transform_indices = @transform_2, window_bounds = array<i64: 1, 128>}, {pipeline_mode = #tpu.pipeline_mode<synchronous>, transform_indices = @transform_3, window_bounds = array<i64: 128, 128>}, {pipeline_mode = #tpu.pipeline_mode<synchronous>, transform_indices = @transform_4, window_bounds = array<i64: 1, 128>}, {pipeline_mode = #tpu.pipeline_mode<synchronous>, transform_indices = @transform_5, window_bounds = array<i64: 128, 128>}, {pipeline_mode = #tpu.pipeline_mode<synchronous>, transform_indices = @transform_6, window_bounds = array<i64: 1, 128>}, {pipeline_mode = #tpu.pipeline_mode<synchronous>, transform_indices = @transform_7, window_bounds = array<i64: 128, 128>}, {pipeline_mode = #tpu.pipeline_mode<synchronous>, transform_indices = @transform_8, window_bounds = array<i64: 1, 128>}, {transform_indices = @transform_9, window_bounds = array<i64: 8, 128>}]} {
    %cst = arith.constant 0.000000e+00 : f32
    %0 = vector.broadcast %cst : f32 to vector<8x128xf32>
    %c0_i32 = arith.constant 0 : i32
    %1 = arith.index_cast %c0_i32 : i32 to index
    %c0 = arith.constant 0 : index
    %c0_0 = arith.constant 0 : index
    %2 = vector.load %arg1[%1, %c0, %c0_0] : memref<14x8x384xf32, #tpu.memory_space<vmem>>, vector<1x8x384xf32>
    %3 = vector.shape_cast %2 : vector<1x8x384xf32> to vector<8x384xf32>
    %c0_1 = arith.constant 0 : index
    %c0_2 = arith.constant 0 : index
    %4 = vector.load %arg2[%c0_1, %c0_2] : memref<128x384xf32, #tpu.memory_space<vmem>>, vector<128x384xf32>
    %cst_3 = arith.constant dense<0.000000e+00> : vector<8x384xf32>
    %5 = tpu.matmul %0, %4, %cst_3 {dimension_numbers = #tpu.dot_dimension_numbers<[1], [0], [0], [1], [0, 0, 1, 1], [], []>} : vector<8x128xf32>, vector<128x384xf32>, vector<8x384xf32> -> vector<8x384xf32>
    %6 = vector.extract_strided_slice %3 {offsets = [0, 0], sizes = [8, 128], strides = [1, 1]} : vector<8x384xf32> to vector<8x128xf32>
    %7 = vector.extract_strided_slice %5 {offsets = [0, 0], sizes = [8, 128], strides = [1, 1]} : vector<8x384xf32> to vector<8x128xf32>
    %8 = arith.addf %6, %7 : vector<8x128xf32>
    %9 = arith.negf %8 : vector<8x128xf32>
    %10 = math.exp %9 : vector<8x128xf32>
    %cst_4 = arith.constant 1.000000e+00 : f32
    %11 = vector.broadcast %cst_4 : f32 to vector<8x128xf32>
    %12 = arith.addf %11, %10 : vector<8x128xf32>
    %13 = arith.divf %11, %12 : vector<8x128xf32>
    %14 = vector.extract_strided_slice %3 {offsets = [0, 128], sizes = [8, 128], strides = [1, 1]} : vector<8x384xf32> to vector<8x128xf32>
    %15 = vector.extract_strided_slice %5 {offsets = [0, 128], sizes = [8, 128], strides = [1, 1]} : vector<8x384xf32> to vector<8x128xf32>
    %16 = arith.addf %14, %15 : vector<8x128xf32>
    %17 = arith.negf %16 : vector<8x128xf32>
    %18 = math.exp %17 : vector<8x128xf32>
    %cst_5 = arith.constant 1.000000e+00 : f32
    %19 = vector.broadcast %cst_5 : f32 to vector<8x128xf32>
    %20 = arith.addf %19, %18 : vector<8x128xf32>
    %21 = arith.divf %19, %20 : vector<8x128xf32>
    %22 = vector.extract_strided_slice %3 {offsets = [0, 256], sizes = [8, 128], strides = [1, 1]} : vector<8x384xf32> to vector<8x128xf32>
    %23 = vector.extract_strided_slice %5 {offsets = [0, 256], sizes = [8, 128], strides = [1, 1]} : vector<8x384xf32> to vector<8x128xf32>
    %c0_6 = arith.constant 0 : index
    %c0_7 = arith.constant 0 : index
    %24 = vector.load %arg3[%c0_6, %c0_7] : memref<1x128xf32, #tpu.memory_space<vmem>>, vector<1x128xf32>
    %25 = vector.broadcast %24 : vector<1x128xf32> to vector<8x128xf32>
    %26 = arith.addf %23, %25 : vector<8x128xf32>
    %27 = arith.mulf %13, %26 : vector<8x128xf32>
    %28 = arith.addf %22, %27 : vector<8x128xf32>
    %29 = math.tanh %28 : vector<8x128xf32>
    %cst_8 = arith.constant 1.000000e+00 : f32
    %30 = vector.broadcast %cst_8 : f32 to vector<8x128xf32>
    %31 = arith.subf %30, %21 : vector<8x128xf32>
    %32 = arith.mulf %31, %29 : vector<8x128xf32>
    %33 = arith.mulf %21, %0 : vector<8x128xf32>
    %34 = arith.addf %32, %33 : vector<8x128xf32>
    %c1_i32 = arith.constant 1 : i32
    %35 = arith.index_cast %c1_i32 : i32 to index
    %c0_9 = arith.constant 0 : index
    %c0_10 = arith.constant 0 : index
    %36 = vector.load %arg1[%35, %c0_9, %c0_10] : memref<14x8x384xf32, #tpu.memory_space<vmem>>, vector<1x8x384xf32>
    %37 = vector.shape_cast %36 : vector<1x8x384xf32> to vector<8x384xf32>
    %c0_11 = arith.constant 0 : index
    %c0_12 = arith.constant 0 : index
    %38 = vector.load %arg2[%c0_11, %c0_12] : memref<128x384xf32, #tpu.memory_space<vmem>>, vector<128x384xf32>
    %cst_13 = arith.constant dense<0.000000e+00> : vector<8x384xf32>
    %39 = tpu.matmul %34, %38, %cst_13 {dimension_numbers = #tpu.dot_dimension_numbers<[1], [0], [0], [1], [0, 0, 1, 1], [], []>} : vector<8x128xf32>, vector<128x384xf32>, vector<8x384xf32> -> vector<8x384xf32>
    %40 = vector.extract_strided_slice %37 {offsets = [0, 0], sizes = [8, 128], strides = [1, 1]} : vector<8x384xf32> to vector<8x128xf32>
    %41 = vector.extract_strided_slice %39 {offsets = [0, 0], sizes = [8, 128], strides = [1, 1]} : vector<8x384xf32> to vector<8x128xf32>
    %42 = arith.addf %40, %41 : vector<8x128xf32>
    %43 = arith.negf %42 : vector<8x128xf32>
    %44 = math.exp %43 : vector<8x128xf32>
    %cst_14 = arith.constant 1.000000e+00 : f32
    %45 = vector.broadcast %cst_14 : f32 to vector<8x128xf32>
    %46 = arith.addf %45, %44 : vector<8x128xf32>
    %47 = arith.divf %45, %46 : vector<8x128xf32>
    %48 = vector.extract_strided_slice %37 {offsets = [0, 128], sizes = [8, 128], strides = [1, 1]} : vector<8x384xf32> to vector<8x128xf32>
    %49 = vector.extract_strided_slice %39 {offsets = [0, 128], sizes = [8, 128], strides = [1, 1]} : vector<8x384xf32> to vector<8x128xf32>
    %50 = arith.addf %48, %49 : vector<8x128xf32>
    %51 = arith.negf %50 : vector<8x128xf32>
    %52 = math.exp %51 : vector<8x128xf32>
    %cst_15 = arith.constant 1.000000e+00 : f32
    %53 = vector.broadcast %cst_15 : f32 to vector<8x128xf32>
    %54 = arith.addf %53, %52 : vector<8x128xf32>
    %55 = arith.divf %53, %54 : vector<8x128xf32>
    %56 = vector.extract_strided_slice %37 {offsets = [0, 256], sizes = [8, 128], strides = [1, 1]} : vector<8x384xf32> to vector<8x128xf32>
    %57 = vector.extract_strided_slice %39 {offsets = [0, 256], sizes = [8, 128], strides = [1, 1]} : vector<8x384xf32> to vector<8x128xf32>
    %c0_16 = arith.constant 0 : index
    %c0_17 = arith.constant 0 : index
    %58 = vector.load %arg3[%c0_16, %c0_17] : memref<1x128xf32, #tpu.memory_space<vmem>>, vector<1x128xf32>
    %59 = vector.broadcast %58 : vector<1x128xf32> to vector<8x128xf32>
    %60 = arith.addf %57, %59 : vector<8x128xf32>
    %61 = arith.mulf %47, %60 : vector<8x128xf32>
    %62 = arith.addf %56, %61 : vector<8x128xf32>
    %63 = math.tanh %62 : vector<8x128xf32>
    %cst_18 = arith.constant 1.000000e+00 : f32
    %64 = vector.broadcast %cst_18 : f32 to vector<8x128xf32>
    %65 = arith.subf %64, %55 : vector<8x128xf32>
    %66 = arith.mulf %65, %63 : vector<8x128xf32>
    %67 = arith.mulf %55, %34 : vector<8x128xf32>
    %68 = arith.addf %66, %67 : vector<8x128xf32>
    %c2_i32 = arith.constant 2 : i32
    %69 = arith.index_cast %c2_i32 : i32 to index
    %c0_19 = arith.constant 0 : index
    %c0_20 = arith.constant 0 : index
    %70 = vector.load %arg1[%69, %c0_19, %c0_20] : memref<14x8x384xf32, #tpu.memory_space<vmem>>, vector<1x8x384xf32>
    %71 = vector.shape_cast %70 : vector<1x8x384xf32> to vector<8x384xf32>
    %c0_21 = arith.constant 0 : index
    %c0_22 = arith.constant 0 : index
    %72 = vector.load %arg2[%c0_21, %c0_22] : memref<128x384xf32, #tpu.memory_space<vmem>>, vector<128x384xf32>
    %cst_23 = arith.constant dense<0.000000e+00> : vector<8x384xf32>
    %73 = tpu.matmul %68, %72, %cst_23 {dimension_numbers = #tpu.dot_dimension_numbers<[1], [0], [0], [1], [0, 0, 1, 1], [], []>} : vector<8x128xf32>, vector<128x384xf32>, vector<8x384xf32> -> vector<8x384xf32>
    %74 = vector.extract_strided_slice %71 {offsets = [0, 0], sizes = [8, 128], strides = [1, 1]} : vector<8x384xf32> to vector<8x128xf32>
    %75 = vector.extract_strided_slice %73 {offsets = [0, 0], sizes = [8, 128], strides = [1, 1]} : vector<8x384xf32> to vector<8x128xf32>
    %76 = arith.addf %74, %75 : vector<8x128xf32>
    %77 = arith.negf %76 : vector<8x128xf32>
    %78 = math.exp %77 : vector<8x128xf32>
    %cst_24 = arith.constant 1.000000e+00 : f32
    %79 = vector.broadcast %cst_24 : f32 to vector<8x128xf32>
    %80 = arith.addf %79, %78 : vector<8x128xf32>
    %81 = arith.divf %79, %80 : vector<8x128xf32>
    %82 = vector.extract_strided_slice %71 {offsets = [0, 128], sizes = [8, 128], strides = [1, 1]} : vector<8x384xf32> to vector<8x128xf32>
    %83 = vector.extract_strided_slice %73 {offsets = [0, 128], sizes = [8, 128], strides = [1, 1]} : vector<8x384xf32> to vector<8x128xf32>
    %84 = arith.addf %82, %83 : vector<8x128xf32>
    %85 = arith.negf %84 : vector<8x128xf32>
    %86 = math.exp %85 : vector<8x128xf32>
    %cst_25 = arith.constant 1.000000e+00 : f32
    %87 = vector.broadcast %cst_25 : f32 to vector<8x128xf32>
    %88 = arith.addf %87, %86 : vector<8x128xf32>
    %89 = arith.divf %87, %88 : vector<8x128xf32>
    %90 = vector.extract_strided_slice %71 {offsets = [0, 256], sizes = [8, 128], strides = [1, 1]} : vector<8x384xf32> to vector<8x128xf32>
    %91 = vector.extract_strided_slice %73 {offsets = [0, 256], sizes = [8, 128], strides = [1, 1]} : vector<8x384xf32> to vector<8x128xf32>
    %c0_26 = arith.constant 0 : index
    %c0_27 = arith.constant 0 : index
    %92 = vector.load %arg3[%c0_26, %c0_27] : memref<1x128xf32, #tpu.memory_space<vmem>>, vector<1x128xf32>
    %93 = vector.broadcast %92 : vector<1x128xf32> to vector<8x128xf32>
    %94 = arith.addf %91, %93 : vector<8x128xf32>
    %95 = arith.mulf %81, %94 : vector<8x128xf32>
    %96 = arith.addf %90, %95 : vector<8x128xf32>
    %97 = math.tanh %96 : vector<8x128xf32>
    %cst_28 = arith.constant 1.000000e+00 : f32
    %98 = vector.broadcast %cst_28 : f32 to vector<8x128xf32>
    %99 = arith.subf %98, %89 : vector<8x128xf32>
    %100 = arith.mulf %99, %97 : vector<8x128xf32>
    %101 = arith.mulf %89, %68 : vector<8x128xf32>
    %102 = arith.addf %100, %101 : vector<8x128xf32>
    %c3_i32 = arith.constant 3 : i32
    %103 = arith.index_cast %c3_i32 : i32 to index
    %c0_29 = arith.constant 0 : index
    %c0_30 = arith.constant 0 : index
    %104 = vector.load %arg1[%103, %c0_29, %c0_30] : memref<14x8x384xf32, #tpu.memory_space<vmem>>, vector<1x8x384xf32>
    %105 = vector.shape_cast %104 : vector<1x8x384xf32> to vector<8x384xf32>
    %c0_31 = arith.constant 0 : index
    %c0_32 = arith.constant 0 : index
    %106 = vector.load %arg2[%c0_31, %c0_32] : memref<128x384xf32, #tpu.memory_space<vmem>>, vector<128x384xf32>
    %cst_33 = arith.constant dense<0.000000e+00> : vector<8x384xf32>
    %107 = tpu.matmul %102, %106, %cst_33 {dimension_numbers = #tpu.dot_dimension_numbers<[1], [0], [0], [1], [0, 0, 1, 1], [], []>} : vector<8x128xf32>, vector<128x384xf32>, vector<8x384xf32> -> vector<8x384xf32>
    %108 = vector.extract_strided_slice %105 {offsets = [0, 0], sizes = [8, 128], strides = [1, 1]} : vector<8x384xf32> to vector<8x128xf32>
    %109 = vector.extract_strided_slice %107 {offsets = [0, 0], sizes = [8, 128], strides = [1, 1]} : vector<8x384xf32> to vector<8x128xf32>
    %110 = arith.addf %108, %109 : vector<8x128xf32>
    %111 = arith.negf %110 : vector<8x128xf32>
    %112 = math.exp %111 : vector<8x128xf32>
    %cst_34 = arith.constant 1.000000e+00 : f32
    %113 = vector.broadcast %cst_34 : f32 to vector<8x128xf32>
    %114 = arith.addf %113, %112 : vector<8x128xf32>
    %115 = arith.divf %113, %114 : vector<8x128xf32>
    %116 = vector.extract_strided_slice %105 {offsets = [0, 128], sizes = [8, 128], strides = [1, 1]} : vector<8x384xf32> to vector<8x128xf32>
    %117 = vector.extract_strided_slice %107 {offsets = [0, 128], sizes = [8, 128], strides = [1, 1]} : vector<8x384xf32> to vector<8x128xf32>
    %118 = arith.addf %116, %117 : vector<8x128xf32>
    %119 = arith.negf %118 : vector<8x128xf32>
    %120 = math.exp %119 : vector<8x128xf32>
    %cst_35 = arith.constant 1.000000e+00 : f32
    %121 = vector.broadcast %cst_35 : f32 to vector<8x128xf32>
    %122 = arith.addf %121, %120 : vector<8x128xf32>
    %123 = arith.divf %121, %122 : vector<8x128xf32>
    %124 = vector.extract_strided_slice %105 {offsets = [0, 256], sizes = [8, 128], strides = [1, 1]} : vector<8x384xf32> to vector<8x128xf32>
    %125 = vector.extract_strided_slice %107 {offsets = [0, 256], sizes = [8, 128], strides = [1, 1]} : vector<8x384xf32> to vector<8x128xf32>
    %c0_36 = arith.constant 0 : index
    %c0_37 = arith.constant 0 : index
    %126 = vector.load %arg3[%c0_36, %c0_37] : memref<1x128xf32, #tpu.memory_space<vmem>>, vector<1x128xf32>
    %127 = vector.broadcast %126 : vector<1x128xf32> to vector<8x128xf32>
    %128 = arith.addf %125, %127 : vector<8x128xf32>
    %129 = arith.mulf %115, %128 : vector<8x128xf32>
    %130 = arith.addf %124, %129 : vector<8x128xf32>
    %131 = math.tanh %130 : vector<8x128xf32>
    %cst_38 = arith.constant 1.000000e+00 : f32
    %132 = vector.broadcast %cst_38 : f32 to vector<8x128xf32>
    %133 = arith.subf %132, %123 : vector<8x128xf32>
    %134 = arith.mulf %133, %131 : vector<8x128xf32>
    %135 = arith.mulf %123, %102 : vector<8x128xf32>
    %136 = arith.addf %134, %135 : vector<8x128xf32>
    %c4_i32 = arith.constant 4 : i32
    %137 = arith.index_cast %c4_i32 : i32 to index
    %c0_39 = arith.constant 0 : index
    %c0_40 = arith.constant 0 : index
    %138 = vector.load %arg1[%137, %c0_39, %c0_40] : memref<14x8x384xf32, #tpu.memory_space<vmem>>, vector<1x8x384xf32>
    %139 = vector.shape_cast %138 : vector<1x8x384xf32> to vector<8x384xf32>
    %c0_41 = arith.constant 0 : index
    %c0_42 = arith.constant 0 : index
    %140 = vector.load %arg2[%c0_41, %c0_42] : memref<128x384xf32, #tpu.memory_space<vmem>>, vector<128x384xf32>
    %cst_43 = arith.constant dense<0.000000e+00> : vector<8x384xf32>
    %141 = tpu.matmul %136, %140, %cst_43 {dimension_numbers = #tpu.dot_dimension_numbers<[1], [0], [0], [1], [0, 0, 1, 1], [], []>} : vector<8x128xf32>, vector<128x384xf32>, vector<8x384xf32> -> vector<8x384xf32>
    %142 = vector.extract_strided_slice %139 {offsets = [0, 0], sizes = [8, 128], strides = [1, 1]} : vector<8x384xf32> to vector<8x128xf32>
    %143 = vector.extract_strided_slice %141 {offsets = [0, 0], sizes = [8, 128], strides = [1, 1]} : vector<8x384xf32> to vector<8x128xf32>
    %144 = arith.addf %142, %143 : vector<8x128xf32>
    %145 = arith.negf %144 : vector<8x128xf32>
    %146 = math.exp %145 : vector<8x128xf32>
    %cst_44 = arith.constant 1.000000e+00 : f32
    %147 = vector.broadcast %cst_44 : f32 to vector<8x128xf32>
    %148 = arith.addf %147, %146 : vector<8x128xf32>
    %149 = arith.divf %147, %148 : vector<8x128xf32>
    %150 = vector.extract_strided_slice %139 {offsets = [0, 128], sizes = [8, 128], strides = [1, 1]} : vector<8x384xf32> to vector<8x128xf32>
    %151 = vector.extract_strided_slice %141 {offsets = [0, 128], sizes = [8, 128], strides = [1, 1]} : vector<8x384xf32> to vector<8x128xf32>
    %152 = arith.addf %150, %151 : vector<8x128xf32>
    %153 = arith.negf %152 : vector<8x128xf32>
    %154 = math.exp %153 : vector<8x128xf32>
    %cst_45 = arith.constant 1.000000e+00 : f32
    %155 = vector.broadcast %cst_45 : f32 to vector<8x128xf32>
    %156 = arith.addf %155, %154 : vector<8x128xf32>
    %157 = arith.divf %155, %156 : vector<8x128xf32>
    %158 = vector.extract_strided_slice %139 {offsets = [0, 256], sizes = [8, 128], strides = [1, 1]} : vector<8x384xf32> to vector<8x128xf32>
    %159 = vector.extract_strided_slice %141 {offsets = [0, 256], sizes = [8, 128], strides = [1, 1]} : vector<8x384xf32> to vector<8x128xf32>
    %c0_46 = arith.constant 0 : index
    %c0_47 = arith.constant 0 : index
    %160 = vector.load %arg3[%c0_46, %c0_47] : memref<1x128xf32, #tpu.memory_space<vmem>>, vector<1x128xf32>
    %161 = vector.broadcast %160 : vector<1x128xf32> to vector<8x128xf32>
    %162 = arith.addf %159, %161 : vector<8x128xf32>
    %163 = arith.mulf %149, %162 : vector<8x128xf32>
    %164 = arith.addf %158, %163 : vector<8x128xf32>
    %165 = math.tanh %164 : vector<8x128xf32>
    %cst_48 = arith.constant 1.000000e+00 : f32
    %166 = vector.broadcast %cst_48 : f32 to vector<8x128xf32>
    %167 = arith.subf %166, %157 : vector<8x128xf32>
    %168 = arith.mulf %167, %165 : vector<8x128xf32>
    %169 = arith.mulf %157, %136 : vector<8x128xf32>
    %170 = arith.addf %168, %169 : vector<8x128xf32>
    %c5_i32 = arith.constant 5 : i32
    %171 = arith.index_cast %c5_i32 : i32 to index
    %c0_49 = arith.constant 0 : index
    %c0_50 = arith.constant 0 : index
    %172 = vector.load %arg1[%171, %c0_49, %c0_50] : memref<14x8x384xf32, #tpu.memory_space<vmem>>, vector<1x8x384xf32>
    %173 = vector.shape_cast %172 : vector<1x8x384xf32> to vector<8x384xf32>
    %c0_51 = arith.constant 0 : index
    %c0_52 = arith.constant 0 : index
    %174 = vector.load %arg2[%c0_51, %c0_52] : memref<128x384xf32, #tpu.memory_space<vmem>>, vector<128x384xf32>
    %cst_53 = arith.constant dense<0.000000e+00> : vector<8x384xf32>
    %175 = tpu.matmul %170, %174, %cst_53 {dimension_numbers = #tpu.dot_dimension_numbers<[1], [0], [0], [1], [0, 0, 1, 1], [], []>} : vector<8x128xf32>, vector<128x384xf32>, vector<8x384xf32> -> vector<8x384xf32>
    %176 = vector.extract_strided_slice %173 {offsets = [0, 0], sizes = [8, 128], strides = [1, 1]} : vector<8x384xf32> to vector<8x128xf32>
    %177 = vector.extract_strided_slice %175 {offsets = [0, 0], sizes = [8, 128], strides = [1, 1]} : vector<8x384xf32> to vector<8x128xf32>
    %178 = arith.addf %176, %177 : vector<8x128xf32>
    %179 = arith.negf %178 : vector<8x128xf32>
    %180 = math.exp %179 : vector<8x128xf32>
    %cst_54 = arith.constant 1.000000e+00 : f32
    %181 = vector.broadcast %cst_54 : f32 to vector<8x128xf32>
    %182 = arith.addf %181, %180 : vector<8x128xf32>
    %183 = arith.divf %181, %182 : vector<8x128xf32>
    %184 = vector.extract_strided_slice %173 {offsets = [0, 128], sizes = [8, 128], strides = [1, 1]} : vector<8x384xf32> to vector<8x128xf32>
    %185 = vector.extract_strided_slice %175 {offsets = [0, 128], sizes = [8, 128], strides = [1, 1]} : vector<8x384xf32> to vector<8x128xf32>
    %186 = arith.addf %184, %185 : vector<8x128xf32>
    %187 = arith.negf %186 : vector<8x128xf32>
    %188 = math.exp %187 : vector<8x128xf32>
    %cst_55 = arith.constant 1.000000e+00 : f32
    %189 = vector.broadcast %cst_55 : f32 to vector<8x128xf32>
    %190 = arith.addf %189, %188 : vector<8x128xf32>
    %191 = arith.divf %189, %190 : vector<8x128xf32>
    %192 = vector.extract_strided_slice %173 {offsets = [0, 256], sizes = [8, 128], strides = [1, 1]} : vector<8x384xf32> to vector<8x128xf32>
    %193 = vector.extract_strided_slice %175 {offsets = [0, 256], sizes = [8, 128], strides = [1, 1]} : vector<8x384xf32> to vector<8x128xf32>
    %c0_56 = arith.constant 0 : index
    %c0_57 = arith.constant 0 : index
    %194 = vector.load %arg3[%c0_56, %c0_57] : memref<1x128xf32, #tpu.memory_space<vmem>>, vector<1x128xf32>
    %195 = vector.broadcast %194 : vector<1x128xf32> to vector<8x128xf32>
    %196 = arith.addf %193, %195 : vector<8x128xf32>
    %197 = arith.mulf %183, %196 : vector<8x128xf32>
    %198 = arith.addf %192, %197 : vector<8x128xf32>
    %199 = math.tanh %198 : vector<8x128xf32>
    %cst_58 = arith.constant 1.000000e+00 : f32
    %200 = vector.broadcast %cst_58 : f32 to vector<8x128xf32>
    %201 = arith.subf %200, %191 : vector<8x128xf32>
    %202 = arith.mulf %201, %199 : vector<8x128xf32>
    %203 = arith.mulf %191, %170 : vector<8x128xf32>
    %204 = arith.addf %202, %203 : vector<8x128xf32>
    %c6_i32 = arith.constant 6 : i32
    %205 = arith.index_cast %c6_i32 : i32 to index
    %c0_59 = arith.constant 0 : index
    %c0_60 = arith.constant 0 : index
    %206 = vector.load %arg1[%205, %c0_59, %c0_60] : memref<14x8x384xf32, #tpu.memory_space<vmem>>, vector<1x8x384xf32>
    %207 = vector.shape_cast %206 : vector<1x8x384xf32> to vector<8x384xf32>
    %c0_61 = arith.constant 0 : index
    %c0_62 = arith.constant 0 : index
    %208 = vector.load %arg2[%c0_61, %c0_62] : memref<128x384xf32, #tpu.memory_space<vmem>>, vector<128x384xf32>
    %cst_63 = arith.constant dense<0.000000e+00> : vector<8x384xf32>
    %209 = tpu.matmul %204, %208, %cst_63 {dimension_numbers = #tpu.dot_dimension_numbers<[1], [0], [0], [1], [0, 0, 1, 1], [], []>} : vector<8x128xf32>, vector<128x384xf32>, vector<8x384xf32> -> vector<8x384xf32>
    %210 = vector.extract_strided_slice %207 {offsets = [0, 0], sizes = [8, 128], strides = [1, 1]} : vector<8x384xf32> to vector<8x128xf32>
    %211 = vector.extract_strided_slice %209 {offsets = [0, 0], sizes = [8, 128], strides = [1, 1]} : vector<8x384xf32> to vector<8x128xf32>
    %212 = arith.addf %210, %211 : vector<8x128xf32>
    %213 = arith.negf %212 : vector<8x128xf32>
    %214 = math.exp %213 : vector<8x128xf32>
    %cst_64 = arith.constant 1.000000e+00 : f32
    %215 = vector.broadcast %cst_64 : f32 to vector<8x128xf32>
    %216 = arith.addf %215, %214 : vector<8x128xf32>
    %217 = arith.divf %215, %216 : vector<8x128xf32>
    %218 = vector.extract_strided_slice %207 {offsets = [0, 128], sizes = [8, 128], strides = [1, 1]} : vector<8x384xf32> to vector<8x128xf32>
    %219 = vector.extract_strided_slice %209 {offsets = [0, 128], sizes = [8, 128], strides = [1, 1]} : vector<8x384xf32> to vector<8x128xf32>
    %220 = arith.addf %218, %219 : vector<8x128xf32>
    %221 = arith.negf %220 : vector<8x128xf32>
    %222 = math.exp %221 : vector<8x128xf32>
    %cst_65 = arith.constant 1.000000e+00 : f32
    %223 = vector.broadcast %cst_65 : f32 to vector<8x128xf32>
    %224 = arith.addf %223, %222 : vector<8x128xf32>
    %225 = arith.divf %223, %224 : vector<8x128xf32>
    %226 = vector.extract_strided_slice %207 {offsets = [0, 256], sizes = [8, 128], strides = [1, 1]} : vector<8x384xf32> to vector<8x128xf32>
    %227 = vector.extract_strided_slice %209 {offsets = [0, 256], sizes = [8, 128], strides = [1, 1]} : vector<8x384xf32> to vector<8x128xf32>
    %c0_66 = arith.constant 0 : index
    %c0_67 = arith.constant 0 : index
    %228 = vector.load %arg3[%c0_66, %c0_67] : memref<1x128xf32, #tpu.memory_space<vmem>>, vector<1x128xf32>
    %229 = vector.broadcast %228 : vector<1x128xf32> to vector<8x128xf32>
    %230 = arith.addf %227, %229 : vector<8x128xf32>
    %231 = arith.mulf %217, %230 : vector<8x128xf32>
    %232 = arith.addf %226, %231 : vector<8x128xf32>
    %233 = math.tanh %232 : vector<8x128xf32>
    %cst_68 = arith.constant 1.000000e+00 : f32
    %234 = vector.broadcast %cst_68 : f32 to vector<8x128xf32>
    %235 = arith.subf %234, %225 : vector<8x128xf32>
    %236 = arith.mulf %235, %233 : vector<8x128xf32>
    %237 = arith.mulf %225, %204 : vector<8x128xf32>
    %238 = arith.addf %236, %237 : vector<8x128xf32>
    %c7_i32 = arith.constant 7 : i32
    %239 = arith.index_cast %c7_i32 : i32 to index
    %c0_69 = arith.constant 0 : index
    %c0_70 = arith.constant 0 : index
    %240 = vector.load %arg1[%239, %c0_69, %c0_70] : memref<14x8x384xf32, #tpu.memory_space<vmem>>, vector<1x8x384xf32>
    %241 = vector.shape_cast %240 : vector<1x8x384xf32> to vector<8x384xf32>
    %c0_71 = arith.constant 0 : index
    %c0_72 = arith.constant 0 : index
    %242 = vector.load %arg2[%c0_71, %c0_72] : memref<128x384xf32, #tpu.memory_space<vmem>>, vector<128x384xf32>
    %cst_73 = arith.constant dense<0.000000e+00> : vector<8x384xf32>
    %243 = tpu.matmul %238, %242, %cst_73 {dimension_numbers = #tpu.dot_dimension_numbers<[1], [0], [0], [1], [0, 0, 1, 1], [], []>} : vector<8x128xf32>, vector<128x384xf32>, vector<8x384xf32> -> vector<8x384xf32>
    %244 = vector.extract_strided_slice %241 {offsets = [0, 0], sizes = [8, 128], strides = [1, 1]} : vector<8x384xf32> to vector<8x128xf32>
    %245 = vector.extract_strided_slice %243 {offsets = [0, 0], sizes = [8, 128], strides = [1, 1]} : vector<8x384xf32> to vector<8x128xf32>
    %246 = arith.addf %244, %245 : vector<8x128xf32>
    %247 = arith.negf %246 : vector<8x128xf32>
    %248 = math.exp %247 : vector<8x128xf32>
    %cst_74 = arith.constant 1.000000e+00 : f32
    %249 = vector.broadcast %cst_74 : f32 to vector<8x128xf32>
    %250 = arith.addf %249, %248 : vector<8x128xf32>
    %251 = arith.divf %249, %250 : vector<8x128xf32>
    %252 = vector.extract_strided_slice %241 {offsets = [0, 128], sizes = [8, 128], strides = [1, 1]} : vector<8x384xf32> to vector<8x128xf32>
    %253 = vector.extract_strided_slice %243 {offsets = [0, 128], sizes = [8, 128], strides = [1, 1]} : vector<8x384xf32> to vector<8x128xf32>
    %254 = arith.addf %252, %253 : vector<8x128xf32>
    %255 = arith.negf %254 : vector<8x128xf32>
    %256 = math.exp %255 : vector<8x128xf32>
    %cst_75 = arith.constant 1.000000e+00 : f32
    %257 = vector.broadcast %cst_75 : f32 to vector<8x128xf32>
    %258 = arith.addf %257, %256 : vector<8x128xf32>
    %259 = arith.divf %257, %258 : vector<8x128xf32>
    %260 = vector.extract_strided_slice %241 {offsets = [0, 256], sizes = [8, 128], strides = [1, 1]} : vector<8x384xf32> to vector<8x128xf32>
    %261 = vector.extract_strided_slice %243 {offsets = [0, 256], sizes = [8, 128], strides = [1, 1]} : vector<8x384xf32> to vector<8x128xf32>
    %c0_76 = arith.constant 0 : index
    %c0_77 = arith.constant 0 : index
    %262 = vector.load %arg3[%c0_76, %c0_77] : memref<1x128xf32, #tpu.memory_space<vmem>>, vector<1x128xf32>
    %263 = vector.broadcast %262 : vector<1x128xf32> to vector<8x128xf32>
    %264 = arith.addf %261, %263 : vector<8x128xf32>
    %265 = arith.mulf %251, %264 : vector<8x128xf32>
    %266 = arith.addf %260, %265 : vector<8x128xf32>
    %267 = math.tanh %266 : vector<8x128xf32>
    %cst_78 = arith.constant 1.000000e+00 : f32
    %268 = vector.broadcast %cst_78 : f32 to vector<8x128xf32>
    %269 = arith.subf %268, %259 : vector<8x128xf32>
    %270 = arith.mulf %269, %267 : vector<8x128xf32>
    %271 = arith.mulf %259, %238 : vector<8x128xf32>
    %272 = arith.addf %270, %271 : vector<8x128xf32>
    %c8_i32 = arith.constant 8 : i32
    %273 = arith.index_cast %c8_i32 : i32 to index
    %c0_79 = arith.constant 0 : index
    %c0_80 = arith.constant 0 : index
    %274 = vector.load %arg1[%273, %c0_79, %c0_80] : memref<14x8x384xf32, #tpu.memory_space<vmem>>, vector<1x8x384xf32>
    %275 = vector.shape_cast %274 : vector<1x8x384xf32> to vector<8x384xf32>
    %c0_81 = arith.constant 0 : index
    %c0_82 = arith.constant 0 : index
    %276 = vector.load %arg2[%c0_81, %c0_82] : memref<128x384xf32, #tpu.memory_space<vmem>>, vector<128x384xf32>
    %cst_83 = arith.constant dense<0.000000e+00> : vector<8x384xf32>
    %277 = tpu.matmul %272, %276, %cst_83 {dimension_numbers = #tpu.dot_dimension_numbers<[1], [0], [0], [1], [0, 0, 1, 1], [], []>} : vector<8x128xf32>, vector<128x384xf32>, vector<8x384xf32> -> vector<8x384xf32>
    %278 = vector.extract_strided_slice %275 {offsets = [0, 0], sizes = [8, 128], strides = [1, 1]} : vector<8x384xf32> to vector<8x128xf32>
    %279 = vector.extract_strided_slice %277 {offsets = [0, 0], sizes = [8, 128], strides = [1, 1]} : vector<8x384xf32> to vector<8x128xf32>
    %280 = arith.addf %278, %279 : vector<8x128xf32>
    %281 = arith.negf %280 : vector<8x128xf32>
    %282 = math.exp %281 : vector<8x128xf32>
    %cst_84 = arith.constant 1.000000e+00 : f32
    %283 = vector.broadcast %cst_84 : f32 to vector<8x128xf32>
    %284 = arith.addf %283, %282 : vector<8x128xf32>
    %285 = arith.divf %283, %284 : vector<8x128xf32>
    %286 = vector.extract_strided_slice %275 {offsets = [0, 128], sizes = [8, 128], strides = [1, 1]} : vector<8x384xf32> to vector<8x128xf32>
    %287 = vector.extract_strided_slice %277 {offsets = [0, 128], sizes = [8, 128], strides = [1, 1]} : vector<8x384xf32> to vector<8x128xf32>
    %288 = arith.addf %286, %287 : vector<8x128xf32>
    %289 = arith.negf %288 : vector<8x128xf32>
    %290 = math.exp %289 : vector<8x128xf32>
    %cst_85 = arith.constant 1.000000e+00 : f32
    %291 = vector.broadcast %cst_85 : f32 to vector<8x128xf32>
    %292 = arith.addf %291, %290 : vector<8x128xf32>
    %293 = arith.divf %291, %292 : vector<8x128xf32>
    %294 = vector.extract_strided_slice %275 {offsets = [0, 256], sizes = [8, 128], strides = [1, 1]} : vector<8x384xf32> to vector<8x128xf32>
    %295 = vector.extract_strided_slice %277 {offsets = [0, 256], sizes = [8, 128], strides = [1, 1]} : vector<8x384xf32> to vector<8x128xf32>
    %c0_86 = arith.constant 0 : index
    %c0_87 = arith.constant 0 : index
    %296 = vector.load %arg3[%c0_86, %c0_87] : memref<1x128xf32, #tpu.memory_space<vmem>>, vector<1x128xf32>
    %297 = vector.broadcast %296 : vector<1x128xf32> to vector<8x128xf32>
    %298 = arith.addf %295, %297 : vector<8x128xf32>
    %299 = arith.mulf %285, %298 : vector<8x128xf32>
    %300 = arith.addf %294, %299 : vector<8x128xf32>
    %301 = math.tanh %300 : vector<8x128xf32>
    %cst_88 = arith.constant 1.000000e+00 : f32
    %302 = vector.broadcast %cst_88 : f32 to vector<8x128xf32>
    %303 = arith.subf %302, %293 : vector<8x128xf32>
    %304 = arith.mulf %303, %301 : vector<8x128xf32>
    %305 = arith.mulf %293, %272 : vector<8x128xf32>
    %306 = arith.addf %304, %305 : vector<8x128xf32>
    %c9_i32 = arith.constant 9 : i32
    %307 = arith.index_cast %c9_i32 : i32 to index
    %c0_89 = arith.constant 0 : index
    %c0_90 = arith.constant 0 : index
    %308 = vector.load %arg1[%307, %c0_89, %c0_90] : memref<14x8x384xf32, #tpu.memory_space<vmem>>, vector<1x8x384xf32>
    %309 = vector.shape_cast %308 : vector<1x8x384xf32> to vector<8x384xf32>
    %c0_91 = arith.constant 0 : index
    %c0_92 = arith.constant 0 : index
    %310 = vector.load %arg2[%c0_91, %c0_92] : memref<128x384xf32, #tpu.memory_space<vmem>>, vector<128x384xf32>
    %cst_93 = arith.constant dense<0.000000e+00> : vector<8x384xf32>
    %311 = tpu.matmul %306, %310, %cst_93 {dimension_numbers = #tpu.dot_dimension_numbers<[1], [0], [0], [1], [0, 0, 1, 1], [], []>} : vector<8x128xf32>, vector<128x384xf32>, vector<8x384xf32> -> vector<8x384xf32>
    %312 = vector.extract_strided_slice %309 {offsets = [0, 0], sizes = [8, 128], strides = [1, 1]} : vector<8x384xf32> to vector<8x128xf32>
    %313 = vector.extract_strided_slice %311 {offsets = [0, 0], sizes = [8, 128], strides = [1, 1]} : vector<8x384xf32> to vector<8x128xf32>
    %314 = arith.addf %312, %313 : vector<8x128xf32>
    %315 = arith.negf %314 : vector<8x128xf32>
    %316 = math.exp %315 : vector<8x128xf32>
    %cst_94 = arith.constant 1.000000e+00 : f32
    %317 = vector.broadcast %cst_94 : f32 to vector<8x128xf32>
    %318 = arith.addf %317, %316 : vector<8x128xf32>
    %319 = arith.divf %317, %318 : vector<8x128xf32>
    %320 = vector.extract_strided_slice %309 {offsets = [0, 128], sizes = [8, 128], strides = [1, 1]} : vector<8x384xf32> to vector<8x128xf32>
    %321 = vector.extract_strided_slice %311 {offsets = [0, 128], sizes = [8, 128], strides = [1, 1]} : vector<8x384xf32> to vector<8x128xf32>
    %322 = arith.addf %320, %321 : vector<8x128xf32>
    %323 = arith.negf %322 : vector<8x128xf32>
    %324 = math.exp %323 : vector<8x128xf32>
    %cst_95 = arith.constant 1.000000e+00 : f32
    %325 = vector.broadcast %cst_95 : f32 to vector<8x128xf32>
    %326 = arith.addf %325, %324 : vector<8x128xf32>
    %327 = arith.divf %325, %326 : vector<8x128xf32>
    %328 = vector.extract_strided_slice %309 {offsets = [0, 256], sizes = [8, 128], strides = [1, 1]} : vector<8x384xf32> to vector<8x128xf32>
    %329 = vector.extract_strided_slice %311 {offsets = [0, 256], sizes = [8, 128], strides = [1, 1]} : vector<8x384xf32> to vector<8x128xf32>
    %c0_96 = arith.constant 0 : index
    %c0_97 = arith.constant 0 : index
    %330 = vector.load %arg3[%c0_96, %c0_97] : memref<1x128xf32, #tpu.memory_space<vmem>>, vector<1x128xf32>
    %331 = vector.broadcast %330 : vector<1x128xf32> to vector<8x128xf32>
    %332 = arith.addf %329, %331 : vector<8x128xf32>
    %333 = arith.mulf %319, %332 : vector<8x128xf32>
    %334 = arith.addf %328, %333 : vector<8x128xf32>
    %335 = math.tanh %334 : vector<8x128xf32>
    %cst_98 = arith.constant 1.000000e+00 : f32
    %336 = vector.broadcast %cst_98 : f32 to vector<8x128xf32>
    %337 = arith.subf %336, %327 : vector<8x128xf32>
    %338 = arith.mulf %337, %335 : vector<8x128xf32>
    %339 = arith.mulf %327, %306 : vector<8x128xf32>
    %340 = arith.addf %338, %339 : vector<8x128xf32>
    %c10_i32 = arith.constant 10 : i32
    %341 = arith.index_cast %c10_i32 : i32 to index
    %c0_99 = arith.constant 0 : index
    %c0_100 = arith.constant 0 : index
    %342 = vector.load %arg1[%341, %c0_99, %c0_100] : memref<14x8x384xf32, #tpu.memory_space<vmem>>, vector<1x8x384xf32>
    %343 = vector.shape_cast %342 : vector<1x8x384xf32> to vector<8x384xf32>
    %c0_101 = arith.constant 0 : index
    %c0_102 = arith.constant 0 : index
    %344 = vector.load %arg2[%c0_101, %c0_102] : memref<128x384xf32, #tpu.memory_space<vmem>>, vector<128x384xf32>
    %cst_103 = arith.constant dense<0.000000e+00> : vector<8x384xf32>
    %345 = tpu.matmul %340, %344, %cst_103 {dimension_numbers = #tpu.dot_dimension_numbers<[1], [0], [0], [1], [0, 0, 1, 1], [], []>} : vector<8x128xf32>, vector<128x384xf32>, vector<8x384xf32> -> vector<8x384xf32>
    %346 = vector.extract_strided_slice %343 {offsets = [0, 0], sizes = [8, 128], strides = [1, 1]} : vector<8x384xf32> to vector<8x128xf32>
    %347 = vector.extract_strided_slice %345 {offsets = [0, 0], sizes = [8, 128], strides = [1, 1]} : vector<8x384xf32> to vector<8x128xf32>
    %348 = arith.addf %346, %347 : vector<8x128xf32>
    %349 = arith.negf %348 : vector<8x128xf32>
    %350 = math.exp %349 : vector<8x128xf32>
    %cst_104 = arith.constant 1.000000e+00 : f32
    %351 = vector.broadcast %cst_104 : f32 to vector<8x128xf32>
    %352 = arith.addf %351, %350 : vector<8x128xf32>
    %353 = arith.divf %351, %352 : vector<8x128xf32>
    %354 = vector.extract_strided_slice %343 {offsets = [0, 128], sizes = [8, 128], strides = [1, 1]} : vector<8x384xf32> to vector<8x128xf32>
    %355 = vector.extract_strided_slice %345 {offsets = [0, 128], sizes = [8, 128], strides = [1, 1]} : vector<8x384xf32> to vector<8x128xf32>
    %356 = arith.addf %354, %355 : vector<8x128xf32>
    %357 = arith.negf %356 : vector<8x128xf32>
    %358 = math.exp %357 : vector<8x128xf32>
    %cst_105 = arith.constant 1.000000e+00 : f32
    %359 = vector.broadcast %cst_105 : f32 to vector<8x128xf32>
    %360 = arith.addf %359, %358 : vector<8x128xf32>
    %361 = arith.divf %359, %360 : vector<8x128xf32>
    %362 = vector.extract_strided_slice %343 {offsets = [0, 256], sizes = [8, 128], strides = [1, 1]} : vector<8x384xf32> to vector<8x128xf32>
    %363 = vector.extract_strided_slice %345 {offsets = [0, 256], sizes = [8, 128], strides = [1, 1]} : vector<8x384xf32> to vector<8x128xf32>
    %c0_106 = arith.constant 0 : index
    %c0_107 = arith.constant 0 : index
    %364 = vector.load %arg3[%c0_106, %c0_107] : memref<1x128xf32, #tpu.memory_space<vmem>>, vector<1x128xf32>
    %365 = vector.broadcast %364 : vector<1x128xf32> to vector<8x128xf32>
    %366 = arith.addf %363, %365 : vector<8x128xf32>
    %367 = arith.mulf %353, %366 : vector<8x128xf32>
    %368 = arith.addf %362, %367 : vector<8x128xf32>
    %369 = math.tanh %368 : vector<8x128xf32>
    %cst_108 = arith.constant 1.000000e+00 : f32
    %370 = vector.broadcast %cst_108 : f32 to vector<8x128xf32>
    %371 = arith.subf %370, %361 : vector<8x128xf32>
    %372 = arith.mulf %371, %369 : vector<8x128xf32>
    %373 = arith.mulf %361, %340 : vector<8x128xf32>
    %374 = arith.addf %372, %373 : vector<8x128xf32>
    %c11_i32 = arith.constant 11 : i32
    %375 = arith.index_cast %c11_i32 : i32 to index
    %c0_109 = arith.constant 0 : index
    %c0_110 = arith.constant 0 : index
    %376 = vector.load %arg1[%375, %c0_109, %c0_110] : memref<14x8x384xf32, #tpu.memory_space<vmem>>, vector<1x8x384xf32>
    %377 = vector.shape_cast %376 : vector<1x8x384xf32> to vector<8x384xf32>
    %c0_111 = arith.constant 0 : index
    %c0_112 = arith.constant 0 : index
    %378 = vector.load %arg2[%c0_111, %c0_112] : memref<128x384xf32, #tpu.memory_space<vmem>>, vector<128x384xf32>
    %cst_113 = arith.constant dense<0.000000e+00> : vector<8x384xf32>
    %379 = tpu.matmul %374, %378, %cst_113 {dimension_numbers = #tpu.dot_dimension_numbers<[1], [0], [0], [1], [0, 0, 1, 1], [], []>} : vector<8x128xf32>, vector<128x384xf32>, vector<8x384xf32> -> vector<8x384xf32>
    %380 = vector.extract_strided_slice %377 {offsets = [0, 0], sizes = [8, 128], strides = [1, 1]} : vector<8x384xf32> to vector<8x128xf32>
    %381 = vector.extract_strided_slice %379 {offsets = [0, 0], sizes = [8, 128], strides = [1, 1]} : vector<8x384xf32> to vector<8x128xf32>
    %382 = arith.addf %380, %381 : vector<8x128xf32>
    %383 = arith.negf %382 : vector<8x128xf32>
    %384 = math.exp %383 : vector<8x128xf32>
    %cst_114 = arith.constant 1.000000e+00 : f32
    %385 = vector.broadcast %cst_114 : f32 to vector<8x128xf32>
    %386 = arith.addf %385, %384 : vector<8x128xf32>
    %387 = arith.divf %385, %386 : vector<8x128xf32>
    %388 = vector.extract_strided_slice %377 {offsets = [0, 128], sizes = [8, 128], strides = [1, 1]} : vector<8x384xf32> to vector<8x128xf32>
    %389 = vector.extract_strided_slice %379 {offsets = [0, 128], sizes = [8, 128], strides = [1, 1]} : vector<8x384xf32> to vector<8x128xf32>
    %390 = arith.addf %388, %389 : vector<8x128xf32>
    %391 = arith.negf %390 : vector<8x128xf32>
    %392 = math.exp %391 : vector<8x128xf32>
    %cst_115 = arith.constant 1.000000e+00 : f32
    %393 = vector.broadcast %cst_115 : f32 to vector<8x128xf32>
    %394 = arith.addf %393, %392 : vector<8x128xf32>
    %395 = arith.divf %393, %394 : vector<8x128xf32>
    %396 = vector.extract_strided_slice %377 {offsets = [0, 256], sizes = [8, 128], strides = [1, 1]} : vector<8x384xf32> to vector<8x128xf32>
    %397 = vector.extract_strided_slice %379 {offsets = [0, 256], sizes = [8, 128], strides = [1, 1]} : vector<8x384xf32> to vector<8x128xf32>
    %c0_116 = arith.constant 0 : index
    %c0_117 = arith.constant 0 : index
    %398 = vector.load %arg3[%c0_116, %c0_117] : memref<1x128xf32, #tpu.memory_space<vmem>>, vector<1x128xf32>
    %399 = vector.broadcast %398 : vector<1x128xf32> to vector<8x128xf32>
    %400 = arith.addf %397, %399 : vector<8x128xf32>
    %401 = arith.mulf %387, %400 : vector<8x128xf32>
    %402 = arith.addf %396, %401 : vector<8x128xf32>
    %403 = math.tanh %402 : vector<8x128xf32>
    %cst_118 = arith.constant 1.000000e+00 : f32
    %404 = vector.broadcast %cst_118 : f32 to vector<8x128xf32>
    %405 = arith.subf %404, %395 : vector<8x128xf32>
    %406 = arith.mulf %405, %403 : vector<8x128xf32>
    %407 = arith.mulf %395, %374 : vector<8x128xf32>
    %408 = arith.addf %406, %407 : vector<8x128xf32>
    %c12_i32 = arith.constant 12 : i32
    %409 = arith.index_cast %c12_i32 : i32 to index
    %c0_119 = arith.constant 0 : index
    %c0_120 = arith.constant 0 : index
    %410 = vector.load %arg1[%409, %c0_119, %c0_120] : memref<14x8x384xf32, #tpu.memory_space<vmem>>, vector<1x8x384xf32>
    %411 = vector.shape_cast %410 : vector<1x8x384xf32> to vector<8x384xf32>
    %c0_121 = arith.constant 0 : index
    %c0_122 = arith.constant 0 : index
    %412 = vector.load %arg2[%c0_121, %c0_122] : memref<128x384xf32, #tpu.memory_space<vmem>>, vector<128x384xf32>
    %cst_123 = arith.constant dense<0.000000e+00> : vector<8x384xf32>
    %413 = tpu.matmul %408, %412, %cst_123 {dimension_numbers = #tpu.dot_dimension_numbers<[1], [0], [0], [1], [0, 0, 1, 1], [], []>} : vector<8x128xf32>, vector<128x384xf32>, vector<8x384xf32> -> vector<8x384xf32>
    %414 = vector.extract_strided_slice %411 {offsets = [0, 0], sizes = [8, 128], strides = [1, 1]} : vector<8x384xf32> to vector<8x128xf32>
    %415 = vector.extract_strided_slice %413 {offsets = [0, 0], sizes = [8, 128], strides = [1, 1]} : vector<8x384xf32> to vector<8x128xf32>
    %416 = arith.addf %414, %415 : vector<8x128xf32>
    %417 = arith.negf %416 : vector<8x128xf32>
    %418 = math.exp %417 : vector<8x128xf32>
    %cst_124 = arith.constant 1.000000e+00 : f32
    %419 = vector.broadcast %cst_124 : f32 to vector<8x128xf32>
    %420 = arith.addf %419, %418 : vector<8x128xf32>
    %421 = arith.divf %419, %420 : vector<8x128xf32>
    %422 = vector.extract_strided_slice %411 {offsets = [0, 128], sizes = [8, 128], strides = [1, 1]} : vector<8x384xf32> to vector<8x128xf32>
    %423 = vector.extract_strided_slice %413 {offsets = [0, 128], sizes = [8, 128], strides = [1, 1]} : vector<8x384xf32> to vector<8x128xf32>
    %424 = arith.addf %422, %423 : vector<8x128xf32>
    %425 = arith.negf %424 : vector<8x128xf32>
    %426 = math.exp %425 : vector<8x128xf32>
    %cst_125 = arith.constant 1.000000e+00 : f32
    %427 = vector.broadcast %cst_125 : f32 to vector<8x128xf32>
    %428 = arith.addf %427, %426 : vector<8x128xf32>
    %429 = arith.divf %427, %428 : vector<8x128xf32>
    %430 = vector.extract_strided_slice %411 {offsets = [0, 256], sizes = [8, 128], strides = [1, 1]} : vector<8x384xf32> to vector<8x128xf32>
    %431 = vector.extract_strided_slice %413 {offsets = [0, 256], sizes = [8, 128], strides = [1, 1]} : vector<8x384xf32> to vector<8x128xf32>
    %c0_126 = arith.constant 0 : index
    %c0_127 = arith.constant 0 : index
    %432 = vector.load %arg3[%c0_126, %c0_127] : memref<1x128xf32, #tpu.memory_space<vmem>>, vector<1x128xf32>
    %433 = vector.broadcast %432 : vector<1x128xf32> to vector<8x128xf32>
    %434 = arith.addf %431, %433 : vector<8x128xf32>
    %435 = arith.mulf %421, %434 : vector<8x128xf32>
    %436 = arith.addf %430, %435 : vector<8x128xf32>
    %437 = math.tanh %436 : vector<8x128xf32>
    %cst_128 = arith.constant 1.000000e+00 : f32
    %438 = vector.broadcast %cst_128 : f32 to vector<8x128xf32>
    %439 = arith.subf %438, %429 : vector<8x128xf32>
    %440 = arith.mulf %439, %437 : vector<8x128xf32>
    %441 = arith.mulf %429, %408 : vector<8x128xf32>
    %442 = arith.addf %440, %441 : vector<8x128xf32>
    %c13_i32 = arith.constant 13 : i32
    %443 = arith.index_cast %c13_i32 : i32 to index
    %c0_129 = arith.constant 0 : index
    %c0_130 = arith.constant 0 : index
    %444 = vector.load %arg1[%443, %c0_129, %c0_130] : memref<14x8x384xf32, #tpu.memory_space<vmem>>, vector<1x8x384xf32>
    %445 = vector.shape_cast %444 : vector<1x8x384xf32> to vector<8x384xf32>
    %c0_131 = arith.constant 0 : index
    %c0_132 = arith.constant 0 : index
    %446 = vector.load %arg2[%c0_131, %c0_132] : memref<128x384xf32, #tpu.memory_space<vmem>>, vector<128x384xf32>
    %cst_133 = arith.constant dense<0.000000e+00> : vector<8x384xf32>
    %447 = tpu.matmul %442, %446, %cst_133 {dimension_numbers = #tpu.dot_dimension_numbers<[1], [0], [0], [1], [0, 0, 1, 1], [], []>} : vector<8x128xf32>, vector<128x384xf32>, vector<8x384xf32> -> vector<8x384xf32>
    %448 = vector.extract_strided_slice %445 {offsets = [0, 0], sizes = [8, 128], strides = [1, 1]} : vector<8x384xf32> to vector<8x128xf32>
    %449 = vector.extract_strided_slice %447 {offsets = [0, 0], sizes = [8, 128], strides = [1, 1]} : vector<8x384xf32> to vector<8x128xf32>
    %450 = arith.addf %448, %449 : vector<8x128xf32>
    %451 = arith.negf %450 : vector<8x128xf32>
    %452 = math.exp %451 : vector<8x128xf32>
    %cst_134 = arith.constant 1.000000e+00 : f32
    %453 = vector.broadcast %cst_134 : f32 to vector<8x128xf32>
    %454 = arith.addf %453, %452 : vector<8x128xf32>
    %455 = arith.divf %453, %454 : vector<8x128xf32>
    %456 = vector.extract_strided_slice %445 {offsets = [0, 128], sizes = [8, 128], strides = [1, 1]} : vector<8x384xf32> to vector<8x128xf32>
    %457 = vector.extract_strided_slice %447 {offsets = [0, 128], sizes = [8, 128], strides = [1, 1]} : vector<8x384xf32> to vector<8x128xf32>
    %458 = arith.addf %456, %457 : vector<8x128xf32>
    %459 = arith.negf %458 : vector<8x128xf32>
    %460 = math.exp %459 : vector<8x128xf32>
    %cst_135 = arith.constant 1.000000e+00 : f32
    %461 = vector.broadcast %cst_135 : f32 to vector<8x128xf32>
    %462 = arith.addf %461, %460 : vector<8x128xf32>
    %463 = arith.divf %461, %462 : vector<8x128xf32>
    %464 = vector.extract_strided_slice %445 {offsets = [0, 256], sizes = [8, 128], strides = [1, 1]} : vector<8x384xf32> to vector<8x128xf32>
    %465 = vector.extract_strided_slice %447 {offsets = [0, 256], sizes = [8, 128], strides = [1, 1]} : vector<8x384xf32> to vector<8x128xf32>
    %c0_136 = arith.constant 0 : index
    %c0_137 = arith.constant 0 : index
    %466 = vector.load %arg3[%c0_136, %c0_137] : memref<1x128xf32, #tpu.memory_space<vmem>>, vector<1x128xf32>
    %467 = vector.broadcast %466 : vector<1x128xf32> to vector<8x128xf32>
    %468 = arith.addf %465, %467 : vector<8x128xf32>
    %469 = arith.mulf %455, %468 : vector<8x128xf32>
    %470 = arith.addf %464, %469 : vector<8x128xf32>
    %471 = math.tanh %470 : vector<8x128xf32>
    %cst_138 = arith.constant 1.000000e+00 : f32
    %472 = vector.broadcast %cst_138 : f32 to vector<8x128xf32>
    %473 = arith.subf %472, %463 : vector<8x128xf32>
    %474 = arith.mulf %473, %471 : vector<8x128xf32>
    %475 = arith.mulf %463, %442 : vector<8x128xf32>
    %476 = arith.addf %474, %475 : vector<8x128xf32>
    %c14_i32 = arith.constant 14 : i32
    %c0_139 = arith.constant 0 : index
    %c0_140 = arith.constant 0 : index
    %477 = vector.load %arg4[%c0_139, %c0_140] : memref<128x128xf32, #tpu.memory_space<vmem>>, vector<128x128xf32>
    %cst_141 = arith.constant dense<0.000000e+00> : vector<8x128xf32>
    %478 = tpu.matmul %476, %477, %cst_141 {dimension_numbers = #tpu.dot_dimension_numbers<[1], [0], [0], [1], [0, 0, 1, 1], [], []>} : vector<8x128xf32>, vector<128x128xf32>, vector<8x128xf32> -> vector<8x128xf32>
    %c0_142 = arith.constant 0 : index
    %c0_143 = arith.constant 0 : index
    %479 = vector.load %arg5[%c0_142, %c0_143] : memref<1x128xf32, #tpu.memory_space<vmem>>, vector<1x128xf32>
    %480 = vector.broadcast %479 : vector<1x128xf32> to vector<8x128xf32>
    %481 = arith.addf %478, %480 : vector<8x128xf32>
    %cst_144 = arith.constant 0.000000e+00 : f32
    %482 = vector.broadcast %cst_144 : f32 to vector<8x128xf32>
    %483 = arith.maximumf %481, %482 : vector<8x128xf32>
    %c0_145 = arith.constant 0 : index
    %c0_146 = arith.constant 0 : index
    %484 = vector.load %arg6[%c0_145, %c0_146] : memref<128x128xf32, #tpu.memory_space<vmem>>, vector<128x128xf32>
    %cst_147 = arith.constant dense<0.000000e+00> : vector<8x128xf32>
    %485 = tpu.matmul %483, %484, %cst_147 {dimension_numbers = #tpu.dot_dimension_numbers<[1], [0], [0], [1], [0, 0, 1, 1], [], []>} : vector<8x128xf32>, vector<128x128xf32>, vector<8x128xf32> -> vector<8x128xf32>
    %c0_148 = arith.constant 0 : index
    %c0_149 = arith.constant 0 : index
    %486 = vector.load %arg7[%c0_148, %c0_149] : memref<1x128xf32, #tpu.memory_space<vmem>>, vector<1x128xf32>
    %487 = vector.broadcast %486 : vector<1x128xf32> to vector<8x128xf32>
    %488 = arith.addf %485, %487 : vector<8x128xf32>
    %cst_150 = arith.constant 0.000000e+00 : f32
    %489 = vector.broadcast %cst_150 : f32 to vector<8x128xf32>
    %490 = arith.maximumf %488, %489 : vector<8x128xf32>
    %c0_151 = arith.constant 0 : index
    %c0_152 = arith.constant 0 : index
    %491 = vector.load %arg8[%c0_151, %c0_152] : memref<128x128xf32, #tpu.memory_space<vmem>>, vector<128x128xf32>
    %cst_153 = arith.constant dense<0.000000e+00> : vector<8x128xf32>
    %492 = tpu.matmul %490, %491, %cst_153 {dimension_numbers = #tpu.dot_dimension_numbers<[1], [0], [0], [1], [0, 0, 1, 1], [], []>} : vector<8x128xf32>, vector<128x128xf32>, vector<8x128xf32> -> vector<8x128xf32>
    %c0_154 = arith.constant 0 : index
    %c0_155 = arith.constant 0 : index
    %493 = vector.load %arg9[%c0_154, %c0_155] : memref<1x128xf32, #tpu.memory_space<vmem>>, vector<1x128xf32>
    %494 = vector.broadcast %493 : vector<1x128xf32> to vector<8x128xf32>
    %495 = arith.addf %492, %494 : vector<8x128xf32>
    %c0_156 = arith.constant 0 : index
    %c0_157 = arith.constant 0 : index
    %496 = vector.load %arg10[%c0_156, %c0_157] : memref<8x128xf32, #tpu.memory_space<vmem>>, vector<8x128xf32>
    tpu.vector_store %arg10[%c0_156, %c0_157], %495 {strides = array<i32>} : memref<8x128xf32, #tpu.memory_space<vmem>>, vector<8x128xf32>,
    return
  }
  func.func @transform_0(%arg0: i32) -> (i32, i32, i32) {
    %c0_i32 = arith.constant 0 : i32
    %c0_i32_0 = arith.constant 0 : i32
    %c0_i32_1 = arith.constant 0 : i32
    return %c0_i32, %arg0, %c0_i32_0 : i32, i32, i32
  }
  func.func @transform_1(%arg0: i32) -> (i32, i32) {
    %c0_i32 = arith.constant 0 : i32
    %c0_i32_0 = arith.constant 0 : i32
    %c0_i32_1 = arith.constant 0 : i32
    return %c0_i32, %c0_i32_0 : i32, i32
  }
  func.func @transform_2(%arg0: i32) -> (i32, i32) {
    %c0_i32 = arith.constant 0 : i32
    %c0_i32_0 = arith.constant 0 : i32
    %c0_i32_1 = arith.constant 0 : i32
    return %c0_i32, %c0_i32_0 : i32, i32
  }
  func.func @transform_3(%arg0: i32) -> (i32, i32) {
    %c0_i32 = arith.constant 0 : i32
    %c0_i32_0 = arith.constant 0 : i32
    %c0_i32_1 = arith.constant 0 : i32
    return %c0_i32, %c0_i32_0 : i32, i32
  }
  func.func @transform_4(%arg0: i32) -> (i32, i32) {
    %c0_i32 = arith.constant 0 : i32
    %c0_i32_0 = arith.constant 0 : i32
    %c0_i32_1 = arith.constant 0 : i32
    return %c0_i32, %c0_i32_0 : i32, i32
  }
  func.func @transform_5(%arg0: i32) -> (i32, i32) {
    %c0_i32 = arith.constant 0 : i32
    %c0_i32_0 = arith.constant 0 : i32
    %c0_i32_1 = arith.constant 0 : i32
    return %c0_i32, %c0_i32_0 : i32, i32
  }
  func.func @transform_6(%arg0: i32) -> (i32, i32) {
    %c0_i32 = arith.constant 0 : i32
    %c0_i32_0 = arith.constant 0 : i32
    %c0_i32_1 = arith.constant 0 : i32
    return %c0_i32, %c0_i32_0 : i32, i32
  }
  func.func @transform_7(%arg0: i32) -> (i32, i32) {
    %c0_i32 = arith.constant 0 : i32
    %c0_i32_0 = arith.constant 0 : i32
    %c0_i32_1 = arith.constant 0 : i32
    return %c0_i32, %c0_i32_0 : i32, i32
  }
  func.func @transform_8(%arg0: i32) -> (i32, i32) {
    %c0_i32 = arith.constant 0 : i32
    %c0_i32_0 = arith.constant 0 : i32
    %c0_i32_1 = arith.constant 0 : i32
    return %c0_i32, %c0_i32_0 : i32, i32
  }
  func.func @transform_9(%arg0: i32) -> (i32, i32) {
    %c0_i32 = arith.constant 0 : i32
    %c0_i32_0 = arith.constant 0 : i32
    return %arg0, %c0_i32 : i32, i32
  }
}

</mosaic_0001>

<llo_original>
// kernel: qtd_forward.1
$region0: #{qtd_forward.1}
  #allocation0 [shape = 'u32[]', space=smem, size = 0x4, offset = 0x4, fixed_abs, tag = 'smem constant byte address 0x4 - core index']
  #allocation1 [shape = 'u32[144,128]{1,0:T(1,128)}', space=vmem, size = 0x12000, scoped, tag = 'internal scratch']
  %s0 = inlined_call_operand.vmem [shape: f32[14,8,384], index: 0, kind: input, shape index: {}]
  %s1 = inlined_call_operand.vmem [shape: f32[128,384], index: 1, kind: input, shape index: {}]
  %s2 = inlined_call_operand.vmem [shape: f32[1,128], index: 2, kind: input, shape index: {}]
  %s3 = inlined_call_operand.vmem [shape: f32[128,128], index: 3, kind: input, shape index: {}]
  %s4 = inlined_call_operand.vmem [shape: f32[1,128], index: 4, kind: input, shape index: {}]
  %s5 = inlined_call_operand.vmem [shape: f32[128,128], index: 5, kind: input, shape index: {}]
  %s6 = inlined_call_operand.vmem [shape: f32[1,128], index: 6, kind: input, shape index: {}]
  %s7 = inlined_call_operand.vmem [shape: f32[128,128], index: 7, kind: input, shape index: {}]
  %s8 = inlined_call_operand.vmem [shape: f32[1,128], index: 8, kind: input, shape index: {}]
  %s9 = inlined_call_operand.vmem [shape: f32[8,128], index: 9, kind: output, shape index: {}]
  %s10 = sld [smem:[#allocation0]]
  $region46: #{qtd_forward.1} parent=0
    _
  %s12 = ssub.s32 1, %s10
  %s13 = scalar_select 0, %s12, %s10
  // Predicated region
  $region2: #{qtd_forward.1} parent=0 // pred_check
    _
  $region3: #{qtd_forward.1} parent=0 // pred_check_branch
    %15 = sbr.rel (0) target = $region5
  $region4: #{qtd_forward.1} parent=0 // pred_region
    _
  $region5: #{qtd_forward.1} parent=0 // pred_fallthru
    _
  // Predicated region
  $region6: #{qtd_forward.1} parent=0 // pred_check
    _
  $region7: #{qtd_forward.1} parent=0 // pred_check_branch
    %17 = sbr.rel (0) target = $region9
  $region8: #{qtd_forward.1} parent=0 // pred_region
    _
  $region9: #{qtd_forward.1} parent=0 // pred_fallthru
    _
  // Predicated region
  $region10: #{qtd_forward.1} parent=0 // pred_check
    _
  $region11: #{qtd_forward.1} parent=0 // pred_check_branch
    %19 = sbr.rel (0) target = $region13
  $region12: #{qtd_forward.1} parent=0 // pred_region
    _
  $region13: #{qtd_forward.1} parent=0 // pred_fallthru
    _
  // Predicated region
  $region14: #{qtd_forward.1} parent=0 // pred_check
    _
  $region15: #{qtd_forward.1} parent=0 // pred_check_branch
    %21 = sbr.rel (0) target = $region17
  $region16: #{qtd_forward.1} parent=0 // pred_region
    _
  $region17: #{qtd_forward.1} parent=0 // pred_fallthru
    _
  // Predicated region
  $region18: #{qtd_forward.1} parent=0 // pred_check
    _
  $region19: #{qtd_forward.1} parent=0 // pred_check_branch
    %23 = sbr.rel (0) target = $region21
  $region20: #{qtd_forward.1} parent=0 // pred_region
    _
  $region21: #{qtd_forward.1} parent=0 // pred_fallthru
    _
  // Predicated region
  $region22: #{qtd_forward.1} parent=0 // pred_check
    _
  $region23: #{qtd_forward.1} parent=0 // pred_check_branch
    %25 = sbr.rel (0) target = $region25
  $region24: #{qtd_forward.1} parent=0 // pred_region
    _
  $region25: #{qtd_forward.1} parent=0 // pred_fallthru
    _
  // Predicated region
  $region26: #{qtd_forward.1} parent=0 // pred_check
    _
  $region27: #{qtd_forward.1} parent=0 // pred_check_branch
    %27 = sbr.rel (0) target = $region29
  $region28: #{qtd_forward.1} parent=0 // pred_region
    _
  $region29: #{qtd_forward.1} parent=0 // pred_fallthru
    _
  // Predicated region
  $region30: #{qtd_forward.1} parent=0 // pred_check
    _
  $region31: #{qtd_forward.1} parent=0 // pred_check_branch
    %29 = sbr.rel (0) target = $region33
  $region32: #{qtd_forward.1} parent=0 // pred_region
    _
  $region33: #{qtd_forward.1} parent=0 // pred_fallthru
    _
  // Predicated region
  $region34: #{qtd_forward.1} parent=0 // pred_check
    _
  $region35: #{qtd_forward.1} parent=0 // pred_check_branch
    %31 = sbr.rel (0) target = $region37
  $region36: #{qtd_forward.1} parent=0 // pred_region
    _
  $region37: #{qtd_forward.1} parent=0 // pred_fallthru
    _
  %v32 = vld [vmem:[%s0] sm:$0xff]
  %v33 = vld [vmem:[%s0 + $0x8] sm:$0xff]
  %v34 = vld [vmem:[%s0 + $0x10] sm:$0xff]
  %v35 = vld [vmem:[%s1] sm:$0xff]
  %v36 = vld [vmem:[%s1 + $0x8] sm:$0xff]
  %v37 = vld [vmem:[%s1 + $0x10] sm:$0xff]
  %v38 = vld [vmem:[%s1 + $0x18] sm:$0xff]
  %v39 = vld [vmem:[%s1 + $0x20] sm:$0xff]
  %v40 = vld [vmem:[%s1 + $0x28] sm:$0xff]
  %v41 = vld [vmem:[%s1 + $0x30] sm:$0xff]
  %v42 = vld [vmem:[%s1 + $0x38] sm:$0xff]
  %v43 = vld [vmem:[%s1 + $0x40] sm:$0xff]
  %v44 = vld [vmem:[%s1 + $0x48] sm:$0xff]
  %v45 = vld [vmem:[%s1 + $0x50] sm:$0xff]
  %v46 = vld [vmem:[%s1 + $0x58] sm:$0xff]
  %v47 = vld [vmem:[%s1 + $0x60] sm:$0xff]
  %v48 = vld [vmem:[%s1 + $0x68] sm:$0xff]
  %v49 = vld [vmem:[%s1 + $0x70] sm:$0xff]
  %v50 = vld [vmem:[%s1 + $0x78] sm:$0xff]
  %v51 = vld [vmem:[%s1 + $0x80] sm:$0xff]
  %v52 = vld [vmem:[%s1 + $0x88] sm:$0xff]
  %v53 = vld [vmem:[%s1 + $0x90] sm:$0xff]
  %v54 = vld [vmem:[%s1 + $0x98] sm:$0xff]
  %v55 = vld [vmem:[%s1 + $0xa0] sm:$0xff]
  %v56 = vld [vmem:[%s1 + $0xa8] sm:$0xff]
  %v57 = vld [vmem:[%s1 + $0xb0] sm:$0xff]
  %v58 = vld [vmem:[%s1 + $0xb8] sm:$0xff]
  %v59 = vld [vmem:[%s1 + $0xc0] sm:$0xff]
  %v60 = vld [vmem:[%s1 + $0xc8] sm:$0xff]
  %v61 = vld [vmem:[%s1 + $0xd0] sm:$0xff]
  %v62 = vld [vmem:[%s1 + $0xd8] sm:$0xff]
  %v63 = vld [vmem:[%s1 + $0xe0] sm:$0xff]
  %v64 = vld [vmem:[%s1 + $0xe8] sm:$0xff]
  %v65 = vld [vmem:[%s1 + $0xf0] sm:$0xff]
  %v66 = vld [vmem:[%s1 + $0xf8] sm:$0xff]
  %v67 = vld [vmem:[%s1 + $0x100] sm:$0xff]
  %v68 = vld [vmem:[%s1 + $0x108] sm:$0xff]
  %v69 = vld [vmem:[%s1 + $0x110] sm:$0xff]
  %v70 = vld [vmem:[%s1 + $0x118] sm:$0xff]
  %v71 = vld [vmem:[%s1 + $0x120] sm:$0xff]
  %v72 = vld [vmem:[%s1 + $0x128] sm:$0xff]
  %v73 = vld [vmem:[%s1 + $0x130] sm:$0xff]
  %v74 = vld [vmem:[%s1 + $0x138] sm:$0xff]
  %v75 = vld [vmem:[%s1 + $0x140] sm:$0xff]
  %v76 = vld [vmem:[%s1 + $0x148] sm:$0xff]
  %v77 = vld [vmem:[%s1 + $0x150] sm:$0xff]
  %v78 = vld [vmem:[%s1 + $0x158] sm:$0xff]
  %v79 = vld [vmem:[%s1 + $0x160] sm:$0xff]
  %v80 = vld [vmem:[%s1 + $0x168] sm:$0xff]
  %v81 = vld [vmem:[%s1 + $0x170] sm:$0xff]
  %v82 = vld [vmem:[%s1 + $0x178] sm:$0xff]
  %83 = vmatprep.subr.mxu0 %v81
  %84 = vmatpush1.msra.mxu0 %v80
  %85 = vmatprep.subr.mxu0 %v78
  %86 = vmatpush1.msra.mxu0 %v77
  %87 = vmatprep.subr.mxu0 %v75
  %88 = vmatpush1.msra.mxu0 %v74
  %89 = vmatprep.subr.mxu0 %v72
  %90 = vmatpush1.msra.mxu0 %v71
  %91 = vmatprep.subr.mxu0 %v69
  %92 = vmatpush1.msra.mxu0 %v68
  %93 = vmatprep.subr.mxu0 %v66
  %94 = vmatpush1.msra.mxu0 %v65
  %95 = vmatprep.subr.mxu0 %v63
  %96 = vmatpush1.msra.mxu0 %v62
  %97 = vmatprep.subr.mxu0 %v60
  %98 = vmatpush1.msra.mxu0 %v59
  %99 = vmatprep.subr.mxu0 %v57
  %100 = vmatpush1.msra.mxu0 %v56
  %101 = vmatprep.subr.mxu0 %v54
  %102 = vmatpush1.msra.mxu0 %v53
  %103 = vmatprep.subr.mxu0 %v51
  %104 = vmatpush1.msra.mxu0 %v50
  %105 = vmatprep.subr.mxu0 %v48
  %106 = vmatpush1.msra.mxu0 %v47
  %107 = vmatprep.subr.mxu0 %v45
  %108 = vmatpush1.msra.mxu0 %v44
  %109 = vmatprep.subr.mxu0 %v42
  %110 = vmatpush1.msra.mxu0 %v41
  %111 = vmatprep.subr.mxu0 %v39
  %112 = vmatpush1.msra.mxu0 %v38
  %113 = vmatprep.subr.mxu0 %v36
  %114 = vmatpush1.msra.mxu0 %v35
  %115 = vmatprep.subr.mxu0 0.0
  %116 = vmatpush2.msra.mxu0 0.0
  %117 = vmatprep.subr.mxu0 0.0
  %118 = vmatpush2.msra.mxu0 0.0
  %119 = vmatprep.subr.mxu0 0.0
  %120 = vmatpush2.msra.mxu0 0.0
  %121 = vmatprep.subr.mxu0 0.0
  %122 = vmatpush2.msra.mxu0 0.0
  %123 = vmatprep.subr.mxu0 0.0
  %124 = vmatpush2.msra.mxu0 0.0
  %125 = vmatprep.subr.mxu0 0.0
  %126 = vmatpush2.msra.mxu0 0.0
  %127 = vmatprep.subr.mxu0 0.0
  %128 = vmatpush2.msra.mxu0 0.0
  %129 = vmatprep.subr.mxu0 0.0
  %130 = vmatpush2.msra.mxu0 0.0
  %131 = vmatprep.subr.mxu0 0.0
  %132 = vmatpush2.msra.mxu0 0.0
  %133 = vmatprep.subr.mxu0 0.0
  %134 = vmatpush2.msra.mxu0 0.0
  %135 = vmatprep.subr.mxu0 0.0
  %136 = vmatpush2.msra.mxu0 0.0
  %137 = vmatprep.subr.mxu0 0.0
  %138 = vmatpush2.msra.mxu0 0.0
  %139 = vmatprep.subr.mxu0 0.0
  %140 = vmatpush2.msra.mxu0 0.0
  %141 = vmatprep.subr.mxu0 0.0
  %142 = vmatpush2.msra.mxu0 0.0
  %143 = vmatprep.subr.mxu0 0.0
  %144 = vmatpush2.msra.mxu0 0.0
  %145 = vmatprep.subr.mxu0 0.0
  %146 = vmatpush2.msra.mxu0 0.0
  %147 = vmatprep.mubr.f32.mxu0 0.0
  %148 = vmatmul.mubr.f32.gmra.mxu0 0.0
  %v149 = vpop.f32.mrf.mxu0
  %v150 = vadd.f32 0.0, %v149
  %v151 = vpop.f32.mrf.mxu0
  %v152 = vadd.f32 0.0, %v151
  %153 = vdwg.mxu0
  %154 = vmatprep.subr.mxu0 0.0
  %155 = vmatpush1.msra.mxu0 %v82
  %156 = vmatprep.subr.mxu0 0.0
  %157 = vmatpush1.msra.mxu0 %v79
  %158 = vmatprep.subr.mxu0 0.0
  %159 = vmatpush1.msra.mxu0 %v76
  %160 = vmatprep.subr.mxu0 0.0
  %161 = vmatpush1.msra.mxu0 %v73
  %162 = vmatprep.subr.mxu0 0.0
  %163 = vmatpush1.msra.mxu0 %v70
  %164 = vmatprep.subr.mxu0 0.0
  %165 = vmatpush1.msra.mxu0 %v67
  %166 = vmatprep.subr.mxu0 0.0
  %167 = vmatpush1.msra.mxu0 %v64
  %168 = vmatprep.subr.mxu0 0.0
  %169 = vmatpush1.msra.mxu0 %v61
  %170 = vmatprep.subr.mxu0 0.0
  %171 = vmatpush1.msra.mxu0 %v58
  %172 = vmatprep.subr.mxu0 0.0
  %173 = vmatpush1.msra.mxu0 %v55
  %174 = vmatprep.subr.mxu0 0.0
  %175 = vmatpush1.msra.mxu0 %v52
  %176 = vmatprep.subr.mxu0 0.0
  %177 = vmatpush1.msra.mxu0 %v49
  %178 = vmatprep.subr.mxu0 0.0
  %179 = vmatpush1.msra.mxu0 %v46
  %180 = vmatprep.subr.mxu0 0.0
  %181 = vmatpush1.msra.mxu0 %v43
  %182 = vmatprep.subr.mxu0 0.0
  %183 = vmatpush1.msra.mxu0 %v40
  %184 = vmatprep.subr.mxu0 0.0
  %185 = vmatpush1.msra.mxu0 %v37
  %186 = vmatprep.subr.mxu0 0.0
  %187 = vmatpush2.msra.mxu0 0.0
  %188 = vmatprep.subr.mxu0 0.0
  %189 = vmatpush2.msra.mxu0 0.0
  %190 = vmatprep.subr.mxu0 0.0
  %191 = vmatpush2.msra.mxu0 0.0
  %192 = vmatprep.subr.mxu0 0.0
  %193 = vmatpush2.msra.mxu0 0.0
  %194 = vmatprep.subr.mxu0 0.0
  %195 = vmatpush2.msra.mxu0 0.0
  %196 = vmatprep.subr.mxu0 0.0
  %197 = vmatpush2.msra.mxu0 0.0
  %198 = vmatprep.subr.mxu0 0.0
  %199 = vmatpush2.msra.mxu0 0.0
  %200 = vmatprep.subr.mxu0 0.0
  %201 = vmatpush2.msra.mxu0 0.0
  %202 = vmatprep.subr.mxu0 0.0
  %203 = vmatpush2.msra.mxu0 0.0
  %204 = vmatprep.subr.mxu0 0.0
  %205 = vmatpush2.msra.mxu0 0.0
  %206 = vmatprep.subr.mxu0 0.0
  %207 = vmatpush2.msra.mxu0 0.0
  %208 = vmatprep.subr.mxu0 0.0
  %209 = vmatpush2.msra.mxu0 0.0
  %210 = vmatprep.subr.mxu0 0.0
  %211 = vmatpush2.msra.mxu0 0.0
  %212 = vmatprep.subr.mxu0 0.0
  %213 = vmatpush2.msra.mxu0 0.0
  %214 = vmatprep.subr.mxu0 0.0
  %215 = vmatpush2.msra.mxu0 0.0
  %216 = vmatprep.subr.mxu0 0.0
  %217 = vmatpush2.msra.mxu0 0.0
  %218 = vmatprep.mubr.f32.mxu0 0.0
  %219 = vmatmul.mubr.f32.gmra.mxu0 0.0
  %v220 = vpop.f32.mrf.mxu0
  %v221 = vadd.f32 0.0, %v220
  %v222 = vpop.f32.mrf.mxu0
  %223 = vdwg.mxu0
  %v224 = vadd.f32 %v32, %v150
  %v225 = vxor.u32 %v224, 2147483648
  %v226 = vmul.f32 %v225, 1.442695
  %v227 = vpow.pop %v226
  %v228 = vadd.f32 %v227, 1.0
  %v229 = vrcp.pop %v228
  %v230 = vmul.f32 1.0, %v229
  %v231 = vadd.f32 %v33, %v152
  %v232 = vxor.u32 %v231, 2147483648
  %v233 = vmul.f32 %v232, 1.442695
  %v234 = vpow.pop %v233
  %v235 = vadd.f32 %v234, 1.0
  %v236 = vrcp.pop %v235
  %v237 = vmul.f32 1.0, %v236
  %v238 = vld [vmem:[%s2] sm:$0x1]
  %v240 = vlaneseq
  %v241 = vshrl.u32 %v240, 7
  %v242 = vsub.s32 0, %v241
  %v243 = vrot.slane %v238, %v242
  %v245 = vadd.f32 %v221, %v243
  %v246 = vmul.f32 %v230, %v245
  %v247 = vadd.f32 %v34, %v246
  %v248 = vtanh.pop %v247
  %v249 = vsub.f32 1.0, %v237
  %v250 = vmul.f32 %v249, %v248
  %v251 = vmul.f32 %v237, 0.0
  %v252 = vadd.f32 %v250, %v251
  %s253 = scalar_lea.vmem %s0, 24
  %v254 = vld [vmem:[%s253] sm:$0xff]
  %v255 = vld [vmem:[%s253 + $0x8] sm:$0xff]
  %v256 = vld [vmem:[%s253 + $0x10] sm:$0xff]
  %257 = vmatprep.subr.mxu0 %v81
  %258 = vmatpush1.msra.mxu0 %v80
  %259 = vmatprep.subr.mxu0 %v78
  %260 = vmatpush1.msra.mxu0 %v77
  %261 = vmatprep.subr.mxu0 %v75
  %262 = vmatpush1.msra.mxu0 %v74
  %263 = vmatprep.subr.mxu0 %v72
  %264 = vmatpush1.msra.mxu0 %v71
  %265 = vmatprep.subr.mxu0 %v69
  %266 = vmatpush1.msra.mxu0 %v68
  %267 = vmatprep.subr.mxu0 %v66
  %268 = vmatpush1.msra.mxu0 %v65
  %269 = vmatprep.subr.mxu0 %v63
  %270 = vmatpush1.msra.mxu0 %v62
  %271 = vmatprep.subr.mxu0 %v60
  %272 = vmatpush1.msra.mxu0 %v59
  %273 = vmatprep.subr.mxu0 %v57
  %274 = vmatpush1.msra.mxu0 %v56
  %275 = vmatprep.subr.mxu0 %v54
  %276 = vmatpush1.msra.mxu0 %v53
  %277 = vmatprep.subr.mxu0 %v51
  %278 = vmatpush1.msra.mxu0 %v50
  %279 = vmatprep.subr.mxu0 %v48
  %280 = vmatpush1.msra.mxu0 %v47
  %281 = vmatprep.subr.mxu0 %v45
  %282 = vmatpush1.msra.mxu0 %v44
  %283 = vmatprep.subr.mxu0 %v42
  %284 = vmatpush1.msra.mxu0 %v41
  %285 = vmatprep.subr.mxu0 %v39
  %286 = vmatpush1.msra.mxu0 %v38
  %287 = vmatprep.subr.mxu0 %v36
  %288 = vmatpush1.msra.mxu0 %v35
  %289 = vmatprep.subr.mxu0 0.0
  %290 = vmatpush2.msra.mxu0 0.0
  %291 = vmatprep.subr.mxu0 0.0
  %292 = vmatpush2.msra.mxu0 0.0
  %293 = vmatprep.subr.mxu0 0.0
  %294 = vmatpush2.msra.mxu0 0.0
  %295 = vmatprep.subr.mxu0 0.0
  %296 = vmatpush2.msra.mxu0 0.0
  %297 = vmatprep.subr.mxu0 0.0
  %298 = vmatpush2.msra.mxu0 0.0
  %299 = vmatprep.subr.mxu0 0.0
  %300 = vmatpush2.msra.mxu0 0.0
  %301 = vmatprep.subr.mxu0 0.0
  %302 = vmatpush2.msra.mxu0 0.0
  %303 = vmatprep.subr.mxu0 0.0
  %304 = vmatpush2.msra.mxu0 0.0
  %305 = vmatprep.subr.mxu0 0.0
  %306 = vmatpush2.msra.mxu0 0.0
  %307 = vmatprep.subr.mxu0 0.0
  %308 = vmatpush2.msra.mxu0 0.0
  %309 = vmatprep.subr.mxu0 0.0
  %310 = vmatpush2.msra.mxu0 0.0
  %311 = vmatprep.subr.mxu0 0.0
  %312 = vmatpush2.msra.mxu0 0.0
  %313 = vmatprep.subr.mxu0 0.0
  %314 = vmatpush2.msra.mxu0 0.0
  %315 = vmatprep.subr.mxu0 0.0
  %316 = vmatpush2.msra.mxu0 0.0
  %317 = vmatprep.subr.mxu0 0.0
  %318 = vmatpush2.msra.mxu0 0.0
  %319 = vmatprep.subr.mxu0 0.0
  %320 = vmatpush2.msra.mxu0 0.0
  %321 = vmatprep.mubr.f32.mxu0 0.0
  %322 = vmatmul.mubr.f32.gmra.mxu0 %v252
  %v323 = vpop.f32.mrf.mxu0
  %v324 = vadd.f32 0.0, %v323
  %v325 = vpop.f32.mrf.mxu0
  %v326 = vadd.f32 0.0, %v325
  %327 = vdwg.mxu0
  %328 = vmatprep.subr.mxu0 0.0
  %329 = vmatpush1.msra.mxu0 %v82
  %330 = vmatprep.subr.mxu0 0.0
  %331 = vmatpush1.msra.mxu0 %v79
  %332 = vmatprep.subr.mxu0 0.0
  %333 = vmatpush1.msra.mxu0 %v76
  %334 = vmatprep.subr.mxu0 0.0
  %335 = vmatpush1.msra.mxu0 %v73
  %336 = vmatprep.subr.mxu0 0.0
  %337 = vmatpush1.msra.mxu0 %v70
  %338 = vmatprep.subr.mxu0 0.0
  %339 = vmatpush1.msra.mxu0 %v67
  %340 = vmatprep.subr.mxu0 0.0
  %341 = vmatpush1.msra.mxu0 %v64
  %342 = vmatprep.subr.mxu0 0.0
  %343 = vmatpush1.msra.mxu0 %v61
  %344 = vmatprep.subr.mxu0 0.0
  %345 = vmatpush1.msra.mxu0 %v58
  %346 = vmatprep.subr.mxu0 0.0
  %347 = vmatpush1.msra.mxu0 %v55
  %348 = vmatprep.subr.mxu0 0.0
  %349 = vmatpush1.msra.mxu0 %v52
  %350 = vmatprep.subr.mxu0 0.0
  %351 = vmatpush1.msra.mxu0 %v49
  %352 = vmatprep.subr.mxu0 0.0
  %353 = vmatpush1.msra.mxu0 %v46
  %354 = vmatprep.subr.mxu0 0.0
  %355 = vmatpush1.msra.mxu0 %v43
  %356 = vmatprep.subr.mxu0 0.0
  %357 = vmatpush1.msra.mxu0 %v40
  %358 = vmatprep.subr.mxu0 0.0
  %359 = vmatpush1.msra.mxu0 %v37
  %360 = vmatprep.subr.mxu0 0.0
  %361 = vmatpush2.msra.mxu0 0.0
  %362 = vmatprep.subr.mxu0 0.0
  %363 = vmatpush2.msra.mxu0 0.0
  %364 = vmatprep.subr.mxu0 0.0
  %365 = vmatpush2.msra.mxu0 0.0
  %366 = vmatprep.subr.mxu0 0.0
  %367 = vmatpush2.msra.mxu0 0.0
  %368 = vmatprep.subr.mxu0 0.0
  %369 = vmatpush2.msra.mxu0 0.0
  %370 = vmatprep.subr.mxu0 0.0
  %371 = vmatpush2.msra.mxu0 0.0
  %372 = vmatprep.subr.mxu0 0.0
  %373 = vmatpush2.msra.mxu0 0.0
  %374 = vmatprep.subr.mxu0 0.0
  %375 = vmatpush2.msra.mxu0 0.0
  %376 = vmatprep.subr.mxu0 0.0
  %377 = vmatpush2.msra.mxu0 0.0
  %378 = vmatprep.subr.mxu0 0.0
  %379 = vmatpush2.msra.mxu0 0.0
  %380 = vmatprep.subr.mxu0 0.0
  %381 = vmatpush2.msra.mxu0 0.0
  %382 = vmatprep.subr.mxu0 0.0
  %383 = vmatpush2.msra.mxu0 0.0
  %384 = vmatprep.subr.mxu0 0.0
  %385 = vmatpush2.msra.mxu0 0.0
  %386 = vmatprep.subr.mxu0 0.0
  %387 = vmatpush2.msra.mxu0 0.0
  %388 = vmatprep.subr.mxu0 0.0
  %389 = vmatpush2.msra.mxu0 0.0
  %390 = vmatprep.subr.mxu0 0.0
  %391 = vmatpush2.msra.mxu0 0.0
  %392 = vmatprep.mubr.f32.mxu0 0.0
  %393 = vmatmul.mubr.f32.gmra.mxu0 %v252
  %v394 = vpop.f32.mrf.mxu0
  %v395 = vadd.f32 0.0, %v394
  %v396 = vpop.f32.mrf.mxu0
  %397 = vdwg.mxu0
  %v398 = vadd.f32 %v254, %v324
  %v399 = vxor.u32 %v398, 2147483648
  %v400 = vmul.f32 %v399, 1.442695
  %v401 = vpow.pop %v400
  %v402 = vadd.f32 %v401, 1.0
  %v403 = vrcp.pop %v402
  %v404 = vmul.f32 1.0, %v403
  %v405 = vadd.f32 %v255, %v326
  %v406 = vxor.u32 %v405, 2147483648
  %v407 = vmul.f32 %v406, 1.442695
  %v408 = vpow.pop %v407
  %v409 = vadd.f32 %v408, 1.0
  %v410 = vrcp.pop %v409
  %v411 = vmul.f32 1.0, %v410
  %v412 = vadd.f32 %v395, %v243
  %v413 = vmul.f32 %v404, %v412
  %v414 = vadd.f32 %v256, %v413
  %v415 = vtanh.pop %v414
  %v416 = vsub.f32 1.0, %v411
  %v417 = vmul.f32 %v416, %v415
  %v418 = vmul.f32 %v411, %v252
  %v419 = vadd.f32 %v417, %v418
  %s420 = scalar_lea.vmem %s0, 48
  %v421 = vld [vmem:[%s420] sm:$0xff]
  %v422 = vld [vmem:[%s420 + $0x8] sm:$0xff]
  %v423 = vld [vmem:[%s420 + $0x10] sm:$0xff]
  %424 = vmatprep.subr.mxu0 %v81
  %425 = vmatpush1.msra.mxu0 %v80
  %426 = vmatprep.subr.mxu0 %v78
  %427 = vmatpush1.msra.mxu0 %v77
  %428 = vmatprep.subr.mxu0 %v75
  %429 = vmatpush1.msra.mxu0 %v74
  %430 = vmatprep.subr.mxu0 %v72
  %431 = vmatpush1.msra.mxu0 %v71
  %432 = vmatprep.subr.mxu0 %v69
  %433 = vmatpush1.msra.mxu0 %v68
  %434 = vmatprep.subr.mxu0 %v66
  %435 = vmatpush1.msra.mxu0 %v65
  %436 = vmatprep.subr.mxu0 %v63
  %437 = vmatpush1.msra.mxu0 %v62
  %438 = vmatprep.subr.mxu0 %v60
  %439 = vmatpush1.msra.mxu0 %v59
  %440 = vmatprep.subr.mxu0 %v57
  %441 = vmatpush1.msra.mxu0 %v56
  %442 = vmatprep.subr.mxu0 %v54
  %443 = vmatpush1.msra.mxu0 %v53
  %444 = vmatprep.subr.mxu0 %v51
  %445 = vmatpush1.msra.mxu0 %v50
  %446 = vmatprep.subr.mxu0 %v48
  %447 = vmatpush1.msra.mxu0 %v47
  %448 = vmatprep.subr.mxu0 %v45
  %449 = vmatpush1.msra.mxu0 %v44
  %450 = vmatprep.subr.mxu0 %v42
  %451 = vmatpush1.msra.mxu0 %v41
  %452 = vmatprep.subr.mxu0 %v39
  %453 = vmatpush1.msra.mxu0 %v38
  %454 = vmatprep.subr.mxu0 %v36
  %455 = vmatpush1.msra.mxu0 %v35
  %456 = vmatprep.subr.mxu0 0.0
  %457 = vmatpush2.msra.mxu0 0.0
  %458 = vmatprep.subr.mxu0 0.0
  %459 = vmatpush2.msra.mxu0 0.0
  %460 = vmatprep.subr.mxu0 0.0
  %461 = vmatpush2.msra.mxu0 0.0
  %462 = vmatprep.subr.mxu0 0.0
  %463 = vmatpush2.msra.mxu0 0.0
  %464 = vmatprep.subr.mxu0 0.0
  %465 = vmatpush2.msra.mxu0 0.0
  %466 = vmatprep.subr.mxu0 0.0
  %467 = vmatpush2.msra.mxu0 0.0
  %468 = vmatprep.subr.mxu0 0.0
  %469 = vmatpush2.msra.mxu0 0.0
  %470 = vmatprep.subr.mxu0 0.0
  %471 = vmatpush2.msra.mxu0 0.0
  %472 = vmatprep.subr.mxu0 0.0
  %473 = vmatpush2.msra.mxu0 0.0
  %474 = vmatprep.subr.mxu0 0.0
  %475 = vmatpush2.msra.mxu0 0.0
  %476 = vmatprep.subr.mxu0 0.0
  %477 = vmatpush2.msra.mxu0 0.0
  %478 = vmatprep.subr.mxu0 0.0
  %479 = vmatpush2.msra.mxu0 0.0
  %480 = vmatprep.subr.mxu0 0.0
  %481 = vmatpush2.msra.mxu0 0.0
  %482 = vmatprep.subr.mxu0 0.0
  %483 = vmatpush2.msra.mxu0 0.0
  %484 = vmatprep.subr.mxu0 0.0
  %485 = vmatpush2.msra.mxu0 0.0
  %486 = vmatprep.subr.mxu0 0.0
  %487 = vmatpush2.msra.mxu0 0.0
  %488 = vmatprep.mubr.f32.mxu0 0.0
  %489 = vmatmul.mubr.f32.gmra.mxu0 %v419
  %v490 = vpop.f32.mrf.mxu0
  %v491 = vadd.f32 0.0, %v490
  %v492 = vpop.f32.mrf.mxu0
  %v493 = vadd.f32 0.0, %v492
  %494 = vdwg.mxu0
  %495 = vmatprep.subr.mxu0 0.0
  %496 = vmatpush1.msra.mxu0 %v82
  %497 = vmatprep.subr.mxu0 0.0
  %498 = vmatpush1.msra.mxu0 %v79
  %499 = vmatprep.subr.mxu0 0.0
  %500 = vmatpush1.msra.mxu0 %v76
  %501 = vmatprep.subr.mxu0 0.0
  %502 = vmatpush1.msra.mxu0 %v73
  %503 = vmatprep.subr.mxu0 0.0
  %504 = vmatpush1.msra.mxu0 %v70
  %505 = vmatprep.subr.mxu0 0.0
  %506 = vmatpush1.msra.mxu0 %v67
  %507 = vmatprep.subr.mxu0 0.0
  %508 = vmatpush1.msra.mxu0 %v64
  %509 = vmatprep.subr.mxu0 0.0
  %510 = vmatpush1.msra.mxu0 %v61
  %511 = vmatprep.subr.mxu0 0.0
  %512 = vmatpush1.msra.mxu0 %v58
  %513 = vmatprep.subr.mxu0 0.0
  %514 = vmatpush1.msra.mxu0 %v55
  %515 = vmatprep.subr.mxu0 0.0
  %516 = vmatpush1.msra.mxu0 %v52
  %517 = vmatprep.subr.mxu0 0.0
  %518 = vmatpush1.msra.mxu0 %v49
  %519 = vmatprep.subr.mxu0 0.0
  %520 = vmatpush1.msra.mxu0 %v46
  %521 = vmatprep.subr.mxu0 0.0
  %522 = vmatpush1.msra.mxu0 %v43
  %523 = vmatprep.subr.mxu0 0.0
  %524 = vmatpush1.msra.mxu0 %v40
  %525 = vmatprep.subr.mxu0 0.0
  %526 = vmatpush1.msra.mxu0 %v37
  %527 = vmatprep.subr.mxu0 0.0
  %528 = vmatpush2.msra.mxu0 0.0
  %529 = vmatprep.subr.mxu0 0.0
  %530 = vmatpush2.msra.mxu0 0.0
  %531 = vmatprep.subr.mxu0 0.0
  %532 = vmatpush2.msra.mxu0 0.0
  %533 = vmatprep.subr.mxu0 0.0
  %534 = vmatpush2.msra.mxu0 0.0
  %535 = vmatprep.subr.mxu0 0.0
  %536 = vmatpush2.msra.mxu0 0.0
  %537 = vmatprep.subr.mxu0 0.0
  %538 = vmatpush2.msra.mxu0 0.0
  %539 = vmatprep.subr.mxu0 0.0
  %540 = vmatpush2.msra.mxu0 0.0
  %541 = vmatprep.subr.mxu0 0.0
  %542 = vmatpush2.msra.mxu0 0.0
  %543 = vmatprep.subr.mxu0 0.0
  %544 = vmatpush2.msra.mxu0 0.0
  %545 = vmatprep.subr.mxu0 0.0
  %546 = vmatpush2.msra.mxu0 0.0
  %547 = vmatprep.subr.mxu0 0.0
  %548 = vmatpush2.msra.mxu0 0.0
  %549 = vmatprep.subr.mxu0 0.0
  %550 = vmatpush2.msra.mxu0 0.0
  %551 = vmatprep.subr.mxu0 0.0
  %552 = vmatpush2.msra.mxu0 0.0
  %553 = vmatprep.subr.mxu0 0.0
  %554 = vmatpush2.msra.mxu0 0.0
  %555 = vmatprep.subr.mxu0 0.0
  %556 = vmatpush2.msra.mxu0 0.0
  %557 = vmatprep.subr.mxu0 0.0
  %558 = vmatpush2.msra.mxu0 0.0
  %559 = vmatprep.mubr.f32.mxu0 0.0
  %560 = vmatmul.mubr.f32.gmra.mxu0 %v419
  %v561 = vpop.f32.mrf.mxu0
  %v562 = vadd.f32 0.0, %v561
  %v563 = vpop.f32.mrf.mxu0
  %564 = vdwg.mxu0
  %v565 = vadd.f32 %v421, %v491
  %v566 = vxor.u32 %v565, 2147483648
  %v567 = vmul.f32 %v566, 1.442695
  %v568 = vpow.pop %v567
  %v569 = vadd.f32 %v568, 1.0
  %v570 = vrcp.pop %v569
  %v571 = vmul.f32 1.0, %v570
  %v572 = vadd.f32 %v422, %v493
  %v573 = vxor.u32 %v572, 2147483648
  %v574 = vmul.f32 %v573, 1.442695
  %v575 = vpow.pop %v574
  %v576 = vadd.f32 %v575, 1.0
  %v577 = vrcp.pop %v576
  %v578 = vmul.f32 1.0, %v577
  %v579 = vadd.f32 %v562, %v243
  %v580 = vmul.f32 %v571, %v579
  %v581 = vadd.f32 %v423, %v580
  %v582 = vtanh.pop %v581
  %v583 = vsub.f32 1.0, %v578
  %v584 = vmul.f32 %v583, %v582
  %v585 = vmul.f32 %v578, %v419
  %v586 = vadd.f32 %v584, %v585
  %s587 = scalar_lea.vmem %s0, 72
  %v588 = vld [vmem:[%s587] sm:$0xff]
  %v589 = vld [vmem:[%s587 + $0x8] sm:$0xff]
  %v590 = vld [vmem:[%s587 + $0x10] sm:$0xff]
  %591 = vmatprep.subr.mxu0 %v81
  %592 = vmatpush1.msra.mxu0 %v80
  %593 = vmatprep.subr.mxu0 %v78
  %594 = vmatpush1.msra.mxu0 %v77
  %595 = vmatprep.subr.mxu0 %v75
  %596 = vmatpush1.msra.mxu0 %v74
  %597 = vmatprep.subr.mxu0 %v72
  %598 = vmatpush1.msra.mxu0 %v71
  %599 = vmatprep.subr.mxu0 %v69
  %600 = vmatpush1.msra.mxu0 %v68
  %601 = vmatprep.subr.mxu0 %v66
  %602 = vmatpush1.msra.mxu0 %v65
  %603 = vmatprep.subr.mxu0 %v63
  %604 = vmatpush1.msra.mxu0 %v62
  %605 = vmatprep.subr.mxu0 %v60
  %606 = vmatpush1.msra.mxu0 %v59
  %607 = vmatprep.subr.mxu0 %v57
  %608 = vmatpush1.msra.mxu0 %v56
  %609 = vmatprep.subr.mxu0 %v54
  %610 = vmatpush1.msra.mxu0 %v53
  %611 = vmatprep.subr.mxu0 %v51
  %612 = vmatpush1.msra.mxu0 %v50
  %613 = vmatprep.subr.mxu0 %v48
  %614 = vmatpush1.msra.mxu0 %v47
  %615 = vmatprep.subr.mxu0 %v45
  %616 = vmatpush1.msra.mxu0 %v44
  %617 = vmatprep.subr.mxu0 %v42
  %618 = vmatpush1.msra.mxu0 %v41
  %619 = vmatprep.subr.mxu0 %v39
  %620 = vmatpush1.msra.mxu0 %v38
  %621 = vmatprep.subr.mxu0 %v36
  %622 = vmatpush1.msra.mxu0 %v35
  %623 = vmatprep.subr.mxu0 0.0
  %624 = vmatpush2.msra.mxu0 0.0
  %625 = vmatprep.subr.mxu0 0.0
  %626 = vmatpush2.msra.mxu0 0.0
  %627 = vmatprep.subr.mxu0 0.0
  %628 = vmatpush2.msra.mxu0 0.0
  %629 = vmatprep.subr.mxu0 0.0
  %630 = vmatpush2.msra.mxu0 0.0
  %631 = vmatprep.subr.mxu0 0.0
  %632 = vmatpush2.msra.mxu0 0.0
  %633 = vmatprep.subr.mxu0 0.0
  %634 = vmatpush2.msra.mxu0 0.0
  %635 = vmatprep.subr.mxu0 0.0
  %636 = vmatpush2.msra.mxu0 0.0
  %637 = vmatprep.subr.mxu0 0.0
  %638 = vmatpush2.msra.mxu0 0.0
  %639 = vmatprep.subr.mxu0 0.0
  %640 = vmatpush2.msra.mxu0 0.0
  %641 = vmatprep.subr.mxu0 0.0
  %642 = vmatpush2.msra.mxu0 0.0
  %643 = vmatprep.subr.mxu0 0.0
  %644 = vmatpush2.msra.mxu0 0.0
  %645 = vmatprep.subr.mxu0 0.0
  %646 = vmatpush2.msra.mxu0 0.0
  %647 = vmatprep.subr.mxu0 0.0
  %648 = vmatpush2.msra.mxu0 0.0
  %649 = vmatprep.subr.mxu0 0.0
  %650 = vmatpush2.msra.mxu0 0.0
  %651 = vmatprep.subr.mxu0 0.0
  %652 = vmatpush2.msra.mxu0 0.0
  %653 = vmatprep.subr.mxu0 0.0
  %654 = vmatpush2.msra.mxu0 0.0
  %655 = vmatprep.mubr.f32.mxu0 0.0
  %656 = vmatmul.mubr.f32.gmra.mxu0 %v586
  %v657 = vpop.f32.mrf.mxu0
  %v658 = vadd.f32 0.0, %v657
  %v659 = vpop.f32.mrf.mxu0
  %v660 = vadd.f32 0.0, %v659
  %661 = vdwg.mxu0
  %662 = vmatprep.subr.mxu0 0.0
  %663 = vmatpush1.msra.mxu0 %v82
  %664 = vmatprep.subr.mxu0 0.0
  %665 = vmatpush1.msra.mxu0 %v79
  %666 = vmatprep.subr.mxu0 0.0
  %667 = vmatpush1.msra.mxu0 %v76
  %668 = vmatprep.subr.mxu0 0.0
  %669 = vmatpush1.msra.mxu0 %v73
  %670 = vmatprep.subr.mxu0 0.0
  %671 = vmatpush1.msra.mxu0 %v70
  %672 = vmatprep.subr.mxu0 0.0
  %673 = vmatpush1.msra.mxu0 %v67
  %674 = vmatprep.subr.mxu0 0.0
  %675 = vmatpush1.msra.mxu0 %v64
  %676 = vmatprep.subr.mxu0 0.0
  %677 = vmatpush1.msra.mxu0 %v61
  %678 = vmatprep.subr.mxu0 0.0
  %679 = vmatpush1.msra.mxu0 %v58
  %680 = vmatprep.subr.mxu0 0.0
  %681 = vmatpush1.msra.mxu0 %v55
  %682 = vmatprep.subr.mxu0 0.0
  %683 = vmatpush1.msra.mxu0 %v52
  %684 = vmatprep.subr.mxu0 0.0
  %685 = vmatpush1.msra.mxu0 %v49
  %686 = vmatprep.subr.mxu0 0.0
  %687 = vmatpush1.msra.mxu0 %v46
  %688 = vmatprep.subr.mxu0 0.0
  %689 = vmatpush1.msra.mxu0 %v43
  %690 = vmatprep.subr.mxu0 0.0
  %691 = vmatpush1.msra.mxu0 %v40
  %692 = vmatprep.subr.mxu0 0.0
  %693 = vmatpush1.msra.mxu0 %v37
  %694 = vmatprep.subr.mxu0 0.0
  %695 = vmatpush2.msra.mxu0 0.0
  %696 = vmatprep.subr.mxu0 0.0
  %697 = vmatpush2.msra.mxu0 0.0
  %698 = vmatprep.subr.mxu0 0.0
  %699 = vmatpush2.msra.mxu0 0.0
  %700 = vmatprep.subr.mxu0 0.0
  %701 = vmatpush2.msra.mxu0 0.0
  %702 = vmatprep.subr.mxu0 0.0
  %703 = vmatpush2.msra.mxu0 0.0
  %704 = vmatprep.subr.mxu0 0.0
  %705 = vmatpush2.msra.mxu0 0.0
  %706 = vmatprep.subr.mxu0 0.0
  %707 = vmatpush2.msra.mxu0 0.0
  %708 = vmatprep.subr.mxu0 0.0
  %709 = vmatpush2.msra.mxu0 0.0
  %710 = vmatprep.subr.mxu0 0.0
  %711 = vmatpush2.msra.mxu0 0.0
  %712 = vmatprep.subr.mxu0 0.0
  %713 = vmatpush2.msra.mxu0 0.0
  %714 = vmatprep.subr.mxu0 0.0
  %715 = vmatpush2.msra.mxu0 0.0
  %716 = vmatprep.subr.mxu0 0.0
  %717 = vmatpush2.msra.mxu0 0.0
  %718 = vmatprep.subr.mxu0 0.0
  %719 = vmatpush2.msra.mxu0 0.0
  %720 = vmatprep.subr.mxu0 0.0
  %721 = vmatpush2.msra.mxu0 0.0
  %722 = vmatprep.subr.mxu0 0.0
  %723 = vmatpush2.msra.mxu0 0.0
  %724 = vmatprep.subr.mxu0 0.0
  %725 = vmatpush2.msra.mxu0 0.0
  %726 = vmatprep.mubr.f32.mxu0 0.0
  %727 = vmatmul.mubr.f32.gmra.mxu0 %v586
  %v728 = vpop.f32.mrf.mxu0
  %v729 = vadd.f32 0.0, %v728
  %v730 = vpop.f32.mrf.mxu0
  %731 = vdwg.mxu0
  %v732 = vadd.f32 %v588, %v658
  %v733 = vxor.u32 %v732, 2147483648
  %v734 = vmul.f32 %v733, 1.442695
  %v735 = vpow.pop %v734
  %v736 = vadd.f32 %v735, 1.0
  %v737 = vrcp.pop %v736
  %v738 = vmul.f32 1.0, %v737
  %v739 = vadd.f32 %v589, %v660
  %v740 = vxor.u32 %v739, 2147483648
  %v741 = vmul.f32 %v740, 1.442695
  %v742 = vpow.pop %v741
  %v743 = vadd.f32 %v742, 1.0
  %v744 = vrcp.pop %v743
  %v745 = vmul.f32 1.0, %v744
  %v746 = vadd.f32 %v729, %v243
  %v747 = vmul.f32 %v738, %v746
  %v748 = vadd.f32 %v590, %v747
  %v749 = vtanh.pop %v748
  %v750 = vsub.f32 1.0, %v745
  %v751 = vmul.f32 %v750, %v749
  %v752 = vmul.f32 %v745, %v586
  %v753 = vadd.f32 %v751, %v752
  %s754 = scalar_lea.vmem %s0, 96
  %v755 = vld [vmem:[%s754] sm:$0xff]
  %v756 = vld [vmem:[%s754 + $0x8] sm:$0xff]
  %v757 = vld [vmem:[%s754 + $0x10] sm:$0xff]
  %758 = vmatprep.subr.mxu0 %v81
  %759 = vmatpush1.msra.mxu0 %v80
  %760 = vmatprep.subr.mxu0 %v78
  %761 = vmatpush1.msra.mxu0 %v77
  %762 = vmatprep.subr.mxu0 %v75
  %763 = vmatpush1.msra.mxu0 %v74
  %764 = vmatprep.subr.mxu0 %v72
  %765 = vmatpush1.msra.mxu0 %v71
  %766 = vmatprep.subr.mxu0 %v69
  %767 = vmatpush1.msra.mxu0 %v68
  %768 = vmatprep.subr.mxu0 %v66
  %769 = vmatpush1.msra.mxu0 %v65
  %770 = vmatprep.subr.mxu0 %v63
  %771 = vmatpush1.msra.mxu0 %v62
  %772 = vmatprep.subr.mxu0 %v60
  %773 = vmatpush1.msra.mxu0 %v59
  %774 = vmatprep.subr.mxu0 %v57
  %775 = vmatpush1.msra.mxu0 %v56
  %776 = vmatprep.subr.mxu0 %v54
  %777 = vmatpush1.msra.mxu0 %v53
  %778 = vmatprep.subr.mxu0 %v51
  %779 = vmatpush1.msra.mxu0 %v50
  %780 = vmatprep.subr.mxu0 %v48
  %781 = vmatpush1.msra.mxu0 %v47
  %782 = vmatprep.subr.mxu0 %v45
  %783 = vmatpush1.msra.mxu0 %v44
  %784 = vmatprep.subr.mxu0 %v42
  %785 = vmatpush1.msra.mxu0 %v41
  %786 = vmatprep.subr.mxu0 %v39
  %787 = vmatpush1.msra.mxu0 %v38
  %788 = vmatprep.subr.mxu0 %v36
  %789 = vmatpush1.msra.mxu0 %v35
  %790 = vmatprep.subr.mxu0 0.0
  %791 = vmatpush2.msra.mxu0 0.0
  %792 = vmatprep.subr.mxu0 0.0
  %793 = vmatpush2.msra.mxu0 0.0
  %794 = vmatprep.subr.mxu0 0.0
  %795 = vmatpush2.msra.mxu0 0.0
  %796 = vmatprep.subr.mxu0 0.0
  %797 = vmatpush2.msra.mxu0 0.0
  %798 = vmatprep.subr.mxu0 0.0
  %799 = vmatpush2.msra.mxu0 0.0
  %800 = vmatprep.subr.mxu0 0.0
  %801 = vmatpush2.msra.mxu0 0.0
  %802 = vmatprep.subr.mxu0 0.0
  %803 = vmatpush2.msra.mxu0 0.0
  %804 = vmatprep.subr.mxu0 0.0
  %805 = vmatpush2.msra.mxu0 0.0
  %806 = vmatprep.subr.mxu0 0.0
  %807 = vmatpush2.msra.mxu0 0.0
  %808 = vmatprep.subr.mxu0 0.0
  %809 = vmatpush2.msra.mxu0 0.0
  %810 = vmatprep.subr.mxu0 0.0
  %811 = vmatpush2.msra.mxu0 0.0
  %812 = vmatprep.subr.mxu0 0.0
  %813 = vmatpush2.msra.mxu0 0.0
  %814 = vmatprep.subr.mxu0 0.0
  %815 = vmatpush2.msra.mxu0 0.0
  %816 = vmatprep.subr.mxu0 0.0
  %817 = vmatpush2.msra.mxu0 0.0
  %818 = vmatprep.subr.mxu0 0.0
  %819 = vmatpush2.msra.mxu0 0.0
  %820 = vmatprep.subr.mxu0 0.0
  %821 = vmatpush2.msra.mxu0 0.0
  %822 = vmatprep.mubr.f32.mxu0 0.0
  %823 = vmatmul.mubr.f32.gmra.mxu0 %v753
  %v824 = vpop.f32.mrf.mxu0
  %v825 = vadd.f32 0.0, %v824
  %v826 = vpop.f32.mrf.mxu0
  %v827 = vadd.f32 0.0, %v826
  %828 = vdwg.mxu0
  %829 = vmatprep.subr.mxu0 0.0
  %830 = vmatpush1.msra.mxu0 %v82
  %831 = vmatprep.subr.mxu0 0.0
  %832 = vmatpush1.msra.mxu0 %v79
  %833 = vmatprep.subr.mxu0 0.0
  %834 = vmatpush1.msra.mxu0 %v76
  %835 = vmatprep.subr.mxu0 0.0
  %836 = vmatpush1.msra.mxu0 %v73
  %837 = vmatprep.subr.mxu0 0.0
  %838 = vmatpush1.msra.mxu0 %v70
  %839 = vmatprep.subr.mxu0 0.0
  %840 = vmatpush1.msra.mxu0 %v67
  %841 = vmatprep.subr.mxu0 0.0
  %842 = vmatpush1.msra.mxu0 %v64
  %843 = vmatprep.subr.mxu0 0.0
  %844 = vmatpush1.msra.mxu0 %v61
  %845 = vmatprep.subr.mxu0 0.0
  %846 = vmatpush1.msra.mxu0 %v58
  %847 = vmatprep.subr.mxu0 0.0
  %848 = vmatpush1.msra.mxu0 %v55
  %849 = vmatprep.subr.mxu0 0.0
  %850 = vmatpush1.msra.mxu0 %v52
  %851 = vmatprep.subr.mxu0 0.0
  %852 = vmatpush1.msra.mxu0 %v49
  %853 = vmatprep.subr.mxu0 0.0
  %854 = vmatpush1.msra.mxu0 %v46
  %855 = vmatprep.subr.mxu0 0.0
  %856 = vmatpush1.msra.mxu0 %v43
  %857 = vmatprep.subr.mxu0 0.0
  %858 = vmatpush1.msra.mxu0 %v40
  %859 = vmatprep.subr.mxu0 0.0
  %860 = vmatpush1.msra.mxu0 %v37
  %861 = vmatprep.subr.mxu0 0.0
  %862 = vmatpush2.msra.mxu0 0.0
  %863 = vmatprep.subr.mxu0 0.0
  %864 = vmatpush2.msra.mxu0 0.0
  %865 = vmatprep.subr.mxu0 0.0
  %866 = vmatpush2.msra.mxu0 0.0
  %867 = vmatprep.subr.mxu0 0.0
  %868 = vmatpush2.msra.mxu0 0.0
  %869 = vmatprep.subr.mxu0 0.0
  %870 = vmatpush2.msra.mxu0 0.0
  %871 = vmatprep.subr.mxu0 0.0
  %872 = vmatpush2.msra.mxu0 0.0
  %873 = vmatprep.subr.mxu0 0.0
  %874 = vmatpush2.msra.mxu0 0.0
  %875 = vmatprep.subr.mxu0 0.0
  %876 = vmatpush2.msra.mxu0 0.0
  %877 = vmatprep.subr.mxu0 0.0
  %878 = vmatpush2.msra.mxu0 0.0
  %879 = vmatprep.subr.mxu0 0.0
  %880 = vmatpush2.msra.mxu0 0.0
  %881 = vmatprep.subr.mxu0 0.0
  %882 = vmatpush2.msra.mxu0 0.0
  %883 = vmatprep.subr.mxu0 0.0
  %884 = vmatpush2.msra.mxu0 0.0
  %885 = vmatprep.subr.mxu0 0.0
  %886 = vmatpush2.msra.mxu0 0.0
  %887 = vmatprep.subr.mxu0 0.0
  %888 = vmatpush2.msra.mxu0 0.0
  %889 = vmatprep.subr.mxu0 0.0
  %890 = vmatpush2.msra.mxu0 0.0
  %891 = vmatprep.subr.mxu0 0.0
  %892 = vmatpush2.msra.mxu0 0.0
  %893 = vmatprep.mubr.f32.mxu0 0.0
  %894 = vmatmul.mubr.f32.gmra.mxu0 %v753
  %v895 = vpop.f32.mrf.mxu0
  %v896 = vadd.f32 0.0, %v895
  %v897 = vpop.f32.mrf.mxu0
  %898 = vdwg.mxu0
  %v899 = vadd.f32 %v755, %v825
  %v900 = vxor.u32 %v899, 2147483648
  %v901 = vmul.f32 %v900, 1.442695
  %v902 = vpow.pop %v901
  %v903 = vadd.f32 %v902, 1.0
  %v904 = vrcp.pop %v903
  %v905 = vmul.f32 1.0, %v904
  %v906 = vadd.f32 %v756, %v827
  %v907 = vxor.u32 %v906, 2147483648
  %v908 = vmul.f32 %v907, 1.442695
  %v909 = vpow.pop %v908
  %v910 = vadd.f32 %v909, 1.0
  %v911 = vrcp.pop %v910
  %v912 = vmul.f32 1.0, %v911
  %v913 = vadd.f32 %v896, %v243
  %v914 = vmul.f32 %v905, %v913
  %v915 = vadd.f32 %v757, %v914
  %v916 = vtanh.pop %v915
  %v917 = vsub.f32 1.0, %v912
  %v918 = vmul.f32 %v917, %v916
  %v919 = vmul.f32 %v912, %v753
  %v920 = vadd.f32 %v918, %v919
  %s921 = scalar_lea.vmem %s0, 120
  %v922 = vld [vmem:[%s921] sm:$0xff]
  %v923 = vld [vmem:[%s921 + $0x8] sm:$0xff]
  %v924 = vld [vmem:[%s921 + $0x10] sm:$0xff]
  %925 = vmatprep.subr.mxu0 %v81
  %926 = vmatpush1.msra.mxu0 %v80
  %927 = vmatprep.subr.mxu0 %v78
  %928 = vmatpush1.msra.mxu0 %v77
  %929 = vmatprep.subr.mxu0 %v75
  %930 = vmatpush1.msra.mxu0 %v74
  %931 = vmatprep.subr.mxu0 %v72
  %932 = vmatpush1.msra.mxu0 %v71
  %933 = vmatprep.subr.mxu0 %v69
  %934 = vmatpush1.msra.mxu0 %v68
  %935 = vmatprep.subr.mxu0 %v66
  %936 = vmatpush1.msra.mxu0 %v65
  %937 = vmatprep.subr.mxu0 %v63
  %938 = vmatpush1.msra.mxu0 %v62
  %939 = vmatprep.subr.mxu0 %v60
  %940 = vmatpush1.msra.mxu0 %v59
  %941 = vmatprep.subr.mxu0 %v57
  %942 = vmatpush1.msra.mxu0 %v56
  %943 = vmatprep.subr.mxu0 %v54
  %944 = vmatpush1.msra.mxu0 %v53
  %945 = vmatprep.subr.mxu0 %v51
  %946 = vmatpush1.msra.mxu0 %v50
  %947 = vmatprep.subr.mxu0 %v48
  %948 = vmatpush1.msra.mxu0 %v47
  %949 = vmatprep.subr.mxu0 %v45
  %950 = vmatpush1.msra.mxu0 %v44
  %951 = vmatprep.subr.mxu0 %v42
  %952 = vmatpush1.msra.mxu0 %v41
  %953 = vmatprep.subr.mxu0 %v39
  %954 = vmatpush1.msra.mxu0 %v38
  %955 = vmatprep.subr.mxu0 %v36
  %956 = vmatpush1.msra.mxu0 %v35
  %957 = vmatprep.subr.mxu0 0.0
  %958 = vmatpush2.msra.mxu0 0.0
  %959 = vmatprep.subr.mxu0 0.0
  %960 = vmatpush2.msra.mxu0 0.0
  %961 = vmatprep.subr.mxu0 0.0
  %962 = vmatpush2.msra.mxu0 0.0
  %963 = vmatprep.subr.mxu0 0.0
  %964 = vmatpush2.msra.mxu0 0.0
  %965 = vmatprep.subr.mxu0 0.0
  %966 = vmatpush2.msra.mxu0 0.0
  %967 = vmatprep.subr.mxu0 0.0
  %968 = vmatpush2.msra.mxu0 0.0
  %969 = vmatprep.subr.mxu0 0.0
  %970 = vmatpush2.msra.mxu0 0.0
  %971 = vmatprep.subr.mxu0 0.0
  %972 = vmatpush2.msra.mxu0 0.0
  %973 = vmatprep.subr.mxu0 0.0
  %974 = vmatpush2.msra.mxu0 0.0
  %975 = vmatprep.subr.mxu0 0.0
  %976 = vmatpush2.msra.mxu0 0.0
  %977 = vmatprep.subr.mxu0 0.0
  %978 = vmatpush2.msra.mxu0 0.0
  %979 = vmatprep.subr.mxu0 0.0
  %980 = vmatpush2.msra.mxu0 0.0
  %981 = vmatprep.subr.mxu0 0.0
  %982 = vmatpush2.msra.mxu0 0.0
  %983 = vmatprep.subr.mxu0 0.0
  %984 = vmatpush2.msra.mxu0 0.0
  %985 = vmatprep.subr.mxu0 0.0
  %986 = vmatpush2.msra.mxu0 0.0
  %987 = vmatprep.subr.mxu0 0.0
  %988 = vmatpush2.msra.mxu0 0.0
  %989 = vmatprep.mubr.f32.mxu0 0.0
  %990 = vmatmul.mubr.f32.gmra.mxu0 %v920
  %v991 = vpop.f32.mrf.mxu0
  %v992 = vadd.f32 0.0, %v991
  %v993 = vpop.f32.mrf.mxu0
  %v994 = vadd.f32 0.0, %v993
  %995 = vdwg.mxu0
  %996 = vmatprep.subr.mxu0 0.0
  %997 = vmatpush1.msra.mxu0 %v82
  %998 = vmatprep.subr.mxu0 0.0
  %999 = vmatpush1.msra.mxu0 %v79
  %1000 = vmatprep.subr.mxu0 0.0
  %1001 = vmatpush1.msra.mxu0 %v76
  %1002 = vmatprep.subr.mxu0 0.0
  %1003 = vmatpush1.msra.mxu0 %v73
  %1004 = vmatprep.subr.mxu0 0.0
  %1005 = vmatpush1.msra.mxu0 %v70
  %1006 = vmatprep.subr.mxu0 0.0
  %1007 = vmatpush1.msra.mxu0 %v67
  %1008 = vmatprep.subr.mxu0 0.0
  %1009 = vmatpush1.msra.mxu0 %v64
  %1010 = vmatprep.subr.mxu0 0.0
  %1011 = vmatpush1.msra.mxu0 %v61
  %1012 = vmatprep.subr.mxu0 0.0
  %1013 = vmatpush1.msra.mxu0 %v58
  %1014 = vmatprep.subr.mxu0 0.0
  %1015 = vmatpush1.msra.mxu0 %v55
  %1016 = vmatprep.subr.mxu0 0.0
  %1017 = vmatpush1.msra.mxu0 %v52
  %1018 = vmatprep.subr.mxu0 0.0
  %1019 = vmatpush1.msra.mxu0 %v49
  %1020 = vmatprep.subr.mxu0 0.0
  %1021 = vmatpush1.msra.mxu0 %v46
  %1022 = vmatprep.subr.mxu0 0.0
  %1023 = vmatpush1.msra.mxu0 %v43
  %1024 = vmatprep.subr.mxu0 0.0
  %1025 = vmatpush1.msra.mxu0 %v40
  %1026 = vmatprep.subr.mxu0 0.0
  %1027 = vmatpush1.msra.mxu0 %v37
  %1028 = vmatprep.subr.mxu0 0.0
  %1029 = vmatpush2.msra.mxu0 0.0
  %1030 = vmatprep.subr.mxu0 0.0
  %1031 = vmatpush2.msra.mxu0 0.0
  %1032 = vmatprep.subr.mxu0 0.0
  %1033 = vmatpush2.msra.mxu0 0.0
  %1034 = vmatprep.subr.mxu0 0.0
  %1035 = vmatpush2.msra.mxu0 0.0
  %1036 = vmatprep.subr.mxu0 0.0
  %1037 = vmatpush2.msra.mxu0 0.0
  %1038 = vmatprep.subr.mxu0 0.0
  %1039 = vmatpush2.msra.mxu0 0.0
  %1040 = vmatprep.subr.mxu0 0.0
  %1041 = vmatpush2.msra.mxu0 0.0
  %1042 = vmatprep.subr.mxu0 0.0
  %1043 = vmatpush2.msra.mxu0 0.0
  %1044 = vmatprep.subr.mxu0 0.0
  %1045 = vmatpush2.msra.mxu0 0.0
  %1046 = vmatprep.subr.mxu0 0.0
  %1047 = vmatpush2.msra.mxu0 0.0
  %1048 = vmatprep.subr.mxu0 0.0
  %1049 = vmatpush2.msra.mxu0 0.0
  %1050 = vmatprep.subr.mxu0 0.0
  %1051 = vmatpush2.msra.mxu0 0.0
  %1052 = vmatprep.subr.mxu0 0.0
  %1053 = vmatpush2.msra.mxu0 0.0
  %1054 = vmatprep.subr.mxu0 0.0
  %1055 = vmatpush2.msra.mxu0 0.0
  %1056 = vmatprep.subr.mxu0 0.0
  %1057 = vmatpush2.msra.mxu0 0.0
  %1058 = vmatprep.subr.mxu0 0.0
  %1059 = vmatpush2.msra.mxu0 0.0
  %1060 = vmatprep.mubr.f32.mxu0 0.0
  %1061 = vmatmul.mubr.f32.gmra.mxu0 %v920
  %v1062 = vpop.f32.mrf.mxu0
  %v1063 = vadd.f32 0.0, %v1062
  %v1064 = vpop.f32.mrf.mxu0
  %1065 = vdwg.mxu0
  %v1066 = vadd.f32 %v922, %v992
  %v1067 = vxor.u32 %v1066, 2147483648
  %v1068 = vmul.f32 %v1067, 1.442695
  %v1069 = vpow.pop %v1068
  %v1070 = vadd.f32 %v1069, 1.0
  %v1071 = vrcp.pop %v1070
  %v1072 = vmul.f32 1.0, %v1071
  %v1073 = vadd.f32 %v923, %v994
  %v1074 = vxor.u32 %v1073, 2147483648
  %v1075 = vmul.f32 %v1074, 1.442695
  %v1076 = vpow.pop %v1075
  %v1077 = vadd.f32 %v1076, 1.0
  %v1078 = vrcp.pop %v1077
  %v1079 = vmul.f32 1.0, %v1078
  %v1080 = vadd.f32 %v1063, %v243
  %v1081 = vmul.f32 %v1072, %v1080
  %v1082 = vadd.f32 %v924, %v1081
  %v1083 = vtanh.pop %v1082
  %v1084 = vsub.f32 1.0, %v1079
  %v1085 = vmul.f32 %v1084, %v1083
  %v1086 = vmul.f32 %v1079, %v920
  %v1087 = vadd.f32 %v1085, %v1086
  %s1088 = scalar_lea.vmem %s0, 144
  %v1089 = vld [vmem:[%s1088] sm:$0xff]
  %v1090 = vld [vmem:[%s1088 + $0x8] sm:$0xff]
  %v1091 = vld [vmem:[%s1088 + $0x10] sm:$0xff]
  %1092 = vmatprep.subr.mxu0 %v81
  %1093 = vmatpush1.msra.mxu0 %v80
  %1094 = vmatprep.subr.mxu0 %v78
  %1095 = vmatpush1.msra.mxu0 %v77
  %1096 = vmatprep.subr.mxu0 %v75
  %1097 = vmatpush1.msra.mxu0 %v74
  %1098 = vmatprep.subr.mxu0 %v72
  %1099 = vmatpush1.msra.mxu0 %v71
  %1100 = vmatprep.subr.mxu0 %v69
  %1101 = vmatpush1.msra.mxu0 %v68
  %1102 = vmatprep.subr.mxu0 %v66
  %1103 = vmatpush1.msra.mxu0 %v65
  %1104 = vmatprep.subr.mxu0 %v63
  %1105 = vmatpush1.msra.mxu0 %v62
  %1106 = vmatprep.subr.mxu0 %v60
  %1107 = vmatpush1.msra.mxu0 %v59
  %1108 = vmatprep.subr.mxu0 %v57
  %1109 = vmatpush1.msra.mxu0 %v56
  %1110 = vmatprep.subr.mxu0 %v54
  %1111 = vmatpush1.msra.mxu0 %v53
  %1112 = vmatprep.subr.mxu0 %v51
  %1113 = vmatpush1.msra.mxu0 %v50
  %1114 = vmatprep.subr.mxu0 %v48
  %1115 = vmatpush1.msra.mxu0 %v47
  %1116 = vmatprep.subr.mxu0 %v45
  %1117 = vmatpush1.msra.mxu0 %v44
  %1118 = vmatprep.subr.mxu0 %v42
  %1119 = vmatpush1.msra.mxu0 %v41
  %1120 = vmatprep.subr.mxu0 %v39
  %1121 = vmatpush1.msra.mxu0 %v38
  %1122 = vmatprep.subr.mxu0 %v36
  %1123 = vmatpush1.msra.mxu0 %v35
  %1124 = vmatprep.subr.mxu0 0.0
  %1125 = vmatpush2.msra.mxu0 0.0
  %1126 = vmatprep.subr.mxu0 0.0
  %1127 = vmatpush2.msra.mxu0 0.0
  %1128 = vmatprep.subr.mxu0 0.0
  %1129 = vmatpush2.msra.mxu0 0.0
  %1130 = vmatprep.subr.mxu0 0.0
  %1131 = vmatpush2.msra.mxu0 0.0
  %1132 = vmatprep.subr.mxu0 0.0
  %1133 = vmatpush2.msra.mxu0 0.0
  %1134 = vmatprep.subr.mxu0 0.0
  %1135 = vmatpush2.msra.mxu0 0.0
  %1136 = vmatprep.subr.mxu0 0.0
  %1137 = vmatpush2.msra.mxu0 0.0
  %1138 = vmatprep.subr.mxu0 0.0
  %1139 = vmatpush2.msra.mxu0 0.0
  %1140 = vmatprep.subr.mxu0 0.0
  %1141 = vmatpush2.msra.mxu0 0.0
  %1142 = vmatprep.subr.mxu0 0.0
  %1143 = vmatpush2.msra.mxu0 0.0
  %1144 = vmatprep.subr.mxu0 0.0
  %1145 = vmatpush2.msra.mxu0 0.0
  %1146 = vmatprep.subr.mxu0 0.0
  %1147 = vmatpush2.msra.mxu0 0.0
  %1148 = vmatprep.subr.mxu0 0.0
  %1149 = vmatpush2.msra.mxu0 0.0
  %1150 = vmatprep.subr.mxu0 0.0
  %1151 = vmatpush2.msra.mxu0 0.0
  %1152 = vmatprep.subr.mxu0 0.0
  %1153 = vmatpush2.msra.mxu0 0.0
  %1154 = vmatprep.subr.mxu0 0.0
  %1155 = vmatpush2.msra.mxu0 0.0
  %1156 = vmatprep.mubr.f32.mxu0 0.0
  %1157 = vmatmul.mubr.f32.gmra.mxu0 %v1087
  %v1158 = vpop.f32.mrf.mxu0
  %v1159 = vadd.f32 0.0, %v1158
  %v1160 = vpop.f32.mrf.mxu0
  %v1161 = vadd.f32 0.0, %v1160
  %1162 = vdwg.mxu0
  %1163 = vmatprep.subr.mxu0 0.0
  %1164 = vmatpush1.msra.mxu0 %v82
  %1165 = vmatprep.subr.mxu0 0.0
  %1166 = vmatpush1.msra.mxu0 %v79
  %1167 = vmatprep.subr.mxu0 0.0
  %1168 = vmatpush1.msra.mxu0 %v76
  %1169 = vmatprep.subr.mxu0 0.0
  %1170 = vmatpush1.msra.mxu0 %v73
  %1171 = vmatprep.subr.mxu0 0.0
  %1172 = vmatpush1.msra.mxu0 %v70
  %1173 = vmatprep.subr.mxu0 0.0
  %1174 = vmatpush1.msra.mxu0 %v67
  %1175 = vmatprep.subr.mxu0 0.0
  %1176 = vmatpush1.msra.mxu0 %v64
  %1177 = vmatprep.subr.mxu0 0.0
  %1178 = vmatpush1.msra.mxu0 %v61
  %1179 = vmatprep.subr.mxu0 0.0
  %1180 = vmatpush1.msra.mxu0 %v58
  %1181 = vmatprep.subr.mxu0 0.0
  %1182 = vmatpush1.msra.mxu0 %v55
  %1183 = vmatprep.subr.mxu0 0.0
  %1184 = vmatpush1.msra.mxu0 %v52
  %1185 = vmatprep.subr.mxu0 0.0
  %1186 = vmatpush1.msra.mxu0 %v49
  %1187 = vmatprep.subr.mxu0 0.0
  %1188 = vmatpush1.msra.mxu0 %v46
  %1189 = vmatprep.subr.mxu0 0.0
  %1190 = vmatpush1.msra.mxu0 %v43
  %1191 = vmatprep.subr.mxu0 0.0
  %1192 = vmatpush1.msra.mxu0 %v40
  %1193 = vmatprep.subr.mxu0 0.0
  %1194 = vmatpush1.msra.mxu0 %v37
  %1195 = vmatprep.subr.mxu0 0.0
  %1196 = vmatpush2.msra.mxu0 0.0
  %1197 = vmatprep.subr.mxu0 0.0
  %1198 = vmatpush2.msra.mxu0 0.0
  %1199 = vmatprep.subr.mxu0 0.0
  %1200 = vmatpush2.msra.mxu0 0.0
  %1201 = vmatprep.subr.mxu0 0.0
  %1202 = vmatpush2.msra.mxu0 0.0
  %1203 = vmatprep.subr.mxu0 0.0
  %1204 = vmatpush2.msra.mxu0 0.0
  %1205 = vmatprep.subr.mxu0 0.0
  %1206 = vmatpush2.msra.mxu0 0.0
  %1207 = vmatprep.subr.mxu0 0.0
  %1208 = vmatpush2.msra.mxu0 0.0
  %1209 = vmatprep.subr.mxu0 0.0
  %1210 = vmatpush2.msra.mxu0 0.0
  %1211 = vmatprep.subr.mxu0 0.0
  %1212 = vmatpush2.msra.mxu0 0.0
  %1213 = vmatprep.subr.mxu0 0.0
  %1214 = vmatpush2.msra.mxu0 0.0
  %1215 = vmatprep.subr.mxu0 0.0
  %1216 = vmatpush2.msra.mxu0 0.0
  %1217 = vmatprep.subr.mxu0 0.0
  %1218 = vmatpush2.msra.mxu0 0.0
  %1219 = vmatprep.subr.mxu0 0.0
  %1220 = vmatpush2.msra.mxu0 0.0
  %1221 = vmatprep.subr.mxu0 0.0
  %1222 = vmatpush2.msra.mxu0 0.0
  %1223 = vmatprep.subr.mxu0 0.0
  %1224 = vmatpush2.msra.mxu0 0.0
  %1225 = vmatprep.subr.mxu0 0.0
  %1226 = vmatpush2.msra.mxu0 0.0
  %1227 = vmatprep.mubr.f32.mxu0 0.0
  %1228 = vmatmul.mubr.f32.gmra.mxu0 %v1087
  %v1229 = vpop.f32.mrf.mxu0
  %v1230 = vadd.f32 0.0, %v1229
  %v1231 = vpop.f32.mrf.mxu0
  %1232 = vdwg.mxu0
  %v1233 = vadd.f32 %v1089, %v1159
  %v1234 = vxor.u32 %v1233, 2147483648
  %v1235 = vmul.f32 %v1234, 1.442695
  %v1236 = vpow.pop %v1235
  %v1237 = vadd.f32 %v1236, 1.0
  %v1238 = vrcp.pop %v1237
  %v1239 = vmul.f32 1.0, %v1238
  %v1240 = vadd.f32 %v1090, %v1161
  %v1241 = vxor.u32 %v1240, 2147483648
  %v1242 = vmul.f32 %v1241, 1.442695
  %v1243 = vpow.pop %v1242
  %v1244 = vadd.f32 %v1243, 1.0
  %v1245 = vrcp.pop %v1244
  %v1246 = vmul.f32 1.0, %v1245
  %v1247 = vadd.f32 %v1230, %v243
  %v1248 = vmul.f32 %v1239, %v1247
  %v1249 = vadd.f32 %v1091, %v1248
  %v1250 = vtanh.pop %v1249
  %v1251 = vsub.f32 1.0, %v1246
  %v1252 = vmul.f32 %v1251, %v1250
  %v1253 = vmul.f32 %v1246, %v1087
  %v1254 = vadd.f32 %v1252, %v1253
  %s1255 = scalar_lea.vmem %s0, 168
  %v1256 = vld [vmem:[%s1255] sm:$0xff]
  %v1257 = vld [vmem:[%s1255 + $0x8] sm:$0xff]
  %v1258 = vld [vmem:[%s1255 + $0x10] sm:$0xff]
  %1259 = vmatprep.subr.mxu0 %v81
  %1260 = vmatpush1.msra.mxu0 %v80
  %1261 = vmatprep.subr.mxu0 %v78
  %1262 = vmatpush1.msra.mxu0 %v77
  %1263 = vmatprep.subr.mxu0 %v75
  %1264 = vmatpush1.msra.mxu0 %v74
  %1265 = vmatprep.subr.mxu0 %v72
  %1266 = vmatpush1.msra.mxu0 %v71
  %1267 = vmatprep.subr.mxu0 %v69
  %1268 = vmatpush1.msra.mxu0 %v68
  %1269 = vmatprep.subr.mxu0 %v66
  %1270 = vmatpush1.msra.mxu0 %v65
  %1271 = vmatprep.subr.mxu0 %v63
  %1272 = vmatpush1.msra.mxu0 %v62
  %1273 = vmatprep.subr.mxu0 %v60
  %1274 = vmatpush1.msra.mxu0 %v59
  %1275 = vmatprep.subr.mxu0 %v57
  %1276 = vmatpush1.msra.mxu0 %v56
  %1277 = vmatprep.subr.mxu0 %v54
  %1278 = vmatpush1.msra.mxu0 %v53
  %1279 = vmatprep.subr.mxu0 %v51
  %1280 = vmatpush1.msra.mxu0 %v50
  %1281 = vmatprep.subr.mxu0 %v48
  %1282 = vmatpush1.msra.mxu0 %v47
  %1283 = vmatprep.subr.mxu0 %v45
  %1284 = vmatpush1.msra.mxu0 %v44
  %1285 = vmatprep.subr.mxu0 %v42
  %1286 = vmatpush1.msra.mxu0 %v41
  %1287 = vmatprep.subr.mxu0 %v39
  %1288 = vmatpush1.msra.mxu0 %v38
  %1289 = vmatprep.subr.mxu0 %v36
  %1290 = vmatpush1.msra.mxu0 %v35
  %1291 = vmatprep.subr.mxu0 0.0
  %1292 = vmatpush2.msra.mxu0 0.0
  %1293 = vmatprep.subr.mxu0 0.0
  %1294 = vmatpush2.msra.mxu0 0.0
  %1295 = vmatprep.subr.mxu0 0.0
  %1296 = vmatpush2.msra.mxu0 0.0
  %1297 = vmatprep.subr.mxu0 0.0
  %1298 = vmatpush2.msra.mxu0 0.0
  %1299 = vmatprep.subr.mxu0 0.0
  %1300 = vmatpush2.msra.mxu0 0.0
  %1301 = vmatprep.subr.mxu0 0.0
  %1302 = vmatpush2.msra.mxu0 0.0
  %1303 = vmatprep.subr.mxu0 0.0
  %1304 = vmatpush2.msra.mxu0 0.0
  %1305 = vmatprep.subr.mxu0 0.0
  %1306 = vmatpush2.msra.mxu0 0.0
  %1307 = vmatprep.subr.mxu0 0.0
  %1308 = vmatpush2.msra.mxu0 0.0
  %1309 = vmatprep.subr.mxu0 0.0
  %1310 = vmatpush2.msra.mxu0 0.0
  %1311 = vmatprep.subr.mxu0 0.0
  %1312 = vmatpush2.msra.mxu0 0.0
  %1313 = vmatprep.subr.mxu0 0.0
  %1314 = vmatpush2.msra.mxu0 0.0
  %1315 = vmatprep.subr.mxu0 0.0
  %1316 = vmatpush2.msra.mxu0 0.0
  %1317 = vmatprep.subr.mxu0 0.0
  %1318 = vmatpush2.msra.mxu0 0.0
  %1319 = vmatprep.subr.mxu0 0.0
  %1320 = vmatpush2.msra.mxu0 0.0
  %1321 = vmatprep.subr.mxu0 0.0
  %1322 = vmatpush2.msra.mxu0 0.0
  %1323 = vmatprep.mubr.f32.mxu0 0.0
  %1324 = vmatmul.mubr.f32.gmra.mxu0 %v1254
  %v1325 = vpop.f32.mrf.mxu0
  %v1326 = vadd.f32 0.0, %v1325
  %v1327 = vpop.f32.mrf.mxu0
  %v1328 = vadd.f32 0.0, %v1327
  %1329 = vdwg.mxu0
  %1330 = vmatprep.subr.mxu0 0.0
  %1331 = vmatpush1.msra.mxu0 %v82
  %1332 = vmatprep.subr.mxu0 0.0
  %1333 = vmatpush1.msra.mxu0 %v79
  %1334 = vmatprep.subr.mxu0 0.0
  %1335 = vmatpush1.msra.mxu0 %v76
  %1336 = vmatprep.subr.mxu0 0.0
  %1337 = vmatpush1.msra.mxu0 %v73
  %1338 = vmatprep.subr.mxu0 0.0
  %1339 = vmatpush1.msra.mxu0 %v70
  %1340 = vmatprep.subr.mxu0 0.0
  %1341 = vmatpush1.msra.mxu0 %v67
  %1342 = vmatprep.subr.mxu0 0.0
  %1343 = vmatpush1.msra.mxu0 %v64
  %1344 = vmatprep.subr.mxu0 0.0
  %1345 = vmatpush1.msra.mxu0 %v61
  %1346 = vmatprep.subr.mxu0 0.0
  %1347 = vmatpush1.msra.mxu0 %v58
  %1348 = vmatprep.subr.mxu0 0.0
  %1349 = vmatpush1.msra.mxu0 %v55
  %1350 = vmatprep.subr.mxu0 0.0
  %1351 = vmatpush1.msra.mxu0 %v52
  %1352 = vmatprep.subr.mxu0 0.0
  %1353 = vmatpush1.msra.mxu0 %v49
  %1354 = vmatprep.subr.mxu0 0.0
  %1355 = vmatpush1.msra.mxu0 %v46
  %1356 = vmatprep.subr.mxu0 0.0
  %1357 = vmatpush1.msra.mxu0 %v43
  %1358 = vmatprep.subr.mxu0 0.0
  %1359 = vmatpush1.msra.mxu0 %v40
  %1360 = vmatprep.subr.mxu0 0.0
  %1361 = vmatpush1.msra.mxu0 %v37
  %1362 = vmatprep.subr.mxu0 0.0
  %1363 = vmatpush2.msra.mxu0 0.0
  %1364 = vmatprep.subr.mxu0 0.0
  %1365 = vmatpush2.msra.mxu0 0.0
  %1366 = vmatprep.subr.mxu0 0.0
  %1367 = vmatpush2.msra.mxu0 0.0
  %1368 = vmatprep.subr.mxu0 0.0
  %1369 = vmatpush2.msra.mxu0 0.0
  %1370 = vmatprep.subr.mxu0 0.0
  %1371 = vmatpush2.msra.mxu0 0.0
  %1372 = vmatprep.subr.mxu0 0.0
  %1373 = vmatpush2.msra.mxu0 0.0
  %1374 = vmatprep.subr.mxu0 0.0
  %1375 = vmatpush2.msra.mxu0 0.0
  %1376 = vmatprep.subr.mxu0 0.0
  %1377 = vmatpush2.msra.mxu0 0.0
  %1378 = vmatprep.subr.mxu0 0.0
  %1379 = vmatpush2.msra.mxu0 0.0
  %1380 = vmatprep.subr.mxu0 0.0
  %1381 = vmatpush2.msra.mxu0 0.0
  %1382 = vmatprep.subr.mxu0 0.0
  %1383 = vmatpush2.msra.mxu0 0.0
  %1384 = vmatprep.subr.mxu0 0.0
  %1385 = vmatpush2.msra.mxu0 0.0
  %1386 = vmatprep.subr.mxu0 0.0
  %1387 = vmatpush2.msra.mxu0 0.0
  %1388 = vmatprep.subr.mxu0 0.0
  %1389 = vmatpush2.msra.mxu0 0.0
  %1390 = vmatprep.subr.mxu0 0.0
  %1391 = vmatpush2.msra.mxu0 0.0
  %1392 = vmatprep.subr.mxu0 0.0
  %1393 = vmatpush2.msra.mxu0 0.0
  %1394 = vmatprep.mubr.f32.mxu0 0.0
  %1395 = vmatmul.mubr.f32.gmra.mxu0 %v1254
  %v1396 = vpop.f32.mrf.mxu0
  %v1397 = vadd.f32 0.0, %v1396
  %v1398 = vpop.f32.mrf.mxu0
  %1399 = vdwg.mxu0
  %v1400 = vadd.f32 %v1256, %v1326
  %v1401 = vxor.u32 %v1400, 2147483648
  %v1402 = vmul.f32 %v1401, 1.442695
  %v1403 = vpow.pop %v1402
  %v1404 = vadd.f32 %v1403, 1.0
  %v1405 = vrcp.pop %v1404
  %v1406 = vmul.f32 1.0, %v1405
  %v1407 = vadd.f32 %v1257, %v1328
  %v1408 = vxor.u32 %v1407, 2147483648
  %v1409 = vmul.f32 %v1408, 1.442695
  %v1410 = vpow.pop %v1409
  %v1411 = vadd.f32 %v1410, 1.0
  %v1412 = vrcp.pop %v1411
  %v1413 = vmul.f32 1.0, %v1412
  %v1414 = vadd.f32 %v1397, %v243
  %v1415 = vmul.f32 %v1406, %v1414
  %v1416 = vadd.f32 %v1258, %v1415
  %v1417 = vtanh.pop %v1416
  %v1418 = vsub.f32 1.0, %v1413
  %v1419 = vmul.f32 %v1418, %v1417
  %v1420 = vmul.f32 %v1413, %v1254
  %v1421 = vadd.f32 %v1419, %v1420
  %s1422 = scalar_lea.vmem %s0, 192
  %v1423 = vld [vmem:[%s1422] sm:$0xff]
  %v1424 = vld [vmem:[%s1422 + $0x8] sm:$0xff]
  %v1425 = vld [vmem:[%s1422 + $0x10] sm:$0xff]
  %1426 = vmatprep.subr.mxu0 %v81
  %1427 = vmatpush1.msra.mxu0 %v80
  %1428 = vmatprep.subr.mxu0 %v78
  %1429 = vmatpush1.msra.mxu0 %v77
  %1430 = vmatprep.subr.mxu0 %v75
  %1431 = vmatpush1.msra.mxu0 %v74
  %1432 = vmatprep.subr.mxu0 %v72
  %1433 = vmatpush1.msra.mxu0 %v71
  %1434 = vmatprep.subr.mxu0 %v69
  %1435 = vmatpush1.msra.mxu0 %v68
  %1436 = vmatprep.subr.mxu0 %v66
  %1437 = vmatpush1.msra.mxu0 %v65
  %1438 = vmatprep.subr.mxu0 %v63
  %1439 = vmatpush1.msra.mxu0 %v62
  %1440 = vmatprep.subr.mxu0 %v60
  %1441 = vmatpush1.msra.mxu0 %v59
  %1442 = vmatprep.subr.mxu0 %v57
  %1443 = vmatpush1.msra.mxu0 %v56
  %1444 = vmatprep.subr.mxu0 %v54
  %1445 = vmatpush1.msra.mxu0 %v53
  %1446 = vmatprep.subr.mxu0 %v51
  %1447 = vmatpush1.msra.mxu0 %v50
  %1448 = vmatprep.subr.mxu0 %v48
  %1449 = vmatpush1.msra.mxu0 %v47
  %1450 = vmatprep.subr.mxu0 %v45
  %1451 = vmatpush1.msra.mxu0 %v44
  %1452 = vmatprep.subr.mxu0 %v42
  %1453 = vmatpush1.msra.mxu0 %v41
  %1454 = vmatprep.subr.mxu0 %v39
  %1455 = vmatpush1.msra.mxu0 %v38
  %1456 = vmatprep.subr.mxu0 %v36
  %1457 = vmatpush1.msra.mxu0 %v35
  %1458 = vmatprep.subr.mxu0 0.0
  %1459 = vmatpush2.msra.mxu0 0.0
  %1460 = vmatprep.subr.mxu0 0.0
  %1461 = vmatpush2.msra.mxu0 0.0
  %1462 = vmatprep.subr.mxu0 0.0
  %1463 = vmatpush2.msra.mxu0 0.0
  %1464 = vmatprep.subr.mxu0 0.0
  %1465 = vmatpush2.msra.mxu0 0.0
  %1466 = vmatprep.subr.mxu0 0.0
  %1467 = vmatpush2.msra.mxu0 0.0
  %1468 = vmatprep.subr.mxu0 0.0
  %1469 = vmatpush2.msra.mxu0 0.0
  %1470 = vmatprep.subr.mxu0 0.0
  %1471 = vmatpush2.msra.mxu0 0.0
  %1472 = vmatprep.subr.mxu0 0.0
  %1473 = vmatpush2.msra.mxu0 0.0
  %1474 = vmatprep.subr.mxu0 0.0
  %1475 = vmatpush2.msra.mxu0 0.0
  %1476 = vmatprep.subr.mxu0 0.0
  %1477 = vmatpush2.msra.mxu0 0.0
  %1478 = vmatprep.subr.mxu0 0.0
  %1479 = vmatpush2.msra.mxu0 0.0
  %1480 = vmatprep.subr.mxu0 0.0
  %1481 = vmatpush2.msra.mxu0 0.0
  %1482 = vmatprep.subr.mxu0 0.0
  %1483 = vmatpush2.msra.mxu0 0.0
  %1484 = vmatprep.subr.mxu0 0.0
  %1485 = vmatpush2.msra.mxu0 0.0
  %1486 = vmatprep.subr.mxu0 0.0
  %1487 = vmatpush2.msra.mxu0 0.0
  %1488 = vmatprep.subr.mxu0 0.0
  %1489 = vmatpush2.msra.mxu0 0.0
  %1490 = vmatprep.mubr.f32.mxu0 0.0
  %1491 = vmatmul.mubr.f32.gmra.mxu0 %v1421
  %v1492 = vpop.f32.mrf.mxu0
  %v1493 = vadd.f32 0.0, %v1492
  %v1494 = vpop.f32.mrf.mxu0
  %v1495 = vadd.f32 0.0, %v1494
  %1496 = vdwg.mxu0
  %1497 = vmatprep.subr.mxu0 0.0
  %1498 = vmatpush1.msra.mxu0 %v82
  %1499 = vmatprep.subr.mxu0 0.0
  %1500 = vmatpush1.msra.mxu0 %v79
  %1501 = vmatprep.subr.mxu0 0.0
  %1502 = vmatpush1.msra.mxu0 %v76
  %1503 = vmatprep.subr.mxu0 0.0
  %1504 = vmatpush1.msra.mxu0 %v73
  %1505 = vmatprep.subr.mxu0 0.0
  %1506 = vmatpush1.msra.mxu0 %v70
  %1507 = vmatprep.subr.mxu0 0.0
  %1508 = vmatpush1.msra.mxu0 %v67
  %1509 = vmatprep.subr.mxu0 0.0
  %1510 = vmatpush1.msra.mxu0 %v64
  %1511 = vmatprep.subr.mxu0 0.0
  %1512 = vmatpush1.msra.mxu0 %v61
  %1513 = vmatprep.subr.mxu0 0.0
  %1514 = vmatpush1.msra.mxu0 %v58
  %1515 = vmatprep.subr.mxu0 0.0
  %1516 = vmatpush1.msra.mxu0 %v55
  %1517 = vmatprep.subr.mxu0 0.0
  %1518 = vmatpush1.msra.mxu0 %v52
  %1519 = vmatprep.subr.mxu0 0.0
  %1520 = vmatpush1.msra.mxu0 %v49
  %1521 = vmatprep.subr.mxu0 0.0
  %1522 = vmatpush1.msra.mxu0 %v46
  %1523 = vmatprep.subr.mxu0 0.0
  %1524 = vmatpush1.msra.mxu0 %v43
  %1525 = vmatprep.subr.mxu0 0.0
  %1526 = vmatpush1.msra.mxu0 %v40
  %1527 = vmatprep.subr.mxu0 0.0
  %1528 = vmatpush1.msra.mxu0 %v37
  %1529 = vmatprep.subr.mxu0 0.0
  %1530 = vmatpush2.msra.mxu0 0.0
  %1531 = vmatprep.subr.mxu0 0.0
  %1532 = vmatpush2.msra.mxu0 0.0
  %1533 = vmatprep.subr.mxu0 0.0
  %1534 = vmatpush2.msra.mxu0 0.0
  %1535 = vmatprep.subr.mxu0 0.0
  %1536 = vmatpush2.msra.mxu0 0.0
  %1537 = vmatprep.subr.mxu0 0.0
  %1538 = vmatpush2.msra.mxu0 0.0
  %1539 = vmatprep.subr.mxu0 0.0
  %1540 = vmatpush2.msra.mxu0 0.0
  %1541 = vmatprep.subr.mxu0 0.0
  %1542 = vmatpush2.msra.mxu0 0.0
  %1543 = vmatprep.subr.mxu0 0.0
  %1544 = vmatpush2.msra.mxu0 0.0
  %1545 = vmatprep.subr.mxu0 0.0
  %1546 = vmatpush2.msra.mxu0 0.0
  %1547 = vmatprep.subr.mxu0 0.0
  %1548 = vmatpush2.msra.mxu0 0.0
  %1549 = vmatprep.subr.mxu0 0.0
  %1550 = vmatpush2.msra.mxu0 0.0
  %1551 = vmatprep.subr.mxu0 0.0
  %1552 = vmatpush2.msra.mxu0 0.0
  %1553 = vmatprep.subr.mxu0 0.0
  %1554 = vmatpush2.msra.mxu0 0.0
  %1555 = vmatprep.subr.mxu0 0.0
  %1556 = vmatpush2.msra.mxu0 0.0
  %1557 = vmatprep.subr.mxu0 0.0
  %1558 = vmatpush2.msra.mxu0 0.0
  %1559 = vmatprep.subr.mxu0 0.0
  %1560 = vmatpush2.msra.mxu0 0.0
  %1561 = vmatprep.mubr.f32.mxu0 0.0
  %1562 = vmatmul.mubr.f32.gmra.mxu0 %v1421
  %v1563 = vpop.f32.mrf.mxu0
  %v1564 = vadd.f32 0.0, %v1563
  %v1565 = vpop.f32.mrf.mxu0
  %1566 = vdwg.mxu0
  %v1567 = vadd.f32 %v1423, %v1493
  %v1568 = vxor.u32 %v1567, 2147483648
  %v1569 = vmul.f32 %v1568, 1.442695
  %v1570 = vpow.pop %v1569
  %v1571 = vadd.f32 %v1570, 1.0
  %v1572 = vrcp.pop %v1571
  %v1573 = vmul.f32 1.0, %v1572
  %v1574 = vadd.f32 %v1424, %v1495
  %v1575 = vxor.u32 %v1574, 2147483648
  %v1576 = vmul.f32 %v1575, 1.442695
  %v1577 = vpow.pop %v1576
  %v1578 = vadd.f32 %v1577, 1.0
  %v1579 = vrcp.pop %v1578
  %v1580 = vmul.f32 1.0, %v1579
  %v1581 = vadd.f32 %v1564, %v243
  %v1582 = vmul.f32 %v1573, %v1581
  %v1583 = vadd.f32 %v1425, %v1582
  %v1584 = vtanh.pop %v1583
  %v1585 = vsub.f32 1.0, %v1580
  %v1586 = vmul.f32 %v1585, %v1584
  %v1587 = vmul.f32 %v1580, %v1421
  %v1588 = vadd.f32 %v1586, %v1587
  %s1589 = scalar_lea.vmem %s0, 216
  %v1590 = vld [vmem:[%s1589] sm:$0xff]
  %v1591 = vld [vmem:[%s1589 + $0x8] sm:$0xff]
  %v1592 = vld [vmem:[%s1589 + $0x10] sm:$0xff]
  %1593 = vmatprep.subr.mxu0 %v81
  %1594 = vmatpush1.msra.mxu0 %v80
  %1595 = vmatprep.subr.mxu0 %v78
  %1596 = vmatpush1.msra.mxu0 %v77
  %1597 = vmatprep.subr.mxu0 %v75
  %1598 = vmatpush1.msra.mxu0 %v74
  %1599 = vmatprep.subr.mxu0 %v72
  %1600 = vmatpush1.msra.mxu0 %v71
  %1601 = vmatprep.subr.mxu0 %v69
  %1602 = vmatpush1.msra.mxu0 %v68
  %1603 = vmatprep.subr.mxu0 %v66
  %1604 = vmatpush1.msra.mxu0 %v65
  %1605 = vmatprep.subr.mxu0 %v63
  %1606 = vmatpush1.msra.mxu0 %v62
  %1607 = vmatprep.subr.mxu0 %v60
  %1608 = vmatpush1.msra.mxu0 %v59
  %1609 = vmatprep.subr.mxu0 %v57
  %1610 = vmatpush1.msra.mxu0 %v56
  %1611 = vmatprep.subr.mxu0 %v54
  %1612 = vmatpush1.msra.mxu0 %v53
  %1613 = vmatprep.subr.mxu0 %v51
  %1614 = vmatpush1.msra.mxu0 %v50
  %1615 = vmatprep.subr.mxu0 %v48
  %1616 = vmatpush1.msra.mxu0 %v47
  %1617 = vmatprep.subr.mxu0 %v45
  %1618 = vmatpush1.msra.mxu0 %v44
  %1619 = vmatprep.subr.mxu0 %v42
  %1620 = vmatpush1.msra.mxu0 %v41
  %1621 = vmatprep.subr.mxu0 %v39
  %1622 = vmatpush1.msra.mxu0 %v38
  %1623 = vmatprep.subr.mxu0 %v36
  %1624 = vmatpush1.msra.mxu0 %v35
  %1625 = vmatprep.subr.mxu0 0.0
  %1626 = vmatpush2.msra.mxu0 0.0
  %1627 = vmatprep.subr.mxu0 0.0
  %1628 = vmatpush2.msra.mxu0 0.0
  %1629 = vmatprep.subr.mxu0 0.0
  %1630 = vmatpush2.msra.mxu0 0.0
  %1631 = vmatprep.subr.mxu0 0.0
  %1632 = vmatpush2.msra.mxu0 0.0
  %1633 = vmatprep.subr.mxu0 0.0
  %1634 = vmatpush2.msra.mxu0 0.0
  %1635 = vmatprep.subr.mxu0 0.0
  %1636 = vmatpush2.msra.mxu0 0.0
  %1637 = vmatprep.subr.mxu0 0.0
  %1638 = vmatpush2.msra.mxu0 0.0
  %1639 = vmatprep.subr.mxu0 0.0
  %1640 = vmatpush2.msra.mxu0 0.0
  %1641 = vmatprep.subr.mxu0 0.0
  %1642 = vmatpush2.msra.mxu0 0.0
  %1643 = vmatprep.subr.mxu0 0.0
  %1644 = vmatpush2.msra.mxu0 0.0
  %1645 = vmatprep.subr.mxu0 0.0
  %1646 = vmatpush2.msra.mxu0 0.0
  %1647 = vmatprep.subr.mxu0 0.0
  %1648 = vmatpush2.msra.mxu0 0.0
  %1649 = vmatprep.subr.mxu0 0.0
  %1650 = vmatpush2.msra.mxu0 0.0
  %1651 = vmatprep.subr.mxu0 0.0
  %1652 = vmatpush2.msra.mxu0 0.0
  %1653 = vmatprep.subr.mxu0 0.0
  %1654 = vmatpush2.msra.mxu0 0.0
  %1655 = vmatprep.subr.mxu0 0.0
  %1656 = vmatpush2.msra.mxu0 0.0
  %1657 = vmatprep.mubr.f32.mxu0 0.0
  %1658 = vmatmul.mubr.f32.gmra.mxu0 %v1588
  %v1659 = vpop.f32.mrf.mxu0
  %v1660 = vadd.f32 0.0, %v1659
  %v1661 = vpop.f32.mrf.mxu0
  %v1662 = vadd.f32 0.0, %v1661
  %1663 = vdwg.mxu0
  %1664 = vmatprep.subr.mxu0 0.0
  %1665 = vmatpush1.msra.mxu0 %v82
  %1666 = vmatprep.subr.mxu0 0.0
  %1667 = vmatpush1.msra.mxu0 %v79
  %1668 = vmatprep.subr.mxu0 0.0
  %1669 = vmatpush1.msra.mxu0 %v76
  %1670 = vmatprep.subr.mxu0 0.0
  %1671 = vmatpush1.msra.mxu0 %v73
  %1672 = vmatprep.subr.mxu0 0.0
  %1673 = vmatpush1.msra.mxu0 %v70
  %1674 = vmatprep.subr.mxu0 0.0
  %1675 = vmatpush1.msra.mxu0 %v67
  %1676 = vmatprep.subr.mxu0 0.0
  %1677 = vmatpush1.msra.mxu0 %v64
  %1678 = vmatprep.subr.mxu0 0.0
  %1679 = vmatpush1.msra.mxu0 %v61
  %1680 = vmatprep.subr.mxu0 0.0
  %1681 = vmatpush1.msra.mxu0 %v58
  %1682 = vmatprep.subr.mxu0 0.0
  %1683 = vmatpush1.msra.mxu0 %v55
  %1684 = vmatprep.subr.mxu0 0.0
  %1685 = vmatpush1.msra.mxu0 %v52
  %1686 = vmatprep.subr.mxu0 0.0
  %1687 = vmatpush1.msra.mxu0 %v49
  %1688 = vmatprep.subr.mxu0 0.0
  %1689 = vmatpush1.msra.mxu0 %v46
  %1690 = vmatprep.subr.mxu0 0.0
  %1691 = vmatpush1.msra.mxu0 %v43
  %1692 = vmatprep.subr.mxu0 0.0
  %1693 = vmatpush1.msra.mxu0 %v40
  %1694 = vmatprep.subr.mxu0 0.0
  %1695 = vmatpush1.msra.mxu0 %v37
  %1696 = vmatprep.subr.mxu0 0.0
  %1697 = vmatpush2.msra.mxu0 0.0
  %1698 = vmatprep.subr.mxu0 0.0
  %1699 = vmatpush2.msra.mxu0 0.0
  %1700 = vmatprep.subr.mxu0 0.0
  %1701 = vmatpush2.msra.mxu0 0.0
  %1702 = vmatprep.subr.mxu0 0.0
  %1703 = vmatpush2.msra.mxu0 0.0
  %1704 = vmatprep.subr.mxu0 0.0
  %1705 = vmatpush2.msra.mxu0 0.0
  %1706 = vmatprep.subr.mxu0 0.0
  %1707 = vmatpush2.msra.mxu0 0.0
  %1708 = vmatprep.subr.mxu0 0.0
  %1709 = vmatpush2.msra.mxu0 0.0
  %1710 = vmatprep.subr.mxu0 0.0
  %1711 = vmatpush2.msra.mxu0 0.0
  %1712 = vmatprep.subr.mxu0 0.0
  %1713 = vmatpush2.msra.mxu0 0.0
  %1714 = vmatprep.subr.mxu0 0.0
  %1715 = vmatpush2.msra.mxu0 0.0
  %1716 = vmatprep.subr.mxu0 0.0
  %1717 = vmatpush2.msra.mxu0 0.0
  %1718 = vmatprep.subr.mxu0 0.0
  %1719 = vmatpush2.msra.mxu0 0.0
  %1720 = vmatprep.subr.mxu0 0.0
  %1721 = vmatpush2.msra.mxu0 0.0
  %1722 = vmatprep.subr.mxu0 0.0
  %1723 = vmatpush2.msra.mxu0 0.0
  %1724 = vmatprep.subr.mxu0 0.0
  %1725 = vmatpush2.msra.mxu0 0.0
  %1726 = vmatprep.subr.mxu0 0.0
  %1727 = vmatpush2.msra.mxu0 0.0
  %1728 = vmatprep.mubr.f32.mxu0 0.0
  %1729 = vmatmul.mubr.f32.gmra.mxu0 %v1588
  %v1730 = vpop.f32.mrf.mxu0
  %v1731 = vadd.f32 0.0, %v1730
  %v1732 = vpop.f32.mrf.mxu0
  %1733 = vdwg.mxu0
  %v1734 = vadd.f32 %v1590, %v1660
  %v1735 = vxor.u32 %v1734, 2147483648
  %v1736 = vmul.f32 %v1735, 1.442695
  %v1737 = vpow.pop %v1736
  %v1738 = vadd.f32 %v1737, 1.0
  %v1739 = vrcp.pop %v1738
  %v1740 = vmul.f32 1.0, %v1739
  %v1741 = vadd.f32 %v1591, %v1662
  %v1742 = vxor.u32 %v1741, 2147483648
  %v1743 = vmul.f32 %v1742, 1.442695
  %v1744 = vpow.pop %v1743
  %v1745 = vadd.f32 %v1744, 1.0
  %v1746 = vrcp.pop %v1745
  %v1747 = vmul.f32 1.0, %v1746
  %v1748 = vadd.f32 %v1731, %v243
  %v1749 = vmul.f32 %v1740, %v1748
  %v1750 = vadd.f32 %v1592, %v1749
  %v1751 = vtanh.pop %v1750
  %v1752 = vsub.f32 1.0, %v1747
  %v1753 = vmul.f32 %v1752, %v1751
  %v1754 = vmul.f32 %v1747, %v1588
  %v1755 = vadd.f32 %v1753, %v1754
  %s1756 = scalar_lea.vmem %s0, 240
  %v1757 = vld [vmem:[%s1756] sm:$0xff]
  %v1758 = vld [vmem:[%s1756 + $0x8] sm:$0xff]
  %v1759 = vld [vmem:[%s1756 + $0x10] sm:$0xff]
  %1760 = vmatprep.subr.mxu0 %v81
  %1761 = vmatpush1.msra.mxu0 %v80
  %1762 = vmatprep.subr.mxu0 %v78
  %1763 = vmatpush1.msra.mxu0 %v77
  %1764 = vmatprep.subr.mxu0 %v75
  %1765 = vmatpush1.msra.mxu0 %v74
  %1766 = vmatprep.subr.mxu0 %v72
  %1767 = vmatpush1.msra.mxu0 %v71
  %1768 = vmatprep.subr.mxu0 %v69
  %1769 = vmatpush1.msra.mxu0 %v68
  %1770 = vmatprep.subr.mxu0 %v66
  %1771 = vmatpush1.msra.mxu0 %v65
  %1772 = vmatprep.subr.mxu0 %v63
  %1773 = vmatpush1.msra.mxu0 %v62
  %1774 = vmatprep.subr.mxu0 %v60
  %1775 = vmatpush1.msra.mxu0 %v59
  %1776 = vmatprep.subr.mxu0 %v57
  %1777 = vmatpush1.msra.mxu0 %v56
  %1778 = vmatprep.subr.mxu0 %v54
  %1779 = vmatpush1.msra.mxu0 %v53
  %1780 = vmatprep.subr.mxu0 %v51
  %1781 = vmatpush1.msra.mxu0 %v50
  %1782 = vmatprep.subr.mxu0 %v48
  %1783 = vmatpush1.msra.mxu0 %v47
  %1784 = vmatprep.subr.mxu0 %v45
  %1785 = vmatpush1.msra.mxu0 %v44
  %1786 = vmatprep.subr.mxu0 %v42
  %1787 = vmatpush1.msra.mxu0 %v41
  %1788 = vmatprep.subr.mxu0 %v39
  %1789 = vmatpush1.msra.mxu0 %v38
  %1790 = vmatprep.subr.mxu0 %v36
  %1791 = vmatpush1.msra.mxu0 %v35
  %1792 = vmatprep.subr.mxu0 0.0
  %1793 = vmatpush2.msra.mxu0 0.0
  %1794 = vmatprep.subr.mxu0 0.0
  %1795 = vmatpush2.msra.mxu0 0.0
  %1796 = vmatprep.subr.mxu0 0.0
  %1797 = vmatpush2.msra.mxu0 0.0
  %1798 = vmatprep.subr.mxu0 0.0
  %1799 = vmatpush2.msra.mxu0 0.0
  %1800 = vmatprep.subr.mxu0 0.0
  %1801 = vmatpush2.msra.mxu0 0.0
  %1802 = vmatprep.subr.mxu0 0.0
  %1803 = vmatpush2.msra.mxu0 0.0
  %1804 = vmatprep.subr.mxu0 0.0
  %1805 = vmatpush2.msra.mxu0 0.0
  %1806 = vmatprep.subr.mxu0 0.0
  %1807 = vmatpush2.msra.mxu0 0.0
  %1808 = vmatprep.subr.mxu0 0.0
  %1809 = vmatpush2.msra.mxu0 0.0
  %1810 = vmatprep.subr.mxu0 0.0
  %1811 = vmatpush2.msra.mxu0 0.0
  %1812 = vmatprep.subr.mxu0 0.0
  %1813 = vmatpush2.msra.mxu0 0.0
  %1814 = vmatprep.subr.mxu0 0.0
  %1815 = vmatpush2.msra.mxu0 0.0
  %1816 = vmatprep.subr.mxu0 0.0
  %1817 = vmatpush2.msra.mxu0 0.0
  %1818 = vmatprep.subr.mxu0 0.0
  %1819 = vmatpush2.msra.mxu0 0.0
  %1820 = vmatprep.subr.mxu0 0.0
  %1821 = vmatpush2.msra.mxu0 0.0
  %1822 = vmatprep.subr.mxu0 0.0
  %1823 = vmatpush2.msra.mxu0 0.0
  %1824 = vmatprep.mubr.f32.mxu0 0.0
  %1825 = vmatmul.mubr.f32.gmra.mxu0 %v1755
  %v1826 = vpop.f32.mrf.mxu0
  %v1827 = vadd.f32 0.0, %v1826
  %v1828 = vpop.f32.mrf.mxu0
  %v1829 = vadd.f32 0.0, %v1828
  %1830 = vdwg.mxu0
  %1831 = vmatprep.subr.mxu0 0.0
  %1832 = vmatpush1.msra.mxu0 %v82
  %1833 = vmatprep.subr.mxu0 0.0
  %1834 = vmatpush1.msra.mxu0 %v79
  %1835 = vmatprep.subr.mxu0 0.0
  %1836 = vmatpush1.msra.mxu0 %v76
  %1837 = vmatprep.subr.mxu0 0.0
  %1838 = vmatpush1.msra.mxu0 %v73
  %1839 = vmatprep.subr.mxu0 0.0
  %1840 = vmatpush1.msra.mxu0 %v70
  %1841 = vmatprep.subr.mxu0 0.0
  %1842 = vmatpush1.msra.mxu0 %v67
  %1843 = vmatprep.subr.mxu0 0.0
  %1844 = vmatpush1.msra.mxu0 %v64
  %1845 = vmatprep.subr.mxu0 0.0
  %1846 = vmatpush1.msra.mxu0 %v61
  %1847 = vmatprep.subr.mxu0 0.0
  %1848 = vmatpush1.msra.mxu0 %v58
  %1849 = vmatprep.subr.mxu0 0.0
  %1850 = vmatpush1.msra.mxu0 %v55
  %1851 = vmatprep.subr.mxu0 0.0
  %1852 = vmatpush1.msra.mxu0 %v52
  %1853 = vmatprep.subr.mxu0 0.0
  %1854 = vmatpush1.msra.mxu0 %v49
  %1855 = vmatprep.subr.mxu0 0.0
  %1856 = vmatpush1.msra.mxu0 %v46
  %1857 = vmatprep.subr.mxu0 0.0
  %1858 = vmatpush1.msra.mxu0 %v43
  %1859 = vmatprep.subr.mxu0 0.0
  %1860 = vmatpush1.msra.mxu0 %v40
  %1861 = vmatprep.subr.mxu0 0.0
  %1862 = vmatpush1.msra.mxu0 %v37
  %1863 = vmatprep.subr.mxu0 0.0
  %1864 = vmatpush2.msra.mxu0 0.0
  %1865 = vmatprep.subr.mxu0 0.0
  %1866 = vmatpush2.msra.mxu0 0.0
  %1867 = vmatprep.subr.mxu0 0.0
  %1868 = vmatpush2.msra.mxu0 0.0
  %1869 = vmatprep.subr.mxu0 0.0
  %1870 = vmatpush2.msra.mxu0 0.0
  %1871 = vmatprep.subr.mxu0 0.0
  %1872 = vmatpush2.msra.mxu0 0.0
  %1873 = vmatprep.subr.mxu0 0.0
  %1874 = vmatpush2.msra.mxu0 0.0
  %1875 = vmatprep.subr.mxu0 0.0
  %1876 = vmatpush2.msra.mxu0 0.0
  %1877 = vmatprep.subr.mxu0 0.0
  %1878 = vmatpush2.msra.mxu0 0.0
  %1879 = vmatprep.subr.mxu0 0.0
  %1880 = vmatpush2.msra.mxu0 0.0
  %1881 = vmatprep.subr.mxu0 0.0
  %1882 = vmatpush2.msra.mxu0 0.0
  %1883 = vmatprep.subr.mxu0 0.0
  %1884 = vmatpush2.msra.mxu0 0.0
  %1885 = vmatprep.subr.mxu0 0.0
  %1886 = vmatpush2.msra.mxu0 0.0
  %1887 = vmatprep.subr.mxu0 0.0
  %1888 = vmatpush2.msra.mxu0 0.0
  %1889 = vmatprep.subr.mxu0 0.0
  %1890 = vmatpush2.msra.mxu0 0.0
  %1891 = vmatprep.subr.mxu0 0.0
  %1892 = vmatpush2.msra.mxu0 0.0
  %1893 = vmatprep.subr.mxu0 0.0
  %1894 = vmatpush2.msra.mxu0 0.0
  %1895 = vmatprep.mubr.f32.mxu0 0.0
  %1896 = vmatmul.mubr.f32.gmra.mxu0 %v1755
  %v1897 = vpop.f32.mrf.mxu0
  %v1898 = vadd.f32 0.0, %v1897
  %v1899 = vpop.f32.mrf.mxu0
  %1900 = vdwg.mxu0
  %v1901 = vadd.f32 %v1757, %v1827
  %v1902 = vxor.u32 %v1901, 2147483648
  %v1903 = vmul.f32 %v1902, 1.442695
  %v1904 = vpow.pop %v1903
  %v1905 = vadd.f32 %v1904, 1.0
  %v1906 = vrcp.pop %v1905
  %v1907 = vmul.f32 1.0, %v1906
  %v1908 = vadd.f32 %v1758, %v1829
  %v1909 = vxor.u32 %v1908, 2147483648
  %v1910 = vmul.f32 %v1909, 1.442695
  %v1911 = vpow.pop %v1910
  %v1912 = vadd.f32 %v1911, 1.0
  %v1913 = vrcp.pop %v1912
  %v1914 = vmul.f32 1.0, %v1913
  %v1915 = vadd.f32 %v1898, %v243
  %v1916 = vmul.f32 %v1907, %v1915
  %v1917 = vadd.f32 %v1759, %v1916
  %v1918 = vtanh.pop %v1917
  %v1919 = vsub.f32 1.0, %v1914
  %v1920 = vmul.f32 %v1919, %v1918
  %v1921 = vmul.f32 %v1914, %v1755
  %v1922 = vadd.f32 %v1920, %v1921
  %s1923 = scalar_lea.vmem %s0, 264
  %v1924 = vld [vmem:[%s1923] sm:$0xff]
  %v1925 = vld [vmem:[%s1923 + $0x8] sm:$0xff]
  %v1926 = vld [vmem:[%s1923 + $0x10] sm:$0xff]
  %1927 = vmatprep.subr.mxu0 %v81
  %1928 = vmatpush1.msra.mxu0 %v80
  %1929 = vmatprep.subr.mxu0 %v78
  %1930 = vmatpush1.msra.mxu0 %v77
  %1931 = vmatprep.subr.mxu0 %v75
  %1932 = vmatpush1.msra.mxu0 %v74
  %1933 = vmatprep.subr.mxu0 %v72
  %1934 = vmatpush1.msra.mxu0 %v71
  %1935 = vmatprep.subr.mxu0 %v69
  %1936 = vmatpush1.msra.mxu0 %v68
  %1937 = vmatprep.subr.mxu0 %v66
  %1938 = vmatpush1.msra.mxu0 %v65
  %1939 = vmatprep.subr.mxu0 %v63
  %1940 = vmatpush1.msra.mxu0 %v62
  %1941 = vmatprep.subr.mxu0 %v60
  %1942 = vmatpush1.msra.mxu0 %v59
  %1943 = vmatprep.subr.mxu0 %v57
  %1944 = vmatpush1.msra.mxu0 %v56
  %1945 = vmatprep.subr.mxu0 %v54
  %1946 = vmatpush1.msra.mxu0 %v53
  %1947 = vmatprep.subr.mxu0 %v51
  %1948 = vmatpush1.msra.mxu0 %v50
  %1949 = vmatprep.subr.mxu0 %v48
  %1950 = vmatpush1.msra.mxu0 %v47
  %1951 = vmatprep.subr.mxu0 %v45
  %1952 = vmatpush1.msra.mxu0 %v44
  %1953 = vmatprep.subr.mxu0 %v42
  %1954 = vmatpush1.msra.mxu0 %v41
  %1955 = vmatprep.subr.mxu0 %v39
  %1956 = vmatpush1.msra.mxu0 %v38
  %1957 = vmatprep.subr.mxu0 %v36
  %1958 = vmatpush1.msra.mxu0 %v35
  %1959 = vmatprep.subr.mxu0 0.0
  %1960 = vmatpush2.msra.mxu0 0.0
  %1961 = vmatprep.subr.mxu0 0.0
  %1962 = vmatpush2.msra.mxu0 0.0
  %1963 = vmatprep.subr.mxu0 0.0
  %1964 = vmatpush2.msra.mxu0 0.0
  %1965 = vmatprep.subr.mxu0 0.0
  %1966 = vmatpush2.msra.mxu0 0.0
  %1967 = vmatprep.subr.mxu0 0.0
  %1968 = vmatpush2.msra.mxu0 0.0
  %1969 = vmatprep.subr.mxu0 0.0
  %1970 = vmatpush2.msra.mxu0 0.0
  %1971 = vmatprep.subr.mxu0 0.0
  %1972 = vmatpush2.msra.mxu0 0.0
  %1973 = vmatprep.subr.mxu0 0.0
  %1974 = vmatpush2.msra.mxu0 0.0
  %1975 = vmatprep.subr.mxu0 0.0
  %1976 = vmatpush2.msra.mxu0 0.0
  %1977 = vmatprep.subr.mxu0 0.0
  %1978 = vmatpush2.msra.mxu0 0.0
  %1979 = vmatprep.subr.mxu0 0.0
  %1980 = vmatpush2.msra.mxu0 0.0
  %1981 = vmatprep.subr.mxu0 0.0
  %1982 = vmatpush2.msra.mxu0 0.0
  %1983 = vmatprep.subr.mxu0 0.0
  %1984 = vmatpush2.msra.mxu0 0.0
  %1985 = vmatprep.subr.mxu0 0.0
  %1986 = vmatpush2.msra.mxu0 0.0
  %1987 = vmatprep.subr.mxu0 0.0
  %1988 = vmatpush2.msra.mxu0 0.0
  %1989 = vmatprep.subr.mxu0 0.0
  %1990 = vmatpush2.msra.mxu0 0.0
  %1991 = vmatprep.mubr.f32.mxu0 0.0
  %1992 = vmatmul.mubr.f32.gmra.mxu0 %v1922
  %v1993 = vpop.f32.mrf.mxu0
  %v1994 = vadd.f32 0.0, %v1993
  %v1995 = vpop.f32.mrf.mxu0
  %v1996 = vadd.f32 0.0, %v1995
  %1997 = vdwg.mxu0
  %1998 = vmatprep.subr.mxu0 0.0
  %1999 = vmatpush1.msra.mxu0 %v82
  %2000 = vmatprep.subr.mxu0 0.0
  %2001 = vmatpush1.msra.mxu0 %v79
  %2002 = vmatprep.subr.mxu0 0.0
  %2003 = vmatpush1.msra.mxu0 %v76
  %2004 = vmatprep.subr.mxu0 0.0
  %2005 = vmatpush1.msra.mxu0 %v73
  %2006 = vmatprep.subr.mxu0 0.0
  %2007 = vmatpush1.msra.mxu0 %v70
  %2008 = vmatprep.subr.mxu0 0.0
  %2009 = vmatpush1.msra.mxu0 %v67
  %2010 = vmatprep.subr.mxu0 0.0
  %2011 = vmatpush1.msra.mxu0 %v64
  %2012 = vmatprep.subr.mxu0 0.0
  %2013 = vmatpush1.msra.mxu0 %v61
  %2014 = vmatprep.subr.mxu0 0.0
  %2015 = vmatpush1.msra.mxu0 %v58
  %2016 = vmatprep.subr.mxu0 0.0
  %2017 = vmatpush1.msra.mxu0 %v55
  %2018 = vmatprep.subr.mxu0 0.0
  %2019 = vmatpush1.msra.mxu0 %v52
  %2020 = vmatprep.subr.mxu0 0.0
  %2021 = vmatpush1.msra.mxu0 %v49
  %2022 = vmatprep.subr.mxu0 0.0
  %2023 = vmatpush1.msra.mxu0 %v46
  %2024 = vmatprep.subr.mxu0 0.0
  %2025 = vmatpush1.msra.mxu0 %v43
  %2026 = vmatprep.subr.mxu0 0.0
  %2027 = vmatpush1.msra.mxu0 %v40
  %2028 = vmatprep.subr.mxu0 0.0
  %2029 = vmatpush1.msra.mxu0 %v37
  %2030 = vmatprep.subr.mxu0 0.0
  %2031 = vmatpush2.msra.mxu0 0.0
  %2032 = vmatprep.subr.mxu0 0.0
  %2033 = vmatpush2.msra.mxu0 0.0
  %2034 = vmatprep.subr.mxu0 0.0
  %2035 = vmatpush2.msra.mxu0 0.0
  %2036 = vmatprep.subr.mxu0 0.0
  %2037 = vmatpush2.msra.mxu0 0.0
  %2038 = vmatprep.subr.mxu0 0.0
  %2039 = vmatpush2.msra.mxu0 0.0
  %2040 = vmatprep.subr.mxu0 0.0
  %2041 = vmatpush2.msra.mxu0 0.0
  %2042 = vmatprep.subr.mxu0 0.0
  %2043 = vmatpush2.msra.mxu0 0.0
  %2044 = vmatprep.subr.mxu0 0.0
  %2045 = vmatpush2.msra.mxu0 0.0
  %2046 = vmatprep.subr.mxu0 0.0
  %2047 = vmatpush2.msra.mxu0 0.0
  %2048 = vmatprep.subr.mxu0 0.0
  %2049 = vmatpush2.msra.mxu0 0.0
  %2050 = vmatprep.subr.mxu0 0.0
  %2051 = vmatpush2.msra.mxu0 0.0
  %2052 = vmatprep.subr.mxu0 0.0
  %2053 = vmatpush2.msra.mxu0 0.0
  %2054 = vmatprep.subr.mxu0 0.0
  %2055 = vmatpush2.msra.mxu0 0.0
  %2056 = vmatprep.subr.mxu0 0.0
  %2057 = vmatpush2.msra.mxu0 0.0
  %2058 = vmatprep.subr.mxu0 0.0
  %2059 = vmatpush2.msra.mxu0 0.0
  %2060 = vmatprep.subr.mxu0 0.0
  %2061 = vmatpush2.msra.mxu0 0.0
  %2062 = vmatprep.mubr.f32.mxu0 0.0
  %2063 = vmatmul.mubr.f32.gmra.mxu0 %v1922
  %v2064 = vpop.f32.mrf.mxu0
  %v2065 = vadd.f32 0.0, %v2064
  %v2066 = vpop.f32.mrf.mxu0
  %2067 = vdwg.mxu0
  %v2068 = vadd.f32 %v1924, %v1994
  %v2069 = vxor.u32 %v2068, 2147483648
  %v2070 = vmul.f32 %v2069, 1.442695
  %v2071 = vpow.pop %v2070
  %v2072 = vadd.f32 %v2071, 1.0
  %v2073 = vrcp.pop %v2072
  %v2074 = vmul.f32 1.0, %v2073
  %v2075 = vadd.f32 %v1925, %v1996
  %v2076 = vxor.u32 %v2075, 2147483648
  %v2077 = vmul.f32 %v2076, 1.442695
  %v2078 = vpow.pop %v2077
  %v2079 = vadd.f32 %v2078, 1.0
  %v2080 = vrcp.pop %v2079
  %v2081 = vmul.f32 1.0, %v2080
  %v2082 = vadd.f32 %v2065, %v243
  %v2083 = vmul.f32 %v2074, %v2082
  %v2084 = vadd.f32 %v1926, %v2083
  %v2085 = vtanh.pop %v2084
  %v2086 = vsub.f32 1.0, %v2081
  %v2087 = vmul.f32 %v2086, %v2085
  %v2088 = vmul.f32 %v2081, %v1922
  %v2089 = vadd.f32 %v2087, %v2088
  %s2090 = scalar_lea.vmem %s0, 288
  %v2091 = vld [vmem:[%s2090] sm:$0xff]
  %v2092 = vld [vmem:[%s2090 + $0x8] sm:$0xff]
  %v2093 = vld [vmem:[%s2090 + $0x10] sm:$0xff]
  %2094 = vmatprep.subr.mxu0 %v81
  %2095 = vmatpush1.msra.mxu0 %v80
  %2096 = vmatprep.subr.mxu0 %v78
  %2097 = vmatpush1.msra.mxu0 %v77
  %2098 = vmatprep.subr.mxu0 %v75
  %2099 = vmatpush1.msra.mxu0 %v74
  %2100 = vmatprep.subr.mxu0 %v72
  %2101 = vmatpush1.msra.mxu0 %v71
  %2102 = vmatprep.subr.mxu0 %v69
  %2103 = vmatpush1.msra.mxu0 %v68
  %2104 = vmatprep.subr.mxu0 %v66
  %2105 = vmatpush1.msra.mxu0 %v65
  %2106 = vmatprep.subr.mxu0 %v63
  %2107 = vmatpush1.msra.mxu0 %v62
  %2108 = vmatprep.subr.mxu0 %v60
  %2109 = vmatpush1.msra.mxu0 %v59
  %2110 = vmatprep.subr.mxu0 %v57
  %2111 = vmatpush1.msra.mxu0 %v56
  %2112 = vmatprep.subr.mxu0 %v54
  %2113 = vmatpush1.msra.mxu0 %v53
  %2114 = vmatprep.subr.mxu0 %v51
  %2115 = vmatpush1.msra.mxu0 %v50
  %2116 = vmatprep.subr.mxu0 %v48
  %2117 = vmatpush1.msra.mxu0 %v47
  %2118 = vmatprep.subr.mxu0 %v45
  %2119 = vmatpush1.msra.mxu0 %v44
  %2120 = vmatprep.subr.mxu0 %v42
  %2121 = vmatpush1.msra.mxu0 %v41
  %2122 = vmatprep.subr.mxu0 %v39
  %2123 = vmatpush1.msra.mxu0 %v38
  %2124 = vmatprep.subr.mxu0 %v36
  %2125 = vmatpush1.msra.mxu0 %v35
  %2126 = vmatprep.subr.mxu0 0.0
  %2127 = vmatpush2.msra.mxu0 0.0
  %2128 = vmatprep.subr.mxu0 0.0
  %2129 = vmatpush2.msra.mxu0 0.0
  %2130 = vmatprep.subr.mxu0 0.0
  %2131 = vmatpush2.msra.mxu0 0.0
  %2132 = vmatprep.subr.mxu0 0.0
  %2133 = vmatpush2.msra.mxu0 0.0
  %2134 = vmatprep.subr.mxu0 0.0
  %2135 = vmatpush2.msra.mxu0 0.0
  %2136 = vmatprep.subr.mxu0 0.0
  %2137 = vmatpush2.msra.mxu0 0.0
  %2138 = vmatprep.subr.mxu0 0.0
  %2139 = vmatpush2.msra.mxu0 0.0
  %2140 = vmatprep.subr.mxu0 0.0
  %2141 = vmatpush2.msra.mxu0 0.0
  %2142 = vmatprep.subr.mxu0 0.0
  %2143 = vmatpush2.msra.mxu0 0.0
  %2144 = vmatprep.subr.mxu0 0.0
  %2145 = vmatpush2.msra.mxu0 0.0
  %2146 = vmatprep.subr.mxu0 0.0
  %2147 = vmatpush2.msra.mxu0 0.0
  %2148 = vmatprep.subr.mxu0 0.0
  %2149 = vmatpush2.msra.mxu0 0.0
  %2150 = vmatprep.subr.mxu0 0.0
  %2151 = vmatpush2.msra.mxu0 0.0
  %2152 = vmatprep.subr.mxu0 0.0
  %2153 = vmatpush2.msra.mxu0 0.0
  %2154 = vmatprep.subr.mxu0 0.0
  %2155 = vmatpush2.msra.mxu0 0.0
  %2156 = vmatprep.subr.mxu0 0.0
  %2157 = vmatpush2.msra.mxu0 0.0
  %2158 = vmatprep.mubr.f32.mxu0 0.0
  %2159 = vmatmul.mubr.f32.gmra.mxu0 %v2089
  %v2160 = vpop.f32.mrf.mxu0
  %v2161 = vadd.f32 0.0, %v2160
  %v2162 = vpop.f32.mrf.mxu0
  %v2163 = vadd.f32 0.0, %v2162
  %2164 = vdwg.mxu0
  %2165 = vmatprep.subr.mxu0 0.0
  %2166 = vmatpush1.msra.mxu0 %v82
  %2167 = vmatprep.subr.mxu0 0.0
  %2168 = vmatpush1.msra.mxu0 %v79
  %2169 = vmatprep.subr.mxu0 0.0
  %2170 = vmatpush1.msra.mxu0 %v76
  %2171 = vmatprep.subr.mxu0 0.0
  %2172 = vmatpush1.msra.mxu0 %v73
  %2173 = vmatprep.subr.mxu0 0.0
  %2174 = vmatpush1.msra.mxu0 %v70
  %2175 = vmatprep.subr.mxu0 0.0
  %2176 = vmatpush1.msra.mxu0 %v67
  %2177 = vmatprep.subr.mxu0 0.0
  %2178 = vmatpush1.msra.mxu0 %v64
  %2179 = vmatprep.subr.mxu0 0.0
  %2180 = vmatpush1.msra.mxu0 %v61
  %2181 = vmatprep.subr.mxu0 0.0
  %2182 = vmatpush1.msra.mxu0 %v58
  %2183 = vmatprep.subr.mxu0 0.0
  %2184 = vmatpush1.msra.mxu0 %v55
  %2185 = vmatprep.subr.mxu0 0.0
  %2186 = vmatpush1.msra.mxu0 %v52
  %2187 = vmatprep.subr.mxu0 0.0
  %2188 = vmatpush1.msra.mxu0 %v49
  %2189 = vmatprep.subr.mxu0 0.0
  %2190 = vmatpush1.msra.mxu0 %v46
  %2191 = vmatprep.subr.mxu0 0.0
  %2192 = vmatpush1.msra.mxu0 %v43
  %2193 = vmatprep.subr.mxu0 0.0
  %2194 = vmatpush1.msra.mxu0 %v40
  %2195 = vmatprep.subr.mxu0 0.0
  %2196 = vmatpush1.msra.mxu0 %v37
  %2197 = vmatprep.subr.mxu0 0.0
  %2198 = vmatpush2.msra.mxu0 0.0
  %2199 = vmatprep.subr.mxu0 0.0
  %2200 = vmatpush2.msra.mxu0 0.0
  %2201 = vmatprep.subr.mxu0 0.0
  %2202 = vmatpush2.msra.mxu0 0.0
  %2203 = vmatprep.subr.mxu0 0.0
  %2204 = vmatpush2.msra.mxu0 0.0
  %2205 = vmatprep.subr.mxu0 0.0
  %2206 = vmatpush2.msra.mxu0 0.0
  %2207 = vmatprep.subr.mxu0 0.0
  %2208 = vmatpush2.msra.mxu0 0.0
  %2209 = vmatprep.subr.mxu0 0.0
  %2210 = vmatpush2.msra.mxu0 0.0
  %2211 = vmatprep.subr.mxu0 0.0
  %2212 = vmatpush2.msra.mxu0 0.0
  %2213 = vmatprep.subr.mxu0 0.0
  %2214 = vmatpush2.msra.mxu0 0.0
  %2215 = vmatprep.subr.mxu0 0.0
  %2216 = vmatpush2.msra.mxu0 0.0
  %2217 = vmatprep.subr.mxu0 0.0
  %2218 = vmatpush2.msra.mxu0 0.0
  %2219 = vmatprep.subr.mxu0 0.0
  %2220 = vmatpush2.msra.mxu0 0.0
  %2221 = vmatprep.subr.mxu0 0.0
  %2222 = vmatpush2.msra.mxu0 0.0
  %2223 = vmatprep.subr.mxu0 0.0
  %2224 = vmatpush2.msra.mxu0 0.0
  %2225 = vmatprep.subr.mxu0 0.0
  %2226 = vmatpush2.msra.mxu0 0.0
  %2227 = vmatprep.subr.mxu0 0.0
  %2228 = vmatpush2.msra.mxu0 0.0
  %2229 = vmatprep.mubr.f32.mxu0 0.0
  %2230 = vmatmul.mubr.f32.gmra.mxu0 %v2089
  %v2231 = vpop.f32.mrf.mxu0
  %v2232 = vadd.f32 0.0, %v2231
  %v2233 = vpop.f32.mrf.mxu0
  %2234 = vdwg.mxu0
  %v2235 = vadd.f32 %v2091, %v2161
  %v2236 = vxor.u32 %v2235, 2147483648
  %v2237 = vmul.f32 %v2236, 1.442695
  %v2238 = vpow.pop %v2237
  %v2239 = vadd.f32 %v2238, 1.0
  %v2240 = vrcp.pop %v2239
  %v2241 = vmul.f32 1.0, %v2240
  %v2242 = vadd.f32 %v2092, %v2163
  %v2243 = vxor.u32 %v2242, 2147483648
  %v2244 = vmul.f32 %v2243, 1.442695
  %v2245 = vpow.pop %v2244
  %v2246 = vadd.f32 %v2245, 1.0
  %v2247 = vrcp.pop %v2246
  %v2248 = vmul.f32 1.0, %v2247
  %v2249 = vadd.f32 %v2232, %v243
  %v2250 = vmul.f32 %v2241, %v2249
  %v2251 = vadd.f32 %v2093, %v2250
  %v2252 = vtanh.pop %v2251
  %v2253 = vsub.f32 1.0, %v2248
  %v2254 = vmul.f32 %v2253, %v2252
  %v2255 = vmul.f32 %v2248, %v2089
  %v2256 = vadd.f32 %v2254, %v2255
  %s2257 = scalar_lea.vmem %s0, 312
  %v2258 = vld [vmem:[%s2257] sm:$0xff]
  %v2259 = vld [vmem:[%s2257 + $0x8] sm:$0xff]
  %v2260 = vld [vmem:[%s2257 + $0x10] sm:$0xff]
  %2261 = vmatprep.subr.mxu0 %v81
  %2262 = vmatpush1.msra.mxu0 %v80
  %2263 = vmatprep.subr.mxu0 %v78
  %2264 = vmatpush1.msra.mxu0 %v77
  %2265 = vmatprep.subr.mxu0 %v75
  %2266 = vmatpush1.msra.mxu0 %v74
  %2267 = vmatprep.subr.mxu0 %v72
  %2268 = vmatpush1.msra.mxu0 %v71
  %2269 = vmatprep.subr.mxu0 %v69
  %2270 = vmatpush1.msra.mxu0 %v68
  %2271 = vmatprep.subr.mxu0 %v66
  %2272 = vmatpush1.msra.mxu0 %v65
  %2273 = vmatprep.subr.mxu0 %v63
  %2274 = vmatpush1.msra.mxu0 %v62
  %2275 = vmatprep.subr.mxu0 %v60
  %2276 = vmatpush1.msra.mxu0 %v59
  %2277 = vmatprep.subr.mxu0 %v57
  %2278 = vmatpush1.msra.mxu0 %v56
  %2279 = vmatprep.subr.mxu0 %v54
  %2280 = vmatpush1.msra.mxu0 %v53
  %2281 = vmatprep.subr.mxu0 %v51
  %2282 = vmatpush1.msra.mxu0 %v50
  %2283 = vmatprep.subr.mxu0 %v48
  %2284 = vmatpush1.msra.mxu0 %v47
  %2285 = vmatprep.subr.mxu0 %v45
  %2286 = vmatpush1.msra.mxu0 %v44
  %2287 = vmatprep.subr.mxu0 %v42
  %2288 = vmatpush1.msra.mxu0 %v41
  %2289 = vmatprep.subr.mxu0 %v39
  %2290 = vmatpush1.msra.mxu0 %v38
  %2291 = vmatprep.subr.mxu0 %v36
  %2292 = vmatpush1.msra.mxu0 %v35
  %2293 = vmatprep.subr.mxu0 0.0
  %2294 = vmatpush2.msra.mxu0 0.0
  %2295 = vmatprep.subr.mxu0 0.0
  %2296 = vmatpush2.msra.mxu0 0.0
  %2297 = vmatprep.subr.mxu0 0.0
  %2298 = vmatpush2.msra.mxu0 0.0
  %2299 = vmatprep.subr.mxu0 0.0
  %2300 = vmatpush2.msra.mxu0 0.0
  %2301 = vmatprep.subr.mxu0 0.0
  %2302 = vmatpush2.msra.mxu0 0.0
  %2303 = vmatprep.subr.mxu0 0.0
  %2304 = vmatpush2.msra.mxu0 0.0
  %2305 = vmatprep.subr.mxu0 0.0
  %2306 = vmatpush2.msra.mxu0 0.0
  %2307 = vmatprep.subr.mxu0 0.0
  %2308 = vmatpush2.msra.mxu0 0.0
  %2309 = vmatprep.subr.mxu0 0.0
  %2310 = vmatpush2.msra.mxu0 0.0
  %2311 = vmatprep.subr.mxu0 0.0
  %2312 = vmatpush2.msra.mxu0 0.0
  %2313 = vmatprep.subr.mxu0 0.0
  %2314 = vmatpush2.msra.mxu0 0.0
  %2315 = vmatprep.subr.mxu0 0.0
  %2316 = vmatpush2.msra.mxu0 0.0
  %2317 = vmatprep.subr.mxu0 0.0
  %2318 = vmatpush2.msra.mxu0 0.0
  %2319 = vmatprep.subr.mxu0 0.0
  %2320 = vmatpush2.msra.mxu0 0.0
  %2321 = vmatprep.subr.mxu0 0.0
  %2322 = vmatpush2.msra.mxu0 0.0
  %2323 = vmatprep.subr.mxu0 0.0
  %2324 = vmatpush2.msra.mxu0 0.0
  %2325 = vmatprep.mubr.f32.mxu0 0.0
  %2326 = vmatmul.mubr.f32.gmra.mxu0 %v2256
  %v2327 = vpop.f32.mrf.mxu0
  %v2328 = vadd.f32 0.0, %v2327
  %v2329 = vpop.f32.mrf.mxu0
  %v2330 = vadd.f32 0.0, %v2329
  %2331 = vdwg.mxu0
  %2332 = vmatprep.subr.mxu0 0.0
  %2333 = vmatpush1.msra.mxu0 %v82
  %2334 = vmatprep.subr.mxu0 0.0
  %2335 = vmatpush1.msra.mxu0 %v79
  %2336 = vmatprep.subr.mxu0 0.0
  %2337 = vmatpush1.msra.mxu0 %v76
  %2338 = vmatprep.subr.mxu0 0.0
  %2339 = vmatpush1.msra.mxu0 %v73
  %2340 = vmatprep.subr.mxu0 0.0
  %2341 = vmatpush1.msra.mxu0 %v70
  %2342 = vmatprep.subr.mxu0 0.0
  %2343 = vmatpush1.msra.mxu0 %v67
  %2344 = vmatprep.subr.mxu0 0.0
  %2345 = vmatpush1.msra.mxu0 %v64
  %2346 = vmatprep.subr.mxu0 0.0
  %2347 = vmatpush1.msra.mxu0 %v61
  %2348 = vmatprep.subr.mxu0 0.0
  %2349 = vmatpush1.msra.mxu0 %v58
  %2350 = vmatprep.subr.mxu0 0.0
  %2351 = vmatpush1.msra.mxu0 %v55
  %2352 = vmatprep.subr.mxu0 0.0
  %2353 = vmatpush1.msra.mxu0 %v52
  %2354 = vmatprep.subr.mxu0 0.0
  %2355 = vmatpush1.msra.mxu0 %v49
  %2356 = vmatprep.subr.mxu0 0.0
  %2357 = vmatpush1.msra.mxu0 %v46
  %2358 = vmatprep.subr.mxu0 0.0
  %2359 = vmatpush1.msra.mxu0 %v43
  %2360 = vmatprep.subr.mxu0 0.0
  %2361 = vmatpush1.msra.mxu0 %v40
  %2362 = vmatprep.subr.mxu0 0.0
  %2363 = vmatpush1.msra.mxu0 %v37
  %2364 = vmatprep.subr.mxu0 0.0
  %2365 = vmatpush2.msra.mxu0 0.0
  %2366 = vmatprep.subr.mxu0 0.0
  %2367 = vmatpush2.msra.mxu0 0.0
  %2368 = vmatprep.subr.mxu0 0.0
  %2369 = vmatpush2.msra.mxu0 0.0
  %2370 = vmatprep.subr.mxu0 0.0
  %2371 = vmatpush2.msra.mxu0 0.0
  %2372 = vmatprep.subr.mxu0 0.0
  %2373 = vmatpush2.msra.mxu0 0.0
  %2374 = vmatprep.subr.mxu0 0.0
  %2375 = vmatpush2.msra.mxu0 0.0
  %2376 = vmatprep.subr.mxu0 0.0
  %2377 = vmatpush2.msra.mxu0 0.0
  %2378 = vmatprep.subr.mxu0 0.0
  %2379 = vmatpush2.msra.mxu0 0.0
  %2380 = vmatprep.subr.mxu0 0.0
  %2381 = vmatpush2.msra.mxu0 0.0
  %2382 = vmatprep.subr.mxu0 0.0
  %2383 = vmatpush2.msra.mxu0 0.0
  %2384 = vmatprep.subr.mxu0 0.0
  %2385 = vmatpush2.msra.mxu0 0.0
  %2386 = vmatprep.subr.mxu0 0.0
  %2387 = vmatpush2.msra.mxu0 0.0
  %2388 = vmatprep.subr.mxu0 0.0
  %2389 = vmatpush2.msra.mxu0 0.0
  %2390 = vmatprep.subr.mxu0 0.0
  %2391 = vmatpush2.msra.mxu0 0.0
  %2392 = vmatprep.subr.mxu0 0.0
  %2393 = vmatpush2.msra.mxu0 0.0
  %2394 = vmatprep.subr.mxu0 0.0
  %2395 = vmatpush2.msra.mxu0 0.0
  %2396 = vmatprep.mubr.f32.mxu0 0.0
  %2397 = vmatmul.mubr.f32.gmra.mxu0 %v2256
  %v2398 = vpop.f32.mrf.mxu0
  %v2399 = vadd.f32 0.0, %v2398
  %v2400 = vpop.f32.mrf.mxu0
  %2401 = vdwg.mxu0
  %v2402 = vadd.f32 %v2258, %v2328
  %v2403 = vxor.u32 %v2402, 2147483648
  %v2404 = vmul.f32 %v2403, 1.442695
  %v2405 = vpow.pop %v2404
  %v2406 = vadd.f32 %v2405, 1.0
  %v2407 = vrcp.pop %v2406
  %v2408 = vmul.f32 1.0, %v2407
  %v2409 = vadd.f32 %v2259, %v2330
  %v2410 = vxor.u32 %v2409, 2147483648
  %v2411 = vmul.f32 %v2410, 1.442695
  %v2412 = vpow.pop %v2411
  %v2413 = vadd.f32 %v2412, 1.0
  %v2414 = vrcp.pop %v2413
  %v2415 = vmul.f32 1.0, %v2414
  %v2416 = vadd.f32 %v2399, %v243
  %v2417 = vmul.f32 %v2408, %v2416
  %v2418 = vadd.f32 %v2260, %v2417
  %v2419 = vtanh.pop %v2418
  %v2420 = vsub.f32 1.0, %v2415
  %v2421 = vmul.f32 %v2420, %v2419
  %v2422 = vmul.f32 %v2415, %v2256
  %v2423 = vadd.f32 %v2421, %v2422
  %v2424 = vld [vmem:[%s3] sm:$0xff]
  %v2425 = vld [vmem:[%s3 + $0x8] sm:$0xff]
  %v2426 = vld [vmem:[%s3 + $0x10] sm:$0xff]
  %v2427 = vld [vmem:[%s3 + $0x18] sm:$0xff]
  %v2428 = vld [vmem:[%s3 + $0x20] sm:$0xff]
  %v2429 = vld [vmem:[%s3 + $0x28] sm:$0xff]
  %v2430 = vld [vmem:[%s3 + $0x30] sm:$0xff]
  %v2431 = vld [vmem:[%s3 + $0x38] sm:$0xff]
  %v2432 = vld [vmem:[%s3 + $0x40] sm:$0xff]
  %v2433 = vld [vmem:[%s3 + $0x48] sm:$0xff]
  %v2434 = vld [vmem:[%s3 + $0x50] sm:$0xff]
  %v2435 = vld [vmem:[%s3 + $0x58] sm:$0xff]
  %v2436 = vld [vmem:[%s3 + $0x60] sm:$0xff]
  %v2437 = vld [vmem:[%s3 + $0x68] sm:$0xff]
  %v2438 = vld [vmem:[%s3 + $0x70] sm:$0xff]
  %v2439 = vld [vmem:[%s3 + $0x78] sm:$0xff]
  %v2440 = vld [vmem:[%s4] sm:$0x1]
  %v2442 = vlaneseq
  %v2443 = vshrl.u32 %v2442, 7
  %v2444 = vsub.s32 0, %v2443
  %v2445 = vrot.slane %v2440, %v2444
  %2447 = vmatprep.subr.mxu0 0.0
  %2448 = vmatpush1.msra.mxu0 %v2439
  %2449 = vmatprep.subr.mxu0 0.0
  %2450 = vmatpush1.msra.mxu0 %v2438
  %2451 = vmatprep.subr.mxu0 0.0
  %2452 = vmatpush1.msra.mxu0 %v2437
  %2453 = vmatprep.subr.mxu0 0.0
  %2454 = vmatpush1.msra.mxu0 %v2436
  %2455 = vmatprep.subr.mxu0 0.0
  %2456 = vmatpush1.msra.mxu0 %v2435
  %2457 = vmatprep.subr.mxu0 0.0
  %2458 = vmatpush1.msra.mxu0 %v2434
  %2459 = vmatprep.subr.mxu0 0.0
  %2460 = vmatpush1.msra.mxu0 %v2433
  %2461 = vmatprep.subr.mxu0 0.0
  %2462 = vmatpush1.msra.mxu0 %v2432
  %2463 = vmatprep.subr.mxu0 0.0
  %2464 = vmatpush1.msra.mxu0 %v2431
  %2465 = vmatprep.subr.mxu0 0.0
  %2466 = vmatpush1.msra.mxu0 %v2430
  %2467 = vmatprep.subr.mxu0 0.0
  %2468 = vmatpush1.msra.mxu0 %v2429
  %2469 = vmatprep.subr.mxu0 0.0
  %2470 = vmatpush1.msra.mxu0 %v2428
  %2471 = vmatprep.subr.mxu0 0.0
  %2472 = vmatpush1.msra.mxu0 %v2427
  %2473 = vmatprep.subr.mxu0 0.0
  %2474 = vmatpush1.msra.mxu0 %v2426
  %2475 = vmatprep.subr.mxu0 0.0
  %2476 = vmatpush1.msra.mxu0 %v2425
  %2477 = vmatprep.subr.mxu0 0.0
  %2478 = vmatpush1.msra.mxu0 %v2424
  %2479 = vmatprep.subr.mxu0 0.0
  %2480 = vmatpush2.msra.mxu0 0.0
  %2481 = vmatprep.subr.mxu0 0.0
  %2482 = vmatpush2.msra.mxu0 0.0
  %2483 = vmatprep.subr.mxu0 0.0
  %2484 = vmatpush2.msra.mxu0 0.0
  %2485 = vmatprep.subr.mxu0 0.0
  %2486 = vmatpush2.msra.mxu0 0.0
  %2487 = vmatprep.subr.mxu0 0.0
  %2488 = vmatpush2.msra.mxu0 0.0
  %2489 = vmatprep.subr.mxu0 0.0
  %2490 = vmatpush2.msra.mxu0 0.0
  %2491 = vmatprep.subr.mxu0 0.0
  %2492 = vmatpush2.msra.mxu0 0.0
  %2493 = vmatprep.subr.mxu0 0.0
  %2494 = vmatpush2.msra.mxu0 0.0
  %2495 = vmatprep.subr.mxu0 0.0
  %2496 = vmatpush2.msra.mxu0 0.0
  %2497 = vmatprep.subr.mxu0 0.0
  %2498 = vmatpush2.msra.mxu0 0.0
  %2499 = vmatprep.subr.mxu0 0.0
  %2500 = vmatpush2.msra.mxu0 0.0
  %2501 = vmatprep.subr.mxu0 0.0
  %2502 = vmatpush2.msra.mxu0 0.0
  %2503 = vmatprep.subr.mxu0 0.0
  %2504 = vmatpush2.msra.mxu0 0.0
  %2505 = vmatprep.subr.mxu0 0.0
  %2506 = vmatpush2.msra.mxu0 0.0
  %2507 = vmatprep.subr.mxu0 0.0
  %2508 = vmatpush2.msra.mxu0 0.0
  %2509 = vmatprep.subr.mxu0 0.0
  %2510 = vmatpush2.msra.mxu0 0.0
  %2511 = vmatprep.mubr.f32.mxu0 0.0
  %2512 = vmatmul.mubr.f32.gmra.mxu0 %v2423
  %v2513 = vpop.f32.mrf.mxu0
  %v2514 = vadd.f32 %v2445, %v2513
  %v2515 = vpop.f32.mrf.mxu0
  %2516 = vdwg.mxu0
  %v2517 = vmax.f32 %v2514, 0.0
  %v2518 = vld [vmem:[%s5] sm:$0xff]
  %v2519 = vld [vmem:[%s5 + $0x8] sm:$0xff]
  %v2520 = vld [vmem:[%s5 + $0x10] sm:$0xff]
  %v2521 = vld [vmem:[%s5 + $0x18] sm:$0xff]
  %v2522 = vld [vmem:[%s5 + $0x20] sm:$0xff]
  %v2523 = vld [vmem:[%s5 + $0x28] sm:$0xff]
  %v2524 = vld [vmem:[%s5 + $0x30] sm:$0xff]
  %v2525 = vld [vmem:[%s5 + $0x38] sm:$0xff]
  %v2526 = vld [vmem:[%s5 + $0x40] sm:$0xff]
  %v2527 = vld [vmem:[%s5 + $0x48] sm:$0xff]
  %v2528 = vld [vmem:[%s5 + $0x50] sm:$0xff]
  %v2529 = vld [vmem:[%s5 + $0x58] sm:$0xff]
  %v2530 = vld [vmem:[%s5 + $0x60] sm:$0xff]
  %v2531 = vld [vmem:[%s5 + $0x68] sm:$0xff]
  %v2532 = vld [vmem:[%s5 + $0x70] sm:$0xff]
  %v2533 = vld [vmem:[%s5 + $0x78] sm:$0xff]
  %v2534 = vld [vmem:[%s6] sm:$0x1]
  %v2536 = vlaneseq
  %v2537 = vshrl.u32 %v2536, 7
  %v2538 = vsub.s32 0, %v2537
  %v2539 = vrot.slane %v2534, %v2538
  %2541 = vmatprep.subr.mxu0 0.0
  %2542 = vmatpush1.msra.mxu0 %v2533
  %2543 = vmatprep.subr.mxu0 0.0
  %2544 = vmatpush1.msra.mxu0 %v2532
  %2545 = vmatprep.subr.mxu0 0.0
  %2546 = vmatpush1.msra.mxu0 %v2531
  %2547 = vmatprep.subr.mxu0 0.0
  %2548 = vmatpush1.msra.mxu0 %v2530
  %2549 = vmatprep.subr.mxu0 0.0
  %2550 = vmatpush1.msra.mxu0 %v2529
  %2551 = vmatprep.subr.mxu0 0.0
  %2552 = vmatpush1.msra.mxu0 %v2528
  %2553 = vmatprep.subr.mxu0 0.0
  %2554 = vmatpush1.msra.mxu0 %v2527
  %2555 = vmatprep.subr.mxu0 0.0
  %2556 = vmatpush1.msra.mxu0 %v2526
  %2557 = vmatprep.subr.mxu0 0.0
  %2558 = vmatpush1.msra.mxu0 %v2525
  %2559 = vmatprep.subr.mxu0 0.0
  %2560 = vmatpush1.msra.mxu0 %v2524
  %2561 = vmatprep.subr.mxu0 0.0
  %2562 = vmatpush1.msra.mxu0 %v2523
  %2563 = vmatprep.subr.mxu0 0.0
  %2564 = vmatpush1.msra.mxu0 %v2522
  %2565 = vmatprep.subr.mxu0 0.0
  %2566 = vmatpush1.msra.mxu0 %v2521
  %2567 = vmatprep.subr.mxu0 0.0
  %2568 = vmatpush1.msra.mxu0 %v2520
  %2569 = vmatprep.subr.mxu0 0.0
  %2570 = vmatpush1.msra.mxu0 %v2519
  %2571 = vmatprep.subr.mxu0 0.0
  %2572 = vmatpush1.msra.mxu0 %v2518
  %2573 = vmatprep.subr.mxu0 0.0
  %2574 = vmatpush2.msra.mxu0 0.0
  %2575 = vmatprep.subr.mxu0 0.0
  %2576 = vmatpush2.msra.mxu0 0.0
  %2577 = vmatprep.subr.mxu0 0.0
  %2578 = vmatpush2.msra.mxu0 0.0
  %2579 = vmatprep.subr.mxu0 0.0
  %2580 = vmatpush2.msra.mxu0 0.0
  %2581 = vmatprep.subr.mxu0 0.0
  %2582 = vmatpush2.msra.mxu0 0.0
  %2583 = vmatprep.subr.mxu0 0.0
  %2584 = vmatpush2.msra.mxu0 0.0
  %2585 = vmatprep.subr.mxu0 0.0
  %2586 = vmatpush2.msra.mxu0 0.0
  %2587 = vmatprep.subr.mxu0 0.0
  %2588 = vmatpush2.msra.mxu0 0.0
  %2589 = vmatprep.subr.mxu0 0.0
  %2590 = vmatpush2.msra.mxu0 0.0
  %2591 = vmatprep.subr.mxu0 0.0
  %2592 = vmatpush2.msra.mxu0 0.0
  %2593 = vmatprep.subr.mxu0 0.0
  %2594 = vmatpush2.msra.mxu0 0.0
  %2595 = vmatprep.subr.mxu0 0.0
  %2596 = vmatpush2.msra.mxu0 0.0
  %2597 = vmatprep.subr.mxu0 0.0
  %2598 = vmatpush2.msra.mxu0 0.0
  %2599 = vmatprep.subr.mxu0 0.0
  %2600 = vmatpush2.msra.mxu0 0.0
  %2601 = vmatprep.subr.mxu0 0.0
  %2602 = vmatpush2.msra.mxu0 0.0
  %2603 = vmatprep.subr.mxu0 0.0
  %2604 = vmatpush2.msra.mxu0 0.0
  %2605 = vmatprep.mubr.f32.mxu0 0.0
  %2606 = vmatmul.mubr.f32.gmra.mxu0 %v2517
  %v2607 = vpop.f32.mrf.mxu0
  %v2608 = vadd.f32 %v2539, %v2607
  %v2609 = vpop.f32.mrf.mxu0
  %2610 = vdwg.mxu0
  %v2611 = vmax.f32 %v2608, 0.0
  %v2612 = vld [vmem:[%s7] sm:$0xff]
  %v2613 = vld [vmem:[%s7 + $0x8] sm:$0xff]
  %v2614 = vld [vmem:[%s7 + $0x10] sm:$0xff]
  %v2615 = vld [vmem:[%s7 + $0x18] sm:$0xff]
  %v2616 = vld [vmem:[%s7 + $0x20] sm:$0xff]
  %v2617 = vld [vmem:[%s7 + $0x28] sm:$0xff]
  %v2618 = vld [vmem:[%s7 + $0x30] sm:$0xff]
  %v2619 = vld [vmem:[%s7 + $0x38] sm:$0xff]
  %v2620 = vld [vmem:[%s7 + $0x40] sm:$0xff]
  %v2621 = vld [vmem:[%s7 + $0x48] sm:$0xff]
  %v2622 = vld [vmem:[%s7 + $0x50] sm:$0xff]
  %v2623 = vld [vmem:[%s7 + $0x58] sm:$0xff]
  %v2624 = vld [vmem:[%s7 + $0x60] sm:$0xff]
  %v2625 = vld [vmem:[%s7 + $0x68] sm:$0xff]
  %v2626 = vld [vmem:[%s7 + $0x70] sm:$0xff]
  %v2627 = vld [vmem:[%s7 + $0x78] sm:$0xff]
  %v2628 = vld [vmem:[%s8] sm:$0x1]
  %v2630 = vlaneseq
  %v2631 = vshrl.u32 %v2630, 7
  %v2632 = vsub.s32 0, %v2631
  %v2633 = vrot.slane %v2628, %v2632
  %2635 = vmatprep.subr.mxu0 0.0
  %2636 = vmatpush1.msra.mxu0 %v2627
  %2637 = vmatprep.subr.mxu0 0.0
  %2638 = vmatpush1.msra.mxu0 %v2626
  %2639 = vmatprep.subr.mxu0 0.0
  %2640 = vmatpush1.msra.mxu0 %v2625
  %2641 = vmatprep.subr.mxu0 0.0
  %2642 = vmatpush1.msra.mxu0 %v2624
  %2643 = vmatprep.subr.mxu0 0.0
  %2644 = vmatpush1.msra.mxu0 %v2623
  %2645 = vmatprep.subr.mxu0 0.0
  %2646 = vmatpush1.msra.mxu0 %v2622
  %2647 = vmatprep.subr.mxu0 0.0
  %2648 = vmatpush1.msra.mxu0 %v2621
  %2649 = vmatprep.subr.mxu0 0.0
  %2650 = vmatpush1.msra.mxu0 %v2620
  %2651 = vmatprep.subr.mxu0 0.0
  %2652 = vmatpush1.msra.mxu0 %v2619
  %2653 = vmatprep.subr.mxu0 0.0
  %2654 = vmatpush1.msra.mxu0 %v2618
  %2655 = vmatprep.subr.mxu0 0.0
  %2656 = vmatpush1.msra.mxu0 %v2617
  %2657 = vmatprep.subr.mxu0 0.0
  %2658 = vmatpush1.msra.mxu0 %v2616
  %2659 = vmatprep.subr.mxu0 0.0
  %2660 = vmatpush1.msra.mxu0 %v2615
  %2661 = vmatprep.subr.mxu0 0.0
  %2662 = vmatpush1.msra.mxu0 %v2614
  %2663 = vmatprep.subr.mxu0 0.0
  %2664 = vmatpush1.msra.mxu0 %v2613
  %2665 = vmatprep.subr.mxu0 0.0
  %2666 = vmatpush1.msra.mxu0 %v2612
  %2667 = vmatprep.subr.mxu0 0.0
  %2668 = vmatpush2.msra.mxu0 0.0
  %2669 = vmatprep.subr.mxu0 0.0
  %2670 = vmatpush2.msra.mxu0 0.0
  %2671 = vmatprep.subr.mxu0 0.0
  %2672 = vmatpush2.msra.mxu0 0.0
  %2673 = vmatprep.subr.mxu0 0.0
  %2674 = vmatpush2.msra.mxu0 0.0
  %2675 = vmatprep.subr.mxu0 0.0
  %2676 = vmatpush2.msra.mxu0 0.0
  %2677 = vmatprep.subr.mxu0 0.0
  %2678 = vmatpush2.msra.mxu0 0.0
  %2679 = vmatprep.subr.mxu0 0.0
  %2680 = vmatpush2.msra.mxu0 0.0
  %2681 = vmatprep.subr.mxu0 0.0
  %2682 = vmatpush2.msra.mxu0 0.0
  %2683 = vmatprep.subr.mxu0 0.0
  %2684 = vmatpush2.msra.mxu0 0.0
  %2685 = vmatprep.subr.mxu0 0.0
  %2686 = vmatpush2.msra.mxu0 0.0
  %2687 = vmatprep.subr.mxu0 0.0
  %2688 = vmatpush2.msra.mxu0 0.0
  %2689 = vmatprep.subr.mxu0 0.0
  %2690 = vmatpush2.msra.mxu0 0.0
  %2691 = vmatprep.subr.mxu0 0.0
  %2692 = vmatpush2.msra.mxu0 0.0
  %2693 = vmatprep.subr.mxu0 0.0
  %2694 = vmatpush2.msra.mxu0 0.0
  %2695 = vmatprep.subr.mxu0 0.0
  %2696 = vmatpush2.msra.mxu0 0.0
  %2697 = vmatprep.subr.mxu0 0.0
  %2698 = vmatpush2.msra.mxu0 0.0
  %2699 = vmatprep.mubr.f32.mxu0 0.0
  %2700 = vmatmul.mubr.f32.gmra.mxu0 %v2611
  %v2701 = vpop.f32.mrf.mxu0
  %v2702 = vadd.f32 %v2633, %v2701
  %v2703 = vpop.f32.mrf.mxu0
  %2704 = vdwg.mxu0
  %2705 = vst [vmem:[%s9] sm:$0xff] %v2702
  // Predicated region
  $region38: #{qtd_forward.1} parent=0 // pred_check
    _
  $region39: #{qtd_forward.1} parent=0 // pred_check_branch
    %2707 = sbr.rel (0) target = $region41
  $region40: #{qtd_forward.1} parent=0 // pred_region
    _
  $region41: #{qtd_forward.1} parent=0 // pred_fallthru
    _
  // Predicated region
  $region42: #{qtd_forward.1} parent=0 // pred_check
    _
  $region43: #{qtd_forward.1} parent=0 // pred_check_branch
    %2709 = sbr.rel (0) target = $region45
  $region44: #{qtd_forward.1} parent=0 // pred_region
    _
  $region45: #{qtd_forward.1} parent=0 // pred_fallthru
    _

</llo_original>
